<compile_context>
chip_gen: v7x
topology: tpu7x:2x2x1
jax: 0.10.0
libtpu: 0.0.40
codegen_flags: <defaults>
</compile_context>

<pallas_src>
import math
from functools import partial

import jax
import jax.numpy as jnp
from jax import lax
from jax.experimental import pallas as pl
from jax.experimental.pallas import tpu as pltpu


def _conv_stats_kernel(xp_ref, w_ref, y_ref, ssum_ref, ssq_ref, *, K, TH, W, Cin):
    """Conv (stride=1, odd K) + running per-channel batch statistics.

    xp_ref  : (Hp, Wp, Cin) bf16 -- whole padded image of this batch element,
              VMEM-resident across the H-tile sweep (index_map ignores h).
    w_ref   : (K*K*Cin, Cout) bf16 -- im2col-ordered weights.
    y_ref   : (TH*W, Cout) bf16 -- conv output tile (spatial rows on sublanes).
    ssum_ref, ssq_ref : (1, Cout) f32 -- per-batch channel sums, resident across h.
    """
    h = pl.program_id(1)
    TM = TH * W
    r0 = pl.multiple_of(h * TH, TH)

    # im2col slab built from per-tap bf16 ref slices (no f32 upcast, no scratch,
    # no masked partial-lane VMEM stores), then one deep MXU contraction, f32 acc.
    cols = []
    for kh in range(K):
        for kw in range(K):
            patch = xp_ref[pl.ds(r0 + kh, TH), pl.ds(kw, W), :]        # (TH, W, Cin) bf16
            cols.append(patch.reshape(TM, Cin))
    slab = jnp.concatenate(cols, axis=-1)                              # (TM, K*K*Cin) bf16
    acc = jnp.dot(slab, w_ref[...], preferred_element_type=jnp.float32)  # (TM, Cout) f32

    # bf16 intermediate halves the pass-boundary HBM traffic; statistics stay f32.
    y_ref[...] = acc.astype(y_ref.dtype)

    @pl.when(h == 0)
    def _():
        ssum_ref[...] = jnp.zeros_like(ssum_ref)
        ssq_ref[...] = jnp.zeros_like(ssq_ref)

    ssum_ref[...] += jnp.sum(acc, axis=0, keepdims=True)
    ssq_ref[...] += jnp.sum(acc * acc, axis=0, keepdims=True)
    # TODO(synk): E[x^2]-E[x]^2 in f32 can lose precision for very large feature maps;
    # switch to shifted / two-pass stats if tolerances tighten.


def _bn_relu_kernel(y_ref, scale_ref, bias_ref, o_ref):
    # y_ref: (TR, Cout) bf16; scale/bias: (1, Cout) f32; o_ref: (TR, Cout) out dtype.
    y = y_ref[...].astype(jnp.float32)
    o_ref[...] = jnp.maximum(y * scale_ref[...] + bias_ref[...], 0.0).astype(o_ref.dtype)


def _pick_tile(n, row_bytes, cap_bytes=2 << 20):
    """Largest divisor t of n with (t % 8 == 0 or t == n) and t * row_bytes <= cap."""
    cands = [t for t in range(n, 0, -1) if n % t == 0 and (t % 8 == 0 or t == n)]
    for t in cands:
        if t * row_bytes <= cap_bytes:
            return t
    return cands[-1] if cands else n


def conv_norm_act(x_nchw, weight_oihw, gamma, beta, *, stride=1, eps=1e-6):
    """ConvNormAct forward (default path: stride=1, dilation=1, groups=1, bias=False)."""
    assert stride == 1
    B, Cin, H, W = x_nchw.shape
    Cout, Cin_w, K, K2 = weight_oihw.shape
    assert Cin == Cin_w and K == K2
    assert K % 2 == 1, "only odd kernel sizes supported"
    # TODO(synk): strided / dilated / grouped / even-K conv variants not implemented.

    pad = (K - 1) // 2                       # == math.ceil((K - stride) / 2) for odd K
    Hp, Wp = H + 2 * pad, W + 2 * pad
    KKC = K * K * Cin
    out_itemsize = jnp.dtype(x_nchw.dtype).itemsize

    # Pass-1 H row tile: per-tile working set (~y tile + slab + acc) near the ~1-2 MiB
    # sweet spot, multiple of 8 sublanes (or the whole H).
    TH = _pick_tile(H, row_bytes=W * (Cout * 2 + KKC * 2 + Cout * 4))
    n_h = H // TH
    TM = TH * W

    # NHWC, spatial zero-pad, bf16 feed for the MXU (single fused XLA op up front).
    # TODO(synk): fold this transpose/pad/cast into the pass-1 read path (pl.ANY HBM
    # ref + manual windowed DMA with pl.when-guarded zero halo) to drop the extra
    # HBM round trip.
    xp = jnp.pad(jnp.transpose(x_nchw, (0, 2, 3, 1)),
                 ((0, 0), (pad, pad), (pad, pad), (0, 0))).astype(jnp.bfloat16)

    # Weights: (O, I, Kh, Kw) -> (Kh*Kw*I, O), matching the im2col slab lane order.
    w2 = jnp.transpose(weight_oihw, (2, 3, 1, 0)).reshape(KKC, Cout).astype(jnp.bfloat16)

    # VMEM budget from actual buffers: 2x resident padded image + 2x weights +
    # 2x y tile + stats + in-register working set, 1.5x headroom, clamp [16, 100] MiB.
    vmem1 = (2 * Hp * Wp * Cin * 2 + 2 * KKC * Cout * 2 + 2 * TM * Cout * 2
             + 4 * Cout * 4 + TM * (KKC * 2 + Cout * 4))
    vmem1 = int(min(max(int(vmem1 * 1.5) + (4 << 20), 16 << 20), 100 << 20))
    # TODO(synk): on v7x (64 MiB VMEM) with real ultralytics feature-map sizes, replace
    # the resident padded image with halo-tiled (TH+K-1) H blocks via manual DMA from a
    # pl.ANY HBM ref, and add a second 'parallel' grid axis so both TensorCores get
    # work when B is small.

    # ---- Pass 1: convolution + per-channel sum / sumsq -------------------------------
    y_conv, ssum, ssq = pl.pallas_call(
        partial(_conv_stats_kernel, K=K, TH=TH, W=W, Cin=Cin),
        grid=(B, n_h),
        in_specs=[
            pl.BlockSpec((None, Hp, Wp, Cin), lambda b, h: (b, 0, 0, 0)),
            pl.BlockSpec((KKC, Cout), lambda b, h: (0, 0)),
        ],
        out_specs=(
            pl.BlockSpec((None, TM, Cout), lambda b, h: (b, h, 0)),
            pl.BlockSpec((None, 1, Cout), lambda b, h: (b, 0, 0)),
            pl.BlockSpec((None, 1, Cout), lambda b, h: (b, 0, 0)),
        ),
        out_shape=(
            jax.ShapeDtypeStruct((B, H * W, Cout), jnp.bfloat16),
            jax.ShapeDtypeStruct((B, 1, Cout), jnp.float32),
            jax.ShapeDtypeStruct((B, 1, Cout), jnp.float32),
        ),
        compiler_params=pltpu.CompilerParams(
            dimension_semantics=("parallel", "arbitrary"),
            vmem_limit_bytes=vmem1,
        ),
    )(xp, w2)

    # ---- Finalize batch statistics (tiny per-channel math) ---------------------------
    cnt = jnp.float32(B * H * W)
    ch_sum = jnp.sum(ssum, axis=(0, 1))
    ch_sq = jnp.sum(ssq, axis=(0, 1))
    mean = ch_sum / cnt
    var = jnp.maximum(ch_sq / cnt - mean * mean, 0.0)        # biased (training-mode) var
    scale_c = gamma.astype(jnp.float32) * lax.rsqrt(var + eps)
    bias_c = beta.astype(jnp.float32) - mean * scale_c
    scale_f = scale_c.reshape(1, Cout)
    bias_f = bias_c.reshape(1, Cout)

    # ---- Pass 2: affine BN + ReLU over one flat (rows, Cout) grid --------------------
    R = B * H * W
    TR = _pick_tile(R, row_bytes=Cout * (2 + out_itemsize))
    vmem2 = 2 * TR * Cout * (2 + out_itemsize) + 2 * 2 * Cout * 4
    vmem2 = int(min(max(2 * vmem2 + (4 << 20), 16 << 20), 100 << 20))

    out_flat = pl.pallas_call(
        _bn_relu_kernel,
        grid=(R // TR,),
        in_specs=[
            pl.BlockSpec((TR, Cout), lambda r: (r, 0)),
            pl.BlockSpec((1, Cout), lambda r: (0, 0)),
            pl.BlockSpec((1, Cout), lambda r: (0, 0)),
        ],
        out_specs=pl.BlockSpec((TR, Cout), lambda r: (r, 0)),
        out_shape=jax.ShapeDtypeStruct((R, Cout), x_nchw.dtype),
        compiler_params=pltpu.CompilerParams(
            dimension_semantics=("parallel",),
            vmem_limit_bytes=vmem2,
        ),
    )(y_conv.reshape(R, Cout), scale_f, bias_f)

    # TODO(synk): keep NHWC for downstream consumers to avoid this full-output transpose.
    return jnp.transpose(out_flat.reshape(B, H, W, Cout), (0, 3, 1, 2))


def _reference(x_nchw, weight_oihw, gamma, beta, eps=1e-6):
    K = weight_oihw.shape[2]
    pad = math.ceil((K - 1) / 2)
    y = lax.conv_general_dilated(
        x_nchw, weight_oihw, window_strides=(1, 1),
        padding=((pad, pad), (pad, pad)),
        dimension_numbers=('NCHW', 'OIHW', 'NCHW'))
    mean = jnp.mean(y, axis=(0, 2, 3), keepdims=True)
    var = jnp.mean((y - mean) ** 2, axis=(0, 2, 3), keepdims=True)
    y = (y - mean) * lax.rsqrt(var + eps) * gamma.reshape(1, -1, 1, 1) + beta.reshape(1, -1, 1, 1)
    return jnp.maximum(y, 0.0)


if __name__ == "__main__":
    B, Cin, H, W = 2, 4, 16, 16
    Cout, K = 8, 3

    key = jax.random.PRNGKey(0)
    kx, kw = jax.random.split(key)
    x = jax.random.normal(kx, (B, Cin, H, W), dtype=jnp.float32)
    # Conv2d weight (Cout, Cin, K, K), deterministic synthetic init.
    weight = 0.1 * jax.random.normal(kw, (Cout, Cin, K, K), dtype=jnp.float32)
    # BatchNorm2d affine params at PyTorch default init.
    gamma = jnp.ones((Cout,), dtype=jnp.float32)
    beta = jnp.zeros((Cout,), dtype=jnp.float32)

    out = jax.block_until_ready(conv_norm_act(x, weight, gamma, beta))
    ref = _reference(x, weight, gamma, beta)

    assert out.shape == (B, Cout, H, W)
    max_err = float(jnp.max(jnp.abs(out - ref)))
    assert jnp.allclose(out, ref, atol=3e-2, rtol=3e-2), max_err  # bf16 matmul/storage tolerance

    print("KERNEL_OK")
</pallas_src>

<mosaic_0001>
module attributes {stable_mosaic.version = 11 : i64} {
  func.func @_conv_stats_kernel(%arg0: i32, %arg1: i32, %arg2: memref<1x18x18x4xbf16, #tpu.memory_space<vmem>>, %arg3: memref<36x8xbf16, #tpu.memory_space<vmem>>, %arg4: memref<1x256x8xbf16, #tpu.memory_space<vmem>>, %arg5: memref<1x1x8xf32, #tpu.memory_space<vmem>>, %arg6: memref<1x1x8xf32, #tpu.memory_space<vmem>>) attributes {dimension_semantics = [#tpu.dimension_semantics<parallel>, #tpu.dimension_semantics<arbitrary>], iteration_bounds = array<i64: 2, 1>, scalar_prefetch = 0 : i64, scratch_operands = 0 : i64, tpu.core_type = #tpu.core_type<tc>, window_params = [{transform_indices = @transform_0, window_bounds = array<i64: 1, 18, 18, 4>}, {pipeline_mode = #tpu.pipeline_mode<synchronous>, transform_indices = @transform_1, window_bounds = array<i64: 36, 8>}, {transform_indices = @transform_2, window_bounds = array<i64: 1, 256, 8>}, {transform_indices = @transform_3, window_bounds = array<i64: 1, 1, 8>}, {transform_indices = @transform_4, window_bounds = array<i64: 1, 1, 8>}]} {
    %c16_i32 = arith.constant 16 : i32
    %0 = arith.muli %arg1, %c16_i32 : i32
    %1 = tpu.assume_multiple %0, 16 : i32
    %c0_i32 = arith.constant 0 : i32
    %2 = arith.addi %1, %c0_i32 : i32
    %c0 = arith.constant 0 : index
    %3 = arith.index_cast %2 : i32 to index
    %c0_0 = arith.constant 0 : index
    %c0_1 = arith.constant 0 : index
    %4 = vector.load %arg2[%c0, %3, %c0_0, %c0_1] : memref<1x18x18x4xbf16, #tpu.memory_space<vmem>>, vector<1x16x16x4xbf16>
    %5 = vector.shape_cast %4 : vector<1x16x16x4xbf16> to vector<16x16x4xbf16>
    %6 = vector.shape_cast %5 : vector<16x16x4xbf16> to vector<256x4xbf16>
    %c0_i32_2 = arith.constant 0 : i32
    %7 = arith.addi %1, %c0_i32_2 : i32
    %c0_3 = arith.constant 0 : index
    %8 = arith.index_cast %7 : i32 to index
    %c1 = arith.constant 1 : index
    %c0_4 = arith.constant 0 : index
    %9 = vector.load %arg2[%c0_3, %8, %c1, %c0_4] : memref<1x18x18x4xbf16, #tpu.memory_space<vmem>>, vector<1x16x16x4xbf16>
    %10 = vector.shape_cast %9 : vector<1x16x16x4xbf16> to vector<16x16x4xbf16>
    %11 = vector.shape_cast %10 : vector<16x16x4xbf16> to vector<256x4xbf16>
    %c0_i32_5 = arith.constant 0 : i32
    %12 = arith.addi %1, %c0_i32_5 : i32
    %c0_6 = arith.constant 0 : index
    %13 = arith.index_cast %12 : i32 to index
    %c2 = arith.constant 2 : index
    %c0_7 = arith.constant 0 : index
    %14 = vector.load %arg2[%c0_6, %13, %c2, %c0_7] : memref<1x18x18x4xbf16, #tpu.memory_space<vmem>>, vector<1x16x16x4xbf16>
    %15 = vector.shape_cast %14 : vector<1x16x16x4xbf16> to vector<16x16x4xbf16>
    %16 = vector.shape_cast %15 : vector<16x16x4xbf16> to vector<256x4xbf16>
    %c1_i32 = arith.constant 1 : i32
    %17 = arith.addi %1, %c1_i32 : i32
    %c0_8 = arith.constant 0 : index
    %18 = arith.index_cast %17 : i32 to index
    %c0_9 = arith.constant 0 : index
    %c0_10 = arith.constant 0 : index
    %19 = vector.load %arg2[%c0_8, %18, %c0_9, %c0_10] : memref<1x18x18x4xbf16, #tpu.memory_space<vmem>>, vector<1x16x16x4xbf16>
    %20 = vector.shape_cast %19 : vector<1x16x16x4xbf16> to vector<16x16x4xbf16>
    %21 = vector.shape_cast %20 : vector<16x16x4xbf16> to vector<256x4xbf16>
    %c1_i32_11 = arith.constant 1 : i32
    %22 = arith.addi %1, %c1_i32_11 : i32
    %c0_12 = arith.constant 0 : index
    %23 = arith.index_cast %22 : i32 to index
    %c1_13 = arith.constant 1 : index
    %c0_14 = arith.constant 0 : index
    %24 = vector.load %arg2[%c0_12, %23, %c1_13, %c0_14] : memref<1x18x18x4xbf16, #tpu.memory_space<vmem>>, vector<1x16x16x4xbf16>
    %25 = vector.shape_cast %24 : vector<1x16x16x4xbf16> to vector<16x16x4xbf16>
    %26 = vector.shape_cast %25 : vector<16x16x4xbf16> to vector<256x4xbf16>
    %c1_i32_15 = arith.constant 1 : i32
    %27 = arith.addi %1, %c1_i32_15 : i32
    %c0_16 = arith.constant 0 : index
    %28 = arith.index_cast %27 : i32 to index
    %c2_17 = arith.constant 2 : index
    %c0_18 = arith.constant 0 : index
    %29 = vector.load %arg2[%c0_16, %28, %c2_17, %c0_18] : memref<1x18x18x4xbf16, #tpu.memory_space<vmem>>, vector<1x16x16x4xbf16>
    %30 = vector.shape_cast %29 : vector<1x16x16x4xbf16> to vector<16x16x4xbf16>
    %31 = vector.shape_cast %30 : vector<16x16x4xbf16> to vector<256x4xbf16>
    %c2_i32 = arith.constant 2 : i32
    %32 = arith.addi %1, %c2_i32 : i32
    %c0_19 = arith.constant 0 : index
    %33 = arith.index_cast %32 : i32 to index
    %c0_20 = arith.constant 0 : index
    %c0_21 = arith.constant 0 : index
    %34 = vector.load %arg2[%c0_19, %33, %c0_20, %c0_21] : memref<1x18x18x4xbf16, #tpu.memory_space<vmem>>, vector<1x16x16x4xbf16>
    %35 = vector.shape_cast %34 : vector<1x16x16x4xbf16> to vector<16x16x4xbf16>
    %36 = vector.shape_cast %35 : vector<16x16x4xbf16> to vector<256x4xbf16>
    %c2_i32_22 = arith.constant 2 : i32
    %37 = arith.addi %1, %c2_i32_22 : i32
    %c0_23 = arith.constant 0 : index
    %38 = arith.index_cast %37 : i32 to index
    %c1_24 = arith.constant 1 : index
    %c0_25 = arith.constant 0 : index
    %39 = vector.load %arg2[%c0_23, %38, %c1_24, %c0_25] : memref<1x18x18x4xbf16, #tpu.memory_space<vmem>>, vector<1x16x16x4xbf16>
    %40 = vector.shape_cast %39 : vector<1x16x16x4xbf16> to vector<16x16x4xbf16>
    %41 = vector.shape_cast %40 : vector<16x16x4xbf16> to vector<256x4xbf16>
    %c2_i32_26 = arith.constant 2 : i32
    %42 = arith.addi %1, %c2_i32_26 : i32
    %c0_27 = arith.constant 0 : index
    %43 = arith.index_cast %42 : i32 to index
    %c2_28 = arith.constant 2 : index
    %c0_29 = arith.constant 0 : index
    %44 = vector.load %arg2[%c0_27, %43, %c2_28, %c0_29] : memref<1x18x18x4xbf16, #tpu.memory_space<vmem>>, vector<1x16x16x4xbf16>
    %45 = vector.shape_cast %44 : vector<1x16x16x4xbf16> to vector<16x16x4xbf16>
    %46 = vector.shape_cast %45 : vector<16x16x4xbf16> to vector<256x4xbf16>
    %47 = tpu.concatenate %6, %11, %16, %21, %26, %31, %36, %41, %46 in 1 : vector<256x4xbf16>, vector<256x4xbf16>, vector<256x4xbf16>, vector<256x4xbf16>, vector<256x4xbf16>, vector<256x4xbf16>, vector<256x4xbf16>, vector<256x4xbf16>, vector<256x4xbf16> -> vector<256x36xbf16>
    %c0_30 = arith.constant 0 : index
    %c0_31 = arith.constant 0 : index
    %48 = vector.load %arg3[%c0_30, %c0_31] : memref<36x8xbf16, #tpu.memory_space<vmem>>, vector<36x8xbf16>
    %cst = arith.constant dense<0.000000e+00> : vector<256x8xf32>
    %49 = tpu.matmul %47, %48, %cst {dimension_numbers = #tpu.dot_dimension_numbers<[1], [0], [0], [1], [0, 0, 1, 1], [], []>} : vector<256x36xbf16>, vector<36x8xbf16>, vector<256x8xf32> -> vector<256x8xf32>
    %50 = arith.truncf %49 : vector<256x8xf32> to vector<256x8xbf16>
    %c0_32 = arith.constant 0 : index
    %c0_33 = arith.constant 0 : index
    %c0_34 = arith.constant 0 : index
    %51 = vector.load %arg4[%c0_32, %c0_33, %c0_34] : memref<1x256x8xbf16, #tpu.memory_space<vmem>>, vector<1x256x8xbf16>
    %52 = vector.shape_cast %51 : vector<1x256x8xbf16> to vector<256x8xbf16>
    %53 = vector.shape_cast %50 : vector<256x8xbf16> to vector<1x256x8xbf16>
    tpu.vector_store %arg4[%c0_32, %c0_33, %c0_34], %53 {strides = array<i32>} : memref<1x256x8xbf16, #tpu.memory_space<vmem>>, vector<1x256x8xbf16>,
    %c0_i32_35 = arith.constant 0 : i32
    %54 = arith.cmpi eq, %arg1, %c0_i32_35 : i32
    %55 = arith.extui %54 : i1 to i32
    %c0_i32_36 = arith.constant 0 : i32
    %56 = arith.cmpi ne, %55, %c0_i32_36 : i32
    scf.if %56 {
      %cst_51 = arith.constant 0.000000e+00 : f32
      %74 = vector.broadcast %cst_51 : f32 to vector<1x8xf32>
      %c0_52 = arith.constant 0 : index
      %c0_53 = arith.constant 0 : index
      %c0_54 = arith.constant 0 : index
      %75 = vector.load %arg5[%c0_52, %c0_53, %c0_54] : memref<1x1x8xf32, #tpu.memory_space<vmem>>, vector<1x1x8xf32>
      %76 = vector.shape_cast %75 : vector<1x1x8xf32> to vector<1x8xf32>
      %77 = vector.shape_cast %74 : vector<1x8xf32> to vector<1x1x8xf32>
      tpu.vector_store %arg5[%c0_52, %c0_53, %c0_54], %77 {strides = array<i32>} : memref<1x1x8xf32, #tpu.memory_space<vmem>>, vector<1x1x8xf32>,
      %cst_55 = arith.constant 0.000000e+00 : f32
      %78 = vector.broadcast %cst_55 : f32 to vector<1x8xf32>
      %c0_56 = arith.constant 0 : index
      %c0_57 = arith.constant 0 : index
      %c0_58 = arith.constant 0 : index
      %79 = vector.load %arg6[%c0_56, %c0_57, %c0_58] : memref<1x1x8xf32, #tpu.memory_space<vmem>>, vector<1x1x8xf32>
      %80 = vector.shape_cast %79 : vector<1x1x8xf32> to vector<1x8xf32>
      %81 = vector.shape_cast %78 : vector<1x8xf32> to vector<1x1x8xf32>
      tpu.vector_store %arg6[%c0_56, %c0_57, %c0_58], %81 {strides = array<i32>} : memref<1x1x8xf32, #tpu.memory_space<vmem>>, vector<1x1x8xf32>,
    } else {
    }
    %c0_37 = arith.constant 0 : index
    %c0_38 = arith.constant 0 : index
    %c0_39 = arith.constant 0 : index
    %57 = vector.load %arg5[%c0_37, %c0_38, %c0_39] : memref<1x1x8xf32, #tpu.memory_space<vmem>>, vector<1x1x8xf32>
    %58 = vector.shape_cast %57 : vector<1x1x8xf32> to vector<1x8xf32>
    %cst_40 = arith.constant dense<0.000000e+00> : vector<8xf32>
    %59 = vector.multi_reduction <add>, %49, %cst_40 [0] : vector<256x8xf32> to vector<8xf32>
    %60 = vector.shape_cast %59 : vector<8xf32> to vector<1x8xf32>
    %61 = arith.addf %58, %60 : vector<1x8xf32>
    %c0_41 = arith.constant 0 : index
    %c0_42 = arith.constant 0 : index
    %c0_43 = arith.constant 0 : index
    %62 = vector.load %arg5[%c0_41, %c0_42, %c0_43] : memref<1x1x8xf32, #tpu.memory_space<vmem>>, vector<1x1x8xf32>
    %63 = vector.shape_cast %62 : vector<1x1x8xf32> to vector<1x8xf32>
    %64 = vector.shape_cast %61 : vector<1x8xf32> to vector<1x1x8xf32>
    tpu.vector_store %arg5[%c0_41, %c0_42, %c0_43], %64 {strides = array<i32>} : memref<1x1x8xf32, #tpu.memory_space<vmem>>, vector<1x1x8xf32>,
    %c0_44 = arith.constant 0 : index
    %c0_45 = arith.constant 0 : index
    %c0_46 = arith.constant 0 : index
    %65 = vector.load %arg6[%c0_44, %c0_45, %c0_46] : memref<1x1x8xf32, #tpu.memory_space<vmem>>, vector<1x1x8xf32>
    %66 = vector.shape_cast %65 : vector<1x1x8xf32> to vector<1x8xf32>
    %67 = arith.mulf %49, %49 : vector<256x8xf32>
    %cst_47 = arith.constant dense<0.000000e+00> : vector<8xf32>
    %68 = vector.multi_reduction <add>, %67, %cst_47 [0] : vector<256x8xf32> to vector<8xf32>
    %69 = vector.shape_cast %68 : vector<8xf32> to vector<1x8xf32>
    %70 = arith.addf %66, %69 : vector<1x8xf32>
    %c0_48 = arith.constant 0 : index
    %c0_49 = arith.constant 0 : index
    %c0_50 = arith.constant 0 : index
    %71 = vector.load %arg6[%c0_48, %c0_49, %c0_50] : memref<1x1x8xf32, #tpu.memory_space<vmem>>, vector<1x1x8xf32>
    %72 = vector.shape_cast %71 : vector<1x1x8xf32> to vector<1x8xf32>
    %73 = vector.shape_cast %70 : vector<1x8xf32> to vector<1x1x8xf32>
    tpu.vector_store %arg6[%c0_48, %c0_49, %c0_50], %73 {strides = array<i32>} : memref<1x1x8xf32, #tpu.memory_space<vmem>>, vector<1x1x8xf32>,
    return
  }
  func.func @transform_0(%arg0: i32, %arg1: i32) -> (i32, i32, i32, i32) {
    %c0_i32 = arith.constant 0 : i32
    %c0_i32_0 = arith.constant 0 : i32
    %c0_i32_1 = arith.constant 0 : i32
    %c0_i32_2 = arith.constant 0 : i32
    return %arg0, %c0_i32, %c0_i32_0, %c0_i32_1 : i32, i32, i32, i32
  }
  func.func @transform_1(%arg0: i32, %arg1: i32) -> (i32, i32) {
    %c0_i32 = arith.constant 0 : i32
    %c0_i32_0 = arith.constant 0 : i32
    %c0_i32_1 = arith.constant 0 : i32
    return %c0_i32, %c0_i32_0 : i32, i32
  }
  func.func @transform_2(%arg0: i32, %arg1: i32) -> (i32, i32, i32) {
    %c0_i32 = arith.constant 0 : i32
    %c0_i32_0 = arith.constant 0 : i32
    return %arg0, %arg1, %c0_i32 : i32, i32, i32
  }
  func.func @transform_3(%arg0: i32, %arg1: i32) -> (i32, i32, i32) {
    %c0_i32 = arith.constant 0 : i32
    %c0_i32_0 = arith.constant 0 : i32
    %c0_i32_1 = arith.constant 0 : i32
    return %arg0, %c0_i32, %c0_i32_0 : i32, i32, i32
  }
  func.func @transform_4(%arg0: i32, %arg1: i32) -> (i32, i32, i32) {
    %c0_i32 = arith.constant 0 : i32
    %c0_i32_0 = arith.constant 0 : i32
    %c0_i32_1 = arith.constant 0 : i32
    return %arg0, %c0_i32, %c0_i32_0 : i32, i32, i32
  }
}

</mosaic_0001>

<llo_original>
// kernel: tpu_custom_call.1
$region0: #{tpu_custom_call.1}
  #allocation0 [shape = 'u32[]', space=smem, size = 0x4, offset = 0x4, fixed_abs, tag = 'smem constant byte address 0x4 - core index']
  #allocation1 [shape = 'u32[144,128]{1,0:T(1,128)}', space=vmem, size = 0x12000, scoped, tag = 'internal scratch']
  %s0 = inlined_call_operand.vmem [shape: bf16[2,18,18,4], index: 0, kind: input, shape index: {}]
  %s1 = inlined_call_operand.vmem [shape: bf16[36,8], index: 1, kind: input, shape index: {}]
  %s2 = inlined_call_operand.vmem [shape: bf16[2,256,8], index: 2, kind: output, shape index: {0}]
  %s3 = inlined_call_operand.hbm [shape: f32[2,1,8], index: 3, kind: output, shape index: {1}]
  %s4 = inlined_call_operand.hbm [shape: f32[2,1,8], index: 4, kind: output, shape index: {2}]
  %5 = xla_tuple %s2, %s3, %s4
  %s6 = sld [smem:[#allocation0]]
  $region61: #{tpu_custom_call.1} parent=0
    _
  %s8 = ssub.s32 1, %s6
  %s9 = scalar_select 0, %s8, %s6
  $region1: #{tpu_custom_call.1} parent=0
    #allocation2 [shape = 'u8[1024]{0}', space=vmem, size = 0x400, scoped, tag = 'output window, operand 1']
    #allocation3 [shape = 's32[2]{0}', space=sflag, size = 0x8, scoped, tag = 'scoped memory for tpu_custom_call.1']
    #allocation4 [shape = 'u8[1024]{0}', space=vmem, size = 0x400, scoped, tag = 'output window, operand 2']
    #allocation5 [shape = 's32[2]{0}', space=sflag, size = 0x8, scoped, tag = 'scoped memory for tpu_custom_call.1']
    %10 = vsyncpa [#allocation3], 0
    %s11 = scalar_lea.sflag [#allocation3], 1
    %12 = vsyncpa %s11, 0
    %13 = vsyncpa [#allocation5], 0
    %s14 = scalar_lea.sflag [#allocation5], 1
    %15 = vsyncpa %s14, 0
    loop: start=0, step=1, limit=4
    $region2: #{tpu_custom_call.1} parent=1 // loop_pre_header
      _
    $region3: #{tpu_custom_call.1} parent=1 // loop_header
      %s17 = sphi 0, %s21
      %p18 = scmp.ge.s32.totalorder %s17, 4
      %s24 = sphi 0, %s36
      %s25 = sphi 0, %s32
      %s26 = sphi 0, %s24
      %s27 = sphi 0, %s25
      %s28 = sphi 0, %s26
      %s29 = sphi 0, %s27
      %s39 = sphi 0, %s41
      %s42 = sphi 0, %s39
      %s43 = sphi 0, %s42
      %s59 = sphi 0, %s43
      %s63 = sphi 0, %s63
      %s65 = sphi 0, %s63
      %s66 = sphi 0, %s65
      %s80 = sphi 0, %s66
      %s88 = sphi 0, %s90
      %s91 = sphi 0, %s88
      %s92 = sphi 0, %s91
      %s108 = sphi 0, %s92
      %s114 = sphi 0, %s116
      %s117 = sphi 0, %s114
      %s118 = sphi 0, %s117
      %s134 = sphi 0, %s118
      %s140 = sphi 0, %s142
      %s143 = sphi 0, %s140
      %s144 = sphi 0, %s143
      %s160 = sphi 0, %s144
    $region4: #{tpu_custom_call.1} parent=1 // loop_header_branch
      %20 = sbr.rel (%p18) target = $region8
    $region5: #{tpu_custom_call.1} parent=1 // loop_body
      %s22 = ssub.s32 %s17, 1
      %s23 = ssub.s32 %s17, 2
      %s30 = sadd.s32 1, %s25
      %p31 = scmp.ge.s32.totalorder %s30, 1
      %s32 = scalar_select %p31, 0, %s30
      %s33 = sadd.s32 1, %s24
      %s34 = scalar_select %p31, %s33, %s24
      %p35 = scmp.ge.s32.totalorder %s34, 2
      %s36 = scalar_select %p35, 0, %s34
      %s37 = ssub.s32 %s24, %s36
      %p38 = scmp.eq.s32.totalorder %s37, 0
      %s40 = sadd.s32 %s39, 1
      %s41 = scalar_select %p38, %s39, %s40
      %p44 = pneg %p38
      %p45 = scmp.eq.s32.totalorder %s17, 1
      %p46 = por %p44, %p45
      %p47 = scmp.ne.s32.totalorder %s39, %s42
      %p48 = scmp.eq.s32.totalorder %s17, 0
      %p49 = por %p47, %p48
      %p50 = scmp.ne.s32.totalorder %s39, %s42
      %p51 = scmp.eq.s32.totalorder %s22, 1
      %p52 = por %p50, %p51
      %p53 = scmp.ne.s32.totalorder %s42, %s43
      %p54 = scmp.eq.s32.totalorder %s22, 0
      %p55 = por %p53, %p54
      %p56 = scmp.ne.s32.totalorder %s42, %s43
      %p57 = scmp.eq.s32.totalorder %s23, 1
      %p58 = por %p56, %p57
      %p60 = scmp.ne.s32.totalorder %s43, %s59
      %p61 = scmp.eq.s32.totalorder %s23, 0
      %p62 = por %p60, %p61
      %s64 = sadd.s32 %s63, 1
      %p67 = scmp.eq.s32.totalorder %s17, 1
      %p68 = scmp.ne.s32.totalorder %s63, %s65
      %p69 = scmp.eq.s32.totalorder %s17, 0
      %p70 = por %p68, %p69
      %p71 = scmp.ne.s32.totalorder %s63, %s65
      %p72 = scmp.eq.s32.totalorder %s22, 1
      %p73 = por %p71, %p72
      %p74 = scmp.ne.s32.totalorder %s65, %s66
      %p75 = scmp.eq.s32.totalorder %s22, 0
      %p76 = por %p74, %p75
      %p77 = scmp.ne.s32.totalorder %s65, %s66
      %p78 = scmp.eq.s32.totalorder %s23, 1
      %p79 = por %p77, %p78
      %p81 = scmp.ne.s32.totalorder %s66, %s80
      %p82 = scmp.eq.s32.totalorder %s23, 0
      %p83 = por %p81, %p82
      %s84 = ssub.s32 %s24, %s36
      %s85 = ssub.s32 %s25, %s32
      %s86 = sor.u32 %s84, %s85
      %p87 = scmp.eq.s32.totalorder %s86, 0
      %s89 = sadd.s32 %s88, 1
      %s90 = scalar_select %p87, %s88, %s89
      %p93 = pneg %p87
      %p94 = scmp.eq.s32.totalorder %s17, 1
      %p95 = por %p93, %p94
      %p96 = scmp.ne.s32.totalorder %s88, %s91
      %p97 = scmp.eq.s32.totalorder %s17, 0
      %p98 = por %p96, %p97
      %p99 = scmp.ne.s32.totalorder %s88, %s91
      %p100 = scmp.eq.s32.totalorder %s22, 1
      %p101 = por %p99, %p100
      %p102 = scmp.ne.s32.totalorder %s91, %s92
      %p103 = scmp.eq.s32.totalorder %s22, 0
      %p104 = por %p102, %p103
      %p105 = scmp.ne.s32.totalorder %s91, %s92
      %p106 = scmp.eq.s32.totalorder %s23, 1
      %p107 = por %p105, %p106
      %p109 = scmp.ne.s32.totalorder %s92, %s108
      %p110 = scmp.eq.s32.totalorder %s23, 0
      %p111 = por %p109, %p110
      %s112 = ssub.s32 %s24, %s36
      %p113 = scmp.eq.s32.totalorder %s112, 0
      %s115 = sadd.s32 %s114, 1
      %s116 = scalar_select %p113, %s114, %s115
      %p119 = pneg %p113
      %p120 = scmp.eq.s32.totalorder %s17, 1
      %p121 = por %p119, %p120
      %p122 = scmp.ne.s32.totalorder %s114, %s117
      %p123 = scmp.eq.s32.totalorder %s17, 0
      %p124 = por %p122, %p123
      %p125 = scmp.ne.s32.totalorder %s114, %s117
      %p126 = scmp.eq.s32.totalorder %s22, 1
      %p127 = por %p125, %p126
      %p128 = scmp.ne.s32.totalorder %s117, %s118
      %p129 = scmp.eq.s32.totalorder %s22, 0
      %p130 = por %p128, %p129
      %p131 = scmp.ne.s32.totalorder %s117, %s118
      %p132 = scmp.eq.s32.totalorder %s23, 1
      %p133 = por %p131, %p132
      %p135 = scmp.ne.s32.totalorder %s118, %s134
      %p136 = scmp.eq.s32.totalorder %s23, 0
      %p137 = por %p135, %p136
      %s138 = ssub.s32 %s24, %s36
      %p139 = scmp.eq.s32.totalorder %s138, 0
      %s141 = sadd.s32 %s140, 1
      %s142 = scalar_select %p139, %s140, %s141
      %p145 = pneg %p139
      %p146 = scmp.eq.s32.totalorder %s17, 1
      %p147 = por %p145, %p146
      %p148 = scmp.ne.s32.totalorder %s140, %s143
      %p149 = scmp.eq.s32.totalorder %s17, 0
      %p150 = por %p148, %p149
      %p151 = scmp.ne.s32.totalorder %s140, %s143
      %p152 = scmp.eq.s32.totalorder %s22, 1
      %p153 = por %p151, %p152
      %p154 = scmp.ne.s32.totalorder %s143, %s144
      %p155 = scmp.eq.s32.totalorder %s22, 0
      %p156 = por %p154, %p155
      %p157 = scmp.ne.s32.totalorder %s143, %s144
      %p158 = scmp.eq.s32.totalorder %s23, 1
      %p159 = por %p157, %p158
      %p161 = scmp.ne.s32.totalorder %s144, %s160
      %p162 = scmp.eq.s32.totalorder %s23, 0
      %p163 = por %p161, %p162
      %p164 = scmp.le.s32.totalorder 1, %s17
      %p165 = scmp.lt.s32.totalorder %s17, 3
      %p166 = pnand %p164, %p165
      %p167 = pneg %p166
      // Predicated region
      $region9: #{tpu_custom_call.1} parent=5 // pred_check
        _
      $region10: #{tpu_custom_call.1} parent=5 // pred_check_branch
        %169 = sbr.rel (%p166) target = $region12
      $region11: #{tpu_custom_call.1} parent=5 // pred_region
        %s170 = ssub.s32 %s17, 1
        // Predicated region
        $region13: #{tpu_custom_call.1} parent=11 // pred_check
          %p171 = pneg %p76
        $region14: #{tpu_custom_call.1} parent=11 // pred_check_branch
          %173 = sbr.rel (%p171) target = $region16
        $region15: #{tpu_custom_call.1} parent=11 // pred_region
          _
        $region16: #{tpu_custom_call.1} parent=11 // pred_fallthru
          _
      $region12: #{tpu_custom_call.1} parent=5 // pred_fallthru
        _
      %p174 = scmp.lt.s32.totalorder %s17, 2
      // Predicated region
      $region17: #{tpu_custom_call.1} parent=5 // pred_check
        %p175 = pneg %p174
      $region18: #{tpu_custom_call.1} parent=5 // pred_check_branch
        %177 = sbr.rel (%p175) target = $region20
      $region19: #{tpu_custom_call.1} parent=5 // pred_region
        // Predicated region
        $region21: #{tpu_custom_call.1} parent=19 // pred_check
          %p178 = pneg %p49
        $region22: #{tpu_custom_call.1} parent=19 // pred_check_branch
          %180 = sbr.rel (%p178) target = $region24
        $region23: #{tpu_custom_call.1} parent=19 // pred_region
          %p181 = scmp.lt.s32.totalorder %s24, 1
          %s182 = scalar_select %p181, %s24, 1
          %s183 = smul.addr %s182, 54
          %s184 = smul.addr %s183, 4
          %s185 = scalar_lea.vmem %s0, %s184
        $region24: #{tpu_custom_call.1} parent=19 // pred_fallthru
          _
      $region20: #{tpu_custom_call.1} parent=5 // pred_fallthru
        _
      %p186 = scmp.le.s32.totalorder 1, %s17
      %p187 = scmp.lt.s32.totalorder %s17, 3
      %p188 = pnand %p186, %p187
      %p189 = pneg %p188
      // Predicated region
      $region25: #{tpu_custom_call.1} parent=5 // pred_check
        _
      $region26: #{tpu_custom_call.1} parent=5 // pred_check_branch
        %191 = sbr.rel (%p188) target = $region28
      $region27: #{tpu_custom_call.1} parent=5 // pred_region
        %s192 = ssub.s32 %s17, 1
        %p193 = scmp.lt.s32.totalorder %s26, 1
        %s194 = scalar_select %p193, %s26, 1
        %s195 = smul.addr %s194, 54
        %s196 = smul.addr %s195, 4
        %s197 = scalar_lea.vmem %s0, %s196
        %p198 = pneg %p55
        %p199 = pneg %p52
        %p200 = pneg %p76
        %p201 = pneg %p73
        %p202 = pneg %p104
        %p203 = pneg %p101
        %s204 = smul.u32 32, %s27
        %p205 = scmp.lt.s32.totalorder %s26, 1
        %s206 = scalar_select %p205, %s26, 1
        %p207 = scmp.lt.s32.totalorder %s204, 31
        %s208 = scalar_select %p207, %s204, 31
        %s209 = smul.addr %s206, 32
        %s210 = sadd.s32 %s208, %s209
        %s211 = smul.addr %s210, 4
        %s212 = scalar_lea.vmem %s2, %s211
        %p213 = pneg %p130
        %p214 = pneg %p127
        %s215 = sand.u32 %s117, 1
        %s216 = scalar_lea.sflag [#allocation3], %s215
        %s217 = sand.u32 %s117, 1
        %s218 = scalar_lea.vmem [#allocation2], %s217
        %p219 = pneg %p156
        %p220 = pneg %p153
        %s221 = sand.u32 %s143, 1
        %s222 = scalar_lea.sflag [#allocation5], %s221
        %s223 = sand.u32 %s143, 1
        %s224 = scalar_lea.vmem [#allocation4], %s223
        %p225 = scmp.lt.s32.totalorder %s26, 1
        %s226 = scalar_select %p225, %s26, 1
        %s227 = smul.addr %s226, 54
        %s228 = smul.addr %s227, 4
        %s229 = scalar_lea.vmem %s0, %s228
        %s230 = smul.u32 32, %s27
        %p231 = scmp.lt.s32.totalorder %s26, 1
        %s232 = scalar_select %p231, %s26, 1
        %p233 = scmp.lt.s32.totalorder %s230, 31
        %s234 = scalar_select %p233, %s230, 31
        %s235 = smul.addr %s232, 32
        %s236 = sadd.s32 %s234, %s235
        %s237 = smul.addr %s236, 4
        %s238 = scalar_lea.vmem %s2, %s237
        %s239 = smul.u32 32, %s27
        %s241 = smul.u32 %s27, 16
        %s242 = smul.u32 %s241, 3
        %s243 = smul.addr %s242, 4
        %s244 = scalar_lea.vmem %s229, %s243
        %v245 = vld [vmem:[%s244] sm:$0xf]
        %v246 = vld [vmem:[%s244 + $0x4] sm:$0xf]
        %v247 = vld [vmem:[%s244 + $0xc] sm:$0xf]
        %v248 = vld [vmem:[%s244 + $0x10] sm:$0xf]
        %v249 = vld [vmem:[%s244 + $0x18] sm:$0xf]
        %v250 = vld [vmem:[%s244 + $0x1c] sm:$0xf]
        %v251 = vld [vmem:[%s244 + $0x24] sm:$0xf]
        %v252 = vld [vmem:[%s244 + $0x28] sm:$0xf]
        %v253 = vld [vmem:[%s244 + $0x30] sm:$0xf]
        %v254 = vld [vmem:[%s244 + $0x34] sm:$0xf]
        %v255 = vld [vmem:[%s244 + $0x3c] sm:$0xf]
        %v256 = vld [vmem:[%s244 + $0x40] sm:$0xf]
        %v257 = vld [vmem:[%s244 + $0x48] sm:$0xf]
        %v258 = vld [vmem:[%s244 + $0x4c] sm:$0xf]
        %v259 = vld [vmem:[%s244 + $0x54] sm:$0xf]
        %v260 = vld [vmem:[%s244 + $0x58] sm:$0xf]
        %v261 = vld [vmem:[%s244 + $0x60] sm:$0xf]
        %v262 = vld [vmem:[%s244 + $0x64] sm:$0xf]
        %v263 = vld [vmem:[%s244 + $0x6c] sm:$0xf]
        %v264 = vld [vmem:[%s244 + $0x70] sm:$0xf]
        %v265 = vld [vmem:[%s244 + $0x78] sm:$0xf]
        %v266 = vld [vmem:[%s244 + $0x7c] sm:$0xf]
        %v267 = vld [vmem:[%s244 + $0x84] sm:$0xf]
        %v268 = vld [vmem:[%s244 + $0x88] sm:$0xf]
        %v269 = vld [vmem:[%s244 + $0x90] sm:$0xf]
        %v270 = vld [vmem:[%s244 + $0x94] sm:$0xf]
        %v271 = vld [vmem:[%s244 + $0x9c] sm:$0xf]
        %v272 = vld [vmem:[%s244 + $0xa0] sm:$0xf]
        %v273 = vld [vmem:[%s244 + $0xa8] sm:$0xf]
        %v274 = vld [vmem:[%s244 + $0xac] sm:$0xf]
        %v275 = vld [vmem:[%s244 + $0xb4] sm:$0xf]
        %v276 = vld [vmem:[%s244 + $0xb8] sm:$0xf]
        %v277 = vld [vmem:[%s244 + $0x8] sm:$0x1]
        %v278 = vld [vmem:[%s244 + $0x14] sm:$0x1]
        %v279 = vld [vmem:[%s244 + $0x20] sm:$0x1]
        %v280 = vld [vmem:[%s244 + $0x2c] sm:$0x1]
        %v281 = vld [vmem:[%s244 + $0x38] sm:$0x1]
        %v282 = vld [vmem:[%s244 + $0x44] sm:$0x1]
        %v283 = vld [vmem:[%s244 + $0x50] sm:$0x1]
        %v284 = vld [vmem:[%s244 + $0x5c] sm:$0x1]
        %v285 = vld [vmem:[%s244 + $0x68] sm:$0x1]
        %v286 = vld [vmem:[%s244 + $0x74] sm:$0x1]
        %v287 = vld [vmem:[%s244 + $0x80] sm:$0x1]
        %v288 = vld [vmem:[%s244 + $0x8c] sm:$0x1]
        %v289 = vld [vmem:[%s244 + $0x98] sm:$0x1]
        %v290 = vld [vmem:[%s244 + $0xa4] sm:$0x1]
        %v291 = vld [vmem:[%s244 + $0xb0] sm:$0x1]
        %v292 = vld [vmem:[%s244 + $0xbc] sm:$0x1]
        %vm293 = vsmask.f32 3328
        %vm294 = vsmask.f32 7440
        %vm295 = vmor %vm293, %vm294
        %v297 = vshrl.u32 %v245, 16
        %v299 = vrot.slane %v297, 4
        %v300 = vshll.u32 %v245, 16
        %v302 = vrot.slane %v300, 5
        %v303 = vor.u32 %v299, %v302
        %v304 = vrot.slane %v303, 4
        %v306 = vshll.u32 %v246, 16
        %v308 = vrot.slane %v306, 5
        %v309 = vsel %vm295, %v304, %v308
        %v310 = vshrl.u32 %v246, 16
        %v312 = vrot.slane %v310, 4
        %v313 = vor.u32 %v312, %v308
        %v314 = vrot.slane %v313, 4
        %v316 = vshll.u32 %v277, 16
        %v318 = vrot.slane %v316, 5
        %v319 = vsel %vm295, %v314, %v318
        %v321 = vshrl.u32 %v247, 16
        %v323 = vrot.slane %v321, 4
        %v324 = vshll.u32 %v247, 16
        %v326 = vrot.slane %v324, 5
        %v327 = vor.u32 %v323, %v326
        %v328 = vrot.slane %v327, 4
        %v330 = vshll.u32 %v248, 16
        %v332 = vrot.slane %v330, 5
        %v333 = vsel %vm295, %v328, %v332
        %v334 = vshrl.u32 %v248, 16
        %v336 = vrot.slane %v334, 4
        %v337 = vor.u32 %v336, %v332
        %v338 = vrot.slane %v337, 4
        %v340 = vshll.u32 %v278, 16
        %v342 = vrot.slane %v340, 5
        %v343 = vsel %vm295, %v338, %v342
        %v345 = vshrl.u32 %v249, 16
        %v347 = vrot.slane %v345, 4
        %v348 = vshll.u32 %v249, 16
        %v350 = vrot.slane %v348, 5
        %v351 = vor.u32 %v347, %v350
        %v352 = vrot.slane %v351, 4
        %v354 = vshll.u32 %v250, 16
        %v356 = vrot.slane %v354, 5
        %v357 = vsel %vm295, %v352, %v356
        %v358 = vshrl.u32 %v250, 16
        %v360 = vrot.slane %v358, 4
        %v361 = vor.u32 %v360, %v356
        %v362 = vrot.slane %v361, 4
        %v364 = vshll.u32 %v279, 16
        %v366 = vrot.slane %v364, 5
        %v367 = vsel %vm295, %v362, %v366
        %v369 = vshrl.u32 %v251, 16
        %v371 = vrot.slane %v369, 4
        %v372 = vshll.u32 %v251, 16
        %v374 = vrot.slane %v372, 5
        %v375 = vor.u32 %v371, %v374
        %v376 = vrot.slane %v375, 4
        %v378 = vshll.u32 %v252, 16
        %v380 = vrot.slane %v378, 5
        %v381 = vsel %vm295, %v376, %v380
        %v382 = vshrl.u32 %v252, 16
        %v384 = vrot.slane %v382, 4
        %v385 = vor.u32 %v384, %v380
        %v386 = vrot.slane %v385, 4
        %v388 = vshll.u32 %v280, 16
        %v390 = vrot.slane %v388, 5
        %v391 = vsel %vm295, %v386, %v390
        %v393 = vshrl.u32 %v253, 16
        %v395 = vrot.slane %v393, 4
        %v396 = vshll.u32 %v253, 16
        %v398 = vrot.slane %v396, 5
        %v399 = vor.u32 %v395, %v398
        %v400 = vrot.slane %v399, 4
        %v402 = vshll.u32 %v254, 16
        %v404 = vrot.slane %v402, 5
        %v405 = vsel %vm295, %v400, %v404
        %v406 = vshrl.u32 %v254, 16
        %v408 = vrot.slane %v406, 4
        %v409 = vor.u32 %v408, %v404
        %v410 = vrot.slane %v409, 4
        %v412 = vshll.u32 %v281, 16
        %v414 = vrot.slane %v412, 5
        %v415 = vsel %vm295, %v410, %v414
        %v417 = vshrl.u32 %v255, 16
        %v419 = vrot.slane %v417, 4
        %v420 = vshll.u32 %v255, 16
        %v422 = vrot.slane %v420, 5
        %v423 = vor.u32 %v419, %v422
        %v424 = vrot.slane %v423, 4
        %v426 = vshll.u32 %v256, 16
        %v428 = vrot.slane %v426, 5
        %v429 = vsel %vm295, %v424, %v428
        %v430 = vshrl.u32 %v256, 16
        %v432 = vrot.slane %v430, 4
        %v433 = vor.u32 %v432, %v428
        %v434 = vrot.slane %v433, 4
        %v436 = vshll.u32 %v282, 16
        %v438 = vrot.slane %v436, 5
        %v439 = vsel %vm295, %v434, %v438
        %v441 = vshrl.u32 %v257, 16
        %v443 = vrot.slane %v441, 4
        %v444 = vshll.u32 %v257, 16
        %v446 = vrot.slane %v444, 5
        %v447 = vor.u32 %v443, %v446
        %v448 = vrot.slane %v447, 4
        %v450 = vshll.u32 %v258, 16
        %v452 = vrot.slane %v450, 5
        %v453 = vsel %vm295, %v448, %v452
        %v454 = vshrl.u32 %v258, 16
        %v456 = vrot.slane %v454, 4
        %v457 = vor.u32 %v456, %v452
        %v458 = vrot.slane %v457, 4
        %v460 = vshll.u32 %v283, 16
        %v462 = vrot.slane %v460, 5
        %v463 = vsel %vm295, %v458, %v462
        %v465 = vshrl.u32 %v259, 16
        %v467 = vrot.slane %v465, 4
        %v468 = vshll.u32 %v259, 16
        %v470 = vrot.slane %v468, 5
        %v471 = vor.u32 %v467, %v470
        %v472 = vrot.slane %v471, 4
        %v474 = vshll.u32 %v260, 16
        %v476 = vrot.slane %v474, 5
        %v477 = vsel %vm295, %v472, %v476
        %v478 = vshrl.u32 %v260, 16
        %v480 = vrot.slane %v478, 4
        %v481 = vor.u32 %v480, %v476
        %v482 = vrot.slane %v481, 4
        %v484 = vshll.u32 %v284, 16
        %v486 = vrot.slane %v484, 5
        %v487 = vsel %vm295, %v482, %v486
        %v489 = vshrl.u32 %v261, 16
        %v491 = vrot.slane %v489, 4
        %v492 = vshll.u32 %v261, 16
        %v494 = vrot.slane %v492, 5
        %v495 = vor.u32 %v491, %v494
        %v496 = vrot.slane %v495, 4
        %v498 = vshll.u32 %v262, 16
        %v500 = vrot.slane %v498, 5
        %v501 = vsel %vm295, %v496, %v500
        %v502 = vshrl.u32 %v262, 16
        %v504 = vrot.slane %v502, 4
        %v505 = vor.u32 %v504, %v500
        %v506 = vrot.slane %v505, 4
        %v508 = vshll.u32 %v285, 16
        %v510 = vrot.slane %v508, 5
        %v511 = vsel %vm295, %v506, %v510
        %v513 = vshrl.u32 %v263, 16
        %v515 = vrot.slane %v513, 4
        %v516 = vshll.u32 %v263, 16
        %v518 = vrot.slane %v516, 5
        %v519 = vor.u32 %v515, %v518
        %v520 = vrot.slane %v519, 4
        %v522 = vshll.u32 %v264, 16
        %v524 = vrot.slane %v522, 5
        %v525 = vsel %vm295, %v520, %v524
        %v526 = vshrl.u32 %v264, 16
        %v528 = vrot.slane %v526, 4
        %v529 = vor.u32 %v528, %v524
        %v530 = vrot.slane %v529, 4
        %v532 = vshll.u32 %v286, 16
        %v534 = vrot.slane %v532, 5
        %v535 = vsel %vm295, %v530, %v534
        %v537 = vshrl.u32 %v265, 16
        %v539 = vrot.slane %v537, 4
        %v540 = vshll.u32 %v265, 16
        %v542 = vrot.slane %v540, 5
        %v543 = vor.u32 %v539, %v542
        %v544 = vrot.slane %v543, 4
        %v546 = vshll.u32 %v266, 16
        %v548 = vrot.slane %v546, 5
        %v549 = vsel %vm295, %v544, %v548
        %v550 = vshrl.u32 %v266, 16
        %v552 = vrot.slane %v550, 4
        %v553 = vor.u32 %v552, %v548
        %v554 = vrot.slane %v553, 4
        %v556 = vshll.u32 %v287, 16
        %v558 = vrot.slane %v556, 5
        %v559 = vsel %vm295, %v554, %v558
        %v561 = vshrl.u32 %v267, 16
        %v563 = vrot.slane %v561, 4
        %v564 = vshll.u32 %v267, 16
        %v566 = vrot.slane %v564, 5
        %v567 = vor.u32 %v563, %v566
        %v568 = vrot.slane %v567, 4
        %v570 = vshll.u32 %v268, 16
        %v572 = vrot.slane %v570, 5
        %v573 = vsel %vm295, %v568, %v572
        %v574 = vshrl.u32 %v268, 16
        %v576 = vrot.slane %v574, 4
        %v577 = vor.u32 %v576, %v572
        %v578 = vrot.slane %v577, 4
        %v580 = vshll.u32 %v288, 16
        %v582 = vrot.slane %v580, 5
        %v583 = vsel %vm295, %v578, %v582
        %v585 = vshrl.u32 %v269, 16
        %v587 = vrot.slane %v585, 4
        %v588 = vshll.u32 %v269, 16
        %v590 = vrot.slane %v588, 5
        %v591 = vor.u32 %v587, %v590
        %v592 = vrot.slane %v591, 4
        %v594 = vshll.u32 %v270, 16
        %v596 = vrot.slane %v594, 5
        %v597 = vsel %vm295, %v592, %v596
        %v598 = vshrl.u32 %v270, 16
        %v600 = vrot.slane %v598, 4
        %v601 = vor.u32 %v600, %v596
        %v602 = vrot.slane %v601, 4
        %v604 = vshll.u32 %v289, 16
        %v606 = vrot.slane %v604, 5
        %v607 = vsel %vm295, %v602, %v606
        %v609 = vshrl.u32 %v271, 16
        %v611 = vrot.slane %v609, 4
        %v612 = vshll.u32 %v271, 16
        %v614 = vrot.slane %v612, 5
        %v615 = vor.u32 %v611, %v614
        %v616 = vrot.slane %v615, 4
        %v618 = vshll.u32 %v272, 16
        %v620 = vrot.slane %v618, 5
        %v621 = vsel %vm295, %v616, %v620
        %v622 = vshrl.u32 %v272, 16
        %v624 = vrot.slane %v622, 4
        %v625 = vor.u32 %v624, %v620
        %v626 = vrot.slane %v625, 4
        %v628 = vshll.u32 %v290, 16
        %v630 = vrot.slane %v628, 5
        %v631 = vsel %vm295, %v626, %v630
        %v633 = vshrl.u32 %v273, 16
        %v635 = vrot.slane %v633, 4
        %v636 = vshll.u32 %v273, 16
        %v638 = vrot.slane %v636, 5
        %v639 = vor.u32 %v635, %v638
        %v640 = vrot.slane %v639, 4
        %v642 = vshll.u32 %v274, 16
        %v644 = vrot.slane %v642, 5
        %v645 = vsel %vm295, %v640, %v644
        %v646 = vshrl.u32 %v274, 16
        %v648 = vrot.slane %v646, 4
        %v649 = vor.u32 %v648, %v644
        %v650 = vrot.slane %v649, 4
        %v652 = vshll.u32 %v291, 16
        %v654 = vrot.slane %v652, 5
        %v655 = vsel %vm295, %v650, %v654
        %v657 = vshrl.u32 %v275, 16
        %v659 = vrot.slane %v657, 4
        %v660 = vshll.u32 %v275, 16
        %v662 = vrot.slane %v660, 5
        %v663 = vor.u32 %v659, %v662
        %v664 = vrot.slane %v663, 4
        %v666 = vshll.u32 %v276, 16
        %v668 = vrot.slane %v666, 5
        %v669 = vsel %vm295, %v664, %v668
        %v670 = vshrl.u32 %v276, 16
        %v672 = vrot.slane %v670, 4
        %v673 = vor.u32 %v672, %v668
        %v674 = vrot.slane %v673, 4
        %v676 = vshll.u32 %v292, 16
        %v678 = vrot.slane %v676, 5
        %v679 = vsel %vm295, %v674, %v678
        %v680 = vld [vmem:[%s244] sm:$0xe]
        %v681 = vld [vmem:[%s244 + $0xc] sm:$0xe]
        %v682 = vld [vmem:[%s244 + $0x18] sm:$0xe]
        %v683 = vld [vmem:[%s244 + $0x24] sm:$0xe]
        %v684 = vld [vmem:[%s244 + $0x30] sm:$0xe]
        %v685 = vld [vmem:[%s244 + $0x3c] sm:$0xe]
        %v686 = vld [vmem:[%s244 + $0x48] sm:$0xe]
        %v687 = vld [vmem:[%s244 + $0x54] sm:$0xe]
        %v688 = vld [vmem:[%s244 + $0x60] sm:$0xe]
        %v689 = vld [vmem:[%s244 + $0x6c] sm:$0xe]
        %v690 = vld [vmem:[%s244 + $0x78] sm:$0xe]
        %v691 = vld [vmem:[%s244 + $0x84] sm:$0xe]
        %v692 = vld [vmem:[%s244 + $0x90] sm:$0xe]
        %v693 = vld [vmem:[%s244 + $0x9c] sm:$0xe]
        %v694 = vld [vmem:[%s244 + $0xa8] sm:$0xe]
        %v695 = vld [vmem:[%s244 + $0xb4] sm:$0xe]
        %vm744 = vcmask 1042432
        %vm745 = vcmask 1046532
        %vm746 = vmor %vm744, %vm745
        %v747 = vrot.slane %v680, 5
        %v748 = vrot.slane %v747, 4
        %v749 = vrot.slane %v246, 5
        %v750 = vsel %vm746, %v748, %v749
        %v751 = vrot.slane %v749, 4
        %v752 = vrot.slane %v277, 5
        %v753 = vsel %vm746, %v751, %v752
        %v754 = vrot.slane %v681, 5
        %v755 = vrot.slane %v754, 4
        %v756 = vrot.slane %v248, 5
        %v757 = vsel %vm746, %v755, %v756
        %v758 = vrot.slane %v756, 4
        %v759 = vrot.slane %v278, 5
        %v760 = vsel %vm746, %v758, %v759
        %v761 = vrot.slane %v682, 5
        %v762 = vrot.slane %v761, 4
        %v763 = vrot.slane %v250, 5
        %v764 = vsel %vm746, %v762, %v763
        %v765 = vrot.slane %v763, 4
        %v766 = vrot.slane %v279, 5
        %v767 = vsel %vm746, %v765, %v766
        %v768 = vrot.slane %v683, 5
        %v769 = vrot.slane %v768, 4
        %v770 = vrot.slane %v252, 5
        %v771 = vsel %vm746, %v769, %v770
        %v772 = vrot.slane %v770, 4
        %v773 = vrot.slane %v280, 5
        %v774 = vsel %vm746, %v772, %v773
        %v775 = vrot.slane %v684, 5
        %v776 = vrot.slane %v775, 4
        %v777 = vrot.slane %v254, 5
        %v778 = vsel %vm746, %v776, %v777
        %v779 = vrot.slane %v777, 4
        %v780 = vrot.slane %v281, 5
        %v781 = vsel %vm746, %v779, %v780
        %v782 = vrot.slane %v685, 5
        %v783 = vrot.slane %v782, 4
        %v784 = vrot.slane %v256, 5
        %v785 = vsel %vm746, %v783, %v784
        %v786 = vrot.slane %v784, 4
        %v787 = vrot.slane %v282, 5
        %v788 = vsel %vm746, %v786, %v787
        %v789 = vrot.slane %v686, 5
        %v790 = vrot.slane %v789, 4
        %v791 = vrot.slane %v258, 5
        %v792 = vsel %vm746, %v790, %v791
        %v793 = vrot.slane %v791, 4
        %v794 = vrot.slane %v283, 5
        %v795 = vsel %vm746, %v793, %v794
        %v796 = vrot.slane %v687, 5
        %v797 = vrot.slane %v796, 4
        %v798 = vrot.slane %v260, 5
        %v799 = vsel %vm746, %v797, %v798
        %v800 = vrot.slane %v798, 4
        %v801 = vrot.slane %v284, 5
        %v802 = vsel %vm746, %v800, %v801
        %v803 = vrot.slane %v688, 5
        %v804 = vrot.slane %v803, 4
        %v805 = vrot.slane %v262, 5
        %v806 = vsel %vm746, %v804, %v805
        %v807 = vrot.slane %v805, 4
        %v808 = vrot.slane %v285, 5
        %v809 = vsel %vm746, %v807, %v808
        %v810 = vrot.slane %v689, 5
        %v811 = vrot.slane %v810, 4
        %v812 = vrot.slane %v264, 5
        %v813 = vsel %vm746, %v811, %v812
        %v814 = vrot.slane %v812, 4
        %v815 = vrot.slane %v286, 5
        %v816 = vsel %vm746, %v814, %v815
        %v817 = vrot.slane %v690, 5
        %v818 = vrot.slane %v817, 4
        %v819 = vrot.slane %v266, 5
        %v820 = vsel %vm746, %v818, %v819
        %v821 = vrot.slane %v819, 4
        %v822 = vrot.slane %v287, 5
        %v823 = vsel %vm746, %v821, %v822
        %v824 = vrot.slane %v691, 5
        %v825 = vrot.slane %v824, 4
        %v826 = vrot.slane %v268, 5
        %v827 = vsel %vm746, %v825, %v826
        %v828 = vrot.slane %v826, 4
        %v829 = vrot.slane %v288, 5
        %v830 = vsel %vm746, %v828, %v829
        %v831 = vrot.slane %v692, 5
        %v832 = vrot.slane %v831, 4
        %v833 = vrot.slane %v270, 5
        %v834 = vsel %vm746, %v832, %v833
        %v835 = vrot.slane %v833, 4
        %v836 = vrot.slane %v289, 5
        %v837 = vsel %vm746, %v835, %v836
        %v838 = vrot.slane %v693, 5
        %v839 = vrot.slane %v838, 4
        %v840 = vrot.slane %v272, 5
        %v841 = vsel %vm746, %v839, %v840
        %v842 = vrot.slane %v840, 4
        %v843 = vrot.slane %v290, 5
        %v844 = vsel %vm746, %v842, %v843
        %v845 = vrot.slane %v694, 5
        %v846 = vrot.slane %v845, 4
        %v847 = vrot.slane %v274, 5
        %v848 = vsel %vm746, %v846, %v847
        %v849 = vrot.slane %v847, 4
        %v850 = vrot.slane %v291, 5
        %v851 = vsel %vm746, %v849, %v850
        %v852 = vrot.slane %v695, 5
        %v853 = vrot.slane %v852, 4
        %v854 = vrot.slane %v276, 5
        %v855 = vsel %vm746, %v853, %v854
        %v856 = vrot.slane %v854, 4
        %v857 = vrot.slane %v292, 5
        %v858 = vsel %vm746, %v856, %v857
        %s859 = sadd.s32 %s241, 1
        %s860 = smul.u32 %s859, 3
        %s861 = smul.addr %s860, 4
        %s862 = scalar_lea.vmem %s229, %s861
        %v863 = vld [vmem:[%s862] sm:$0xf]
        %v864 = vld [vmem:[%s862 + $0x4] sm:$0xf]
        %v865 = vld [vmem:[%s862 + $0xc] sm:$0xf]
        %v866 = vld [vmem:[%s862 + $0x10] sm:$0xf]
        %v867 = vld [vmem:[%s862 + $0x18] sm:$0xf]
        %v868 = vld [vmem:[%s862 + $0x1c] sm:$0xf]
        %v869 = vld [vmem:[%s862 + $0x24] sm:$0xf]
        %v870 = vld [vmem:[%s862 + $0x28] sm:$0xf]
        %v871 = vld [vmem:[%s862 + $0x30] sm:$0xf]
        %v872 = vld [vmem:[%s862 + $0x34] sm:$0xf]
        %v873 = vld [vmem:[%s862 + $0x3c] sm:$0xf]
        %v874 = vld [vmem:[%s862 + $0x40] sm:$0xf]
        %v875 = vld [vmem:[%s862 + $0x48] sm:$0xf]
        %v876 = vld [vmem:[%s862 + $0x4c] sm:$0xf]
        %v877 = vld [vmem:[%s862 + $0x54] sm:$0xf]
        %v878 = vld [vmem:[%s862 + $0x58] sm:$0xf]
        %v879 = vld [vmem:[%s862 + $0x60] sm:$0xf]
        %v880 = vld [vmem:[%s862 + $0x64] sm:$0xf]
        %v881 = vld [vmem:[%s862 + $0x6c] sm:$0xf]
        %v882 = vld [vmem:[%s862 + $0x70] sm:$0xf]
        %v883 = vld [vmem:[%s862 + $0x78] sm:$0xf]
        %v884 = vld [vmem:[%s862 + $0x7c] sm:$0xf]
        %v885 = vld [vmem:[%s862 + $0x84] sm:$0xf]
        %v886 = vld [vmem:[%s862 + $0x88] sm:$0xf]
        %v887 = vld [vmem:[%s862 + $0x90] sm:$0xf]
        %v888 = vld [vmem:[%s862 + $0x94] sm:$0xf]
        %v889 = vld [vmem:[%s862 + $0x9c] sm:$0xf]
        %v890 = vld [vmem:[%s862 + $0xa0] sm:$0xf]
        %v891 = vld [vmem:[%s862 + $0xa8] sm:$0xf]
        %v892 = vld [vmem:[%s862 + $0xac] sm:$0xf]
        %v893 = vld [vmem:[%s862 + $0xb4] sm:$0xf]
        %v894 = vld [vmem:[%s862 + $0xb8] sm:$0xf]
        %v895 = vld [vmem:[%s862 + $0x8] sm:$0x1]
        %v896 = vld [vmem:[%s862 + $0x14] sm:$0x1]
        %v897 = vld [vmem:[%s862 + $0x20] sm:$0x1]
        %v898 = vld [vmem:[%s862 + $0x2c] sm:$0x1]
        %v899 = vld [vmem:[%s862 + $0x38] sm:$0x1]
        %v900 = vld [vmem:[%s862 + $0x44] sm:$0x1]
        %v901 = vld [vmem:[%s862 + $0x50] sm:$0x1]
        %v902 = vld [vmem:[%s862 + $0x5c] sm:$0x1]
        %v903 = vld [vmem:[%s862 + $0x68] sm:$0x1]
        %v904 = vld [vmem:[%s862 + $0x74] sm:$0x1]
        %v905 = vld [vmem:[%s862 + $0x80] sm:$0x1]
        %v906 = vld [vmem:[%s862 + $0x8c] sm:$0x1]
        %v907 = vld [vmem:[%s862 + $0x98] sm:$0x1]
        %v908 = vld [vmem:[%s862 + $0xa4] sm:$0x1]
        %v909 = vld [vmem:[%s862 + $0xb0] sm:$0x1]
        %v910 = vld [vmem:[%s862 + $0xbc] sm:$0x1]
        %v912 = vshrl.u32 %v863, 16
        %v914 = vrot.slane %v912, 4
        %v915 = vshll.u32 %v863, 16
        %v917 = vrot.slane %v915, 5
        %v918 = vor.u32 %v914, %v917
        %v919 = vrot.slane %v918, 4
        %v921 = vshll.u32 %v864, 16
        %v923 = vrot.slane %v921, 5
        %v924 = vsel %vm295, %v919, %v923
        %v925 = vshrl.u32 %v864, 16
        %v927 = vrot.slane %v925, 4
        %v928 = vor.u32 %v927, %v923
        %v929 = vrot.slane %v928, 4
        %v931 = vshll.u32 %v895, 16
        %v933 = vrot.slane %v931, 5
        %v934 = vsel %vm295, %v929, %v933
        %v936 = vshrl.u32 %v865, 16
        %v938 = vrot.slane %v936, 4
        %v939 = vshll.u32 %v865, 16
        %v941 = vrot.slane %v939, 5
        %v942 = vor.u32 %v938, %v941
        %v943 = vrot.slane %v942, 4
        %v945 = vshll.u32 %v866, 16
        %v947 = vrot.slane %v945, 5
        %v948 = vsel %vm295, %v943, %v947
        %v949 = vshrl.u32 %v866, 16
        %v951 = vrot.slane %v949, 4
        %v952 = vor.u32 %v951, %v947
        %v953 = vrot.slane %v952, 4
        %v955 = vshll.u32 %v896, 16
        %v957 = vrot.slane %v955, 5
        %v958 = vsel %vm295, %v953, %v957
        %v960 = vshrl.u32 %v867, 16
        %v962 = vrot.slane %v960, 4
        %v963 = vshll.u32 %v867, 16
        %v965 = vrot.slane %v963, 5
        %v966 = vor.u32 %v962, %v965
        %v967 = vrot.slane %v966, 4
        %v969 = vshll.u32 %v868, 16
        %v971 = vrot.slane %v969, 5
        %v972 = vsel %vm295, %v967, %v971
        %v973 = vshrl.u32 %v868, 16
        %v975 = vrot.slane %v973, 4
        %v976 = vor.u32 %v975, %v971
        %v977 = vrot.slane %v976, 4
        %v979 = vshll.u32 %v897, 16
        %v981 = vrot.slane %v979, 5
        %v982 = vsel %vm295, %v977, %v981
        %v984 = vshrl.u32 %v869, 16
        %v986 = vrot.slane %v984, 4
        %v987 = vshll.u32 %v869, 16
        %v989 = vrot.slane %v987, 5
        %v990 = vor.u32 %v986, %v989
        %v991 = vrot.slane %v990, 4
        %v993 = vshll.u32 %v870, 16
        %v995 = vrot.slane %v993, 5
        %v996 = vsel %vm295, %v991, %v995
        %v997 = vshrl.u32 %v870, 16
        %v999 = vrot.slane %v997, 4
        %v1000 = vor.u32 %v999, %v995
        %v1001 = vrot.slane %v1000, 4
        %v1003 = vshll.u32 %v898, 16
        %v1005 = vrot.slane %v1003, 5
        %v1006 = vsel %vm295, %v1001, %v1005
        %v1008 = vshrl.u32 %v871, 16
        %v1010 = vrot.slane %v1008, 4
        %v1011 = vshll.u32 %v871, 16
        %v1013 = vrot.slane %v1011, 5
        %v1014 = vor.u32 %v1010, %v1013
        %v1015 = vrot.slane %v1014, 4
        %v1017 = vshll.u32 %v872, 16
        %v1019 = vrot.slane %v1017, 5
        %v1020 = vsel %vm295, %v1015, %v1019
        %v1021 = vshrl.u32 %v872, 16
        %v1023 = vrot.slane %v1021, 4
        %v1024 = vor.u32 %v1023, %v1019
        %v1025 = vrot.slane %v1024, 4
        %v1027 = vshll.u32 %v899, 16
        %v1029 = vrot.slane %v1027, 5
        %v1030 = vsel %vm295, %v1025, %v1029
        %v1032 = vshrl.u32 %v873, 16
        %v1034 = vrot.slane %v1032, 4
        %v1035 = vshll.u32 %v873, 16
        %v1037 = vrot.slane %v1035, 5
        %v1038 = vor.u32 %v1034, %v1037
        %v1039 = vrot.slane %v1038, 4
        %v1041 = vshll.u32 %v874, 16
        %v1043 = vrot.slane %v1041, 5
        %v1044 = vsel %vm295, %v1039, %v1043
        %v1045 = vshrl.u32 %v874, 16
        %v1047 = vrot.slane %v1045, 4
        %v1048 = vor.u32 %v1047, %v1043
        %v1049 = vrot.slane %v1048, 4
        %v1051 = vshll.u32 %v900, 16
        %v1053 = vrot.slane %v1051, 5
        %v1054 = vsel %vm295, %v1049, %v1053
        %v1056 = vshrl.u32 %v875, 16
        %v1058 = vrot.slane %v1056, 4
        %v1059 = vshll.u32 %v875, 16
        %v1061 = vrot.slane %v1059, 5
        %v1062 = vor.u32 %v1058, %v1061
        %v1063 = vrot.slane %v1062, 4
        %v1065 = vshll.u32 %v876, 16
        %v1067 = vrot.slane %v1065, 5
        %v1068 = vsel %vm295, %v1063, %v1067
        %v1069 = vshrl.u32 %v876, 16
        %v1071 = vrot.slane %v1069, 4
        %v1072 = vor.u32 %v1071, %v1067
        %v1073 = vrot.slane %v1072, 4
        %v1075 = vshll.u32 %v901, 16
        %v1077 = vrot.slane %v1075, 5
        %v1078 = vsel %vm295, %v1073, %v1077
        %v1080 = vshrl.u32 %v877, 16
        %v1082 = vrot.slane %v1080, 4
        %v1083 = vshll.u32 %v877, 16
        %v1085 = vrot.slane %v1083, 5
        %v1086 = vor.u32 %v1082, %v1085
        %v1087 = vrot.slane %v1086, 4
        %v1089 = vshll.u32 %v878, 16
        %v1091 = vrot.slane %v1089, 5
        %v1092 = vsel %vm295, %v1087, %v1091
        %v1093 = vshrl.u32 %v878, 16
        %v1095 = vrot.slane %v1093, 4
        %v1096 = vor.u32 %v1095, %v1091
        %v1097 = vrot.slane %v1096, 4
        %v1099 = vshll.u32 %v902, 16
        %v1101 = vrot.slane %v1099, 5
        %v1102 = vsel %vm295, %v1097, %v1101
        %v1104 = vshrl.u32 %v879, 16
        %v1106 = vrot.slane %v1104, 4
        %v1107 = vshll.u32 %v879, 16
        %v1109 = vrot.slane %v1107, 5
        %v1110 = vor.u32 %v1106, %v1109
        %v1111 = vrot.slane %v1110, 4
        %v1113 = vshll.u32 %v880, 16
        %v1115 = vrot.slane %v1113, 5
        %v1116 = vsel %vm295, %v1111, %v1115
        %v1117 = vshrl.u32 %v880, 16
        %v1119 = vrot.slane %v1117, 4
        %v1120 = vor.u32 %v1119, %v1115
        %v1121 = vrot.slane %v1120, 4
        %v1123 = vshll.u32 %v903, 16
        %v1125 = vrot.slane %v1123, 5
        %v1126 = vsel %vm295, %v1121, %v1125
        %v1128 = vshrl.u32 %v881, 16
        %v1130 = vrot.slane %v1128, 4
        %v1131 = vshll.u32 %v881, 16
        %v1133 = vrot.slane %v1131, 5
        %v1134 = vor.u32 %v1130, %v1133
        %v1135 = vrot.slane %v1134, 4
        %v1137 = vshll.u32 %v882, 16
        %v1139 = vrot.slane %v1137, 5
        %v1140 = vsel %vm295, %v1135, %v1139
        %v1141 = vshrl.u32 %v882, 16
        %v1143 = vrot.slane %v1141, 4
        %v1144 = vor.u32 %v1143, %v1139
        %v1145 = vrot.slane %v1144, 4
        %v1147 = vshll.u32 %v904, 16
        %v1149 = vrot.slane %v1147, 5
        %v1150 = vsel %vm295, %v1145, %v1149
        %v1152 = vshrl.u32 %v883, 16
        %v1154 = vrot.slane %v1152, 4
        %v1155 = vshll.u32 %v883, 16
        %v1157 = vrot.slane %v1155, 5
        %v1158 = vor.u32 %v1154, %v1157
        %v1159 = vrot.slane %v1158, 4
        %v1161 = vshll.u32 %v884, 16
        %v1163 = vrot.slane %v1161, 5
        %v1164 = vsel %vm295, %v1159, %v1163
        %v1165 = vshrl.u32 %v884, 16
        %v1167 = vrot.slane %v1165, 4
        %v1168 = vor.u32 %v1167, %v1163
        %v1169 = vrot.slane %v1168, 4
        %v1171 = vshll.u32 %v905, 16
        %v1173 = vrot.slane %v1171, 5
        %v1174 = vsel %vm295, %v1169, %v1173
        %v1176 = vshrl.u32 %v885, 16
        %v1178 = vrot.slane %v1176, 4
        %v1179 = vshll.u32 %v885, 16
        %v1181 = vrot.slane %v1179, 5
        %v1182 = vor.u32 %v1178, %v1181
        %v1183 = vrot.slane %v1182, 4
        %v1185 = vshll.u32 %v886, 16
        %v1187 = vrot.slane %v1185, 5
        %v1188 = vsel %vm295, %v1183, %v1187
        %v1189 = vshrl.u32 %v886, 16
        %v1191 = vrot.slane %v1189, 4
        %v1192 = vor.u32 %v1191, %v1187
        %v1193 = vrot.slane %v1192, 4
        %v1195 = vshll.u32 %v906, 16
        %v1197 = vrot.slane %v1195, 5
        %v1198 = vsel %vm295, %v1193, %v1197
        %v1200 = vshrl.u32 %v887, 16
        %v1202 = vrot.slane %v1200, 4
        %v1203 = vshll.u32 %v887, 16
        %v1205 = vrot.slane %v1203, 5
        %v1206 = vor.u32 %v1202, %v1205
        %v1207 = vrot.slane %v1206, 4
        %v1209 = vshll.u32 %v888, 16
        %v1211 = vrot.slane %v1209, 5
        %v1212 = vsel %vm295, %v1207, %v1211
        %v1213 = vshrl.u32 %v888, 16
        %v1215 = vrot.slane %v1213, 4
        %v1216 = vor.u32 %v1215, %v1211
        %v1217 = vrot.slane %v1216, 4
        %v1219 = vshll.u32 %v907, 16
        %v1221 = vrot.slane %v1219, 5
        %v1222 = vsel %vm295, %v1217, %v1221
        %v1224 = vshrl.u32 %v889, 16
        %v1226 = vrot.slane %v1224, 4
        %v1227 = vshll.u32 %v889, 16
        %v1229 = vrot.slane %v1227, 5
        %v1230 = vor.u32 %v1226, %v1229
        %v1231 = vrot.slane %v1230, 4
        %v1233 = vshll.u32 %v890, 16
        %v1235 = vrot.slane %v1233, 5
        %v1236 = vsel %vm295, %v1231, %v1235
        %v1237 = vshrl.u32 %v890, 16
        %v1239 = vrot.slane %v1237, 4
        %v1240 = vor.u32 %v1239, %v1235
        %v1241 = vrot.slane %v1240, 4
        %v1243 = vshll.u32 %v908, 16
        %v1245 = vrot.slane %v1243, 5
        %v1246 = vsel %vm295, %v1241, %v1245
        %v1248 = vshrl.u32 %v891, 16
        %v1250 = vrot.slane %v1248, 4
        %v1251 = vshll.u32 %v891, 16
        %v1253 = vrot.slane %v1251, 5
        %v1254 = vor.u32 %v1250, %v1253
        %v1255 = vrot.slane %v1254, 4
        %v1257 = vshll.u32 %v892, 16
        %v1259 = vrot.slane %v1257, 5
        %v1260 = vsel %vm295, %v1255, %v1259
        %v1261 = vshrl.u32 %v892, 16
        %v1263 = vrot.slane %v1261, 4
        %v1264 = vor.u32 %v1263, %v1259
        %v1265 = vrot.slane %v1264, 4
        %v1267 = vshll.u32 %v909, 16
        %v1269 = vrot.slane %v1267, 5
        %v1270 = vsel %vm295, %v1265, %v1269
        %v1272 = vshrl.u32 %v893, 16
        %v1274 = vrot.slane %v1272, 4
        %v1275 = vshll.u32 %v893, 16
        %v1277 = vrot.slane %v1275, 5
        %v1278 = vor.u32 %v1274, %v1277
        %v1279 = vrot.slane %v1278, 4
        %v1281 = vshll.u32 %v894, 16
        %v1283 = vrot.slane %v1281, 5
        %v1284 = vsel %vm295, %v1279, %v1283
        %v1285 = vshrl.u32 %v894, 16
        %v1287 = vrot.slane %v1285, 4
        %v1288 = vor.u32 %v1287, %v1283
        %v1289 = vrot.slane %v1288, 4
        %v1291 = vshll.u32 %v910, 16
        %v1293 = vrot.slane %v1291, 5
        %v1294 = vsel %vm295, %v1289, %v1293
        %v1295 = vld [vmem:[%s862] sm:$0xe]
        %v1296 = vld [vmem:[%s862 + $0xc] sm:$0xe]
        %v1297 = vld [vmem:[%s862 + $0x18] sm:$0xe]
        %v1298 = vld [vmem:[%s862 + $0x24] sm:$0xe]
        %v1299 = vld [vmem:[%s862 + $0x30] sm:$0xe]
        %v1300 = vld [vmem:[%s862 + $0x3c] sm:$0xe]
        %v1301 = vld [vmem:[%s862 + $0x48] sm:$0xe]
        %v1302 = vld [vmem:[%s862 + $0x54] sm:$0xe]
        %v1303 = vld [vmem:[%s862 + $0x60] sm:$0xe]
        %v1304 = vld [vmem:[%s862 + $0x6c] sm:$0xe]
        %v1305 = vld [vmem:[%s862 + $0x78] sm:$0xe]
        %v1306 = vld [vmem:[%s862 + $0x84] sm:$0xe]
        %v1307 = vld [vmem:[%s862 + $0x90] sm:$0xe]
        %v1308 = vld [vmem:[%s862 + $0x9c] sm:$0xe]
        %v1309 = vld [vmem:[%s862 + $0xa8] sm:$0xe]
        %v1310 = vld [vmem:[%s862 + $0xb4] sm:$0xe]
        %v1359 = vrot.slane %v1295, 5
        %v1360 = vrot.slane %v1359, 4
        %v1361 = vrot.slane %v864, 5
        %v1362 = vsel %vm746, %v1360, %v1361
        %v1363 = vrot.slane %v1361, 4
        %v1364 = vrot.slane %v895, 5
        %v1365 = vsel %vm746, %v1363, %v1364
        %v1366 = vrot.slane %v1296, 5
        %v1367 = vrot.slane %v1366, 4
        %v1368 = vrot.slane %v866, 5
        %v1369 = vsel %vm746, %v1367, %v1368
        %v1370 = vrot.slane %v1368, 4
        %v1371 = vrot.slane %v896, 5
        %v1372 = vsel %vm746, %v1370, %v1371
        %v1373 = vrot.slane %v1297, 5
        %v1374 = vrot.slane %v1373, 4
        %v1375 = vrot.slane %v868, 5
        %v1376 = vsel %vm746, %v1374, %v1375
        %v1377 = vrot.slane %v1375, 4
        %v1378 = vrot.slane %v897, 5
        %v1379 = vsel %vm746, %v1377, %v1378
        %v1380 = vrot.slane %v1298, 5
        %v1381 = vrot.slane %v1380, 4
        %v1382 = vrot.slane %v870, 5
        %v1383 = vsel %vm746, %v1381, %v1382
        %v1384 = vrot.slane %v1382, 4
        %v1385 = vrot.slane %v898, 5
        %v1386 = vsel %vm746, %v1384, %v1385
        %v1387 = vrot.slane %v1299, 5
        %v1388 = vrot.slane %v1387, 4
        %v1389 = vrot.slane %v872, 5
        %v1390 = vsel %vm746, %v1388, %v1389
        %v1391 = vrot.slane %v1389, 4
        %v1392 = vrot.slane %v899, 5
        %v1393 = vsel %vm746, %v1391, %v1392
        %v1394 = vrot.slane %v1300, 5
        %v1395 = vrot.slane %v1394, 4
        %v1396 = vrot.slane %v874, 5
        %v1397 = vsel %vm746, %v1395, %v1396
        %v1398 = vrot.slane %v1396, 4
        %v1399 = vrot.slane %v900, 5
        %v1400 = vsel %vm746, %v1398, %v1399
        %v1401 = vrot.slane %v1301, 5
        %v1402 = vrot.slane %v1401, 4
        %v1403 = vrot.slane %v876, 5
        %v1404 = vsel %vm746, %v1402, %v1403
        %v1405 = vrot.slane %v1403, 4
        %v1406 = vrot.slane %v901, 5
        %v1407 = vsel %vm746, %v1405, %v1406
        %v1408 = vrot.slane %v1302, 5
        %v1409 = vrot.slane %v1408, 4
        %v1410 = vrot.slane %v878, 5
        %v1411 = vsel %vm746, %v1409, %v1410
        %v1412 = vrot.slane %v1410, 4
        %v1413 = vrot.slane %v902, 5
        %v1414 = vsel %vm746, %v1412, %v1413
        %v1415 = vrot.slane %v1303, 5
        %v1416 = vrot.slane %v1415, 4
        %v1417 = vrot.slane %v880, 5
        %v1418 = vsel %vm746, %v1416, %v1417
        %v1419 = vrot.slane %v1417, 4
        %v1420 = vrot.slane %v903, 5
        %v1421 = vsel %vm746, %v1419, %v1420
        %v1422 = vrot.slane %v1304, 5
        %v1423 = vrot.slane %v1422, 4
        %v1424 = vrot.slane %v882, 5
        %v1425 = vsel %vm746, %v1423, %v1424
        %v1426 = vrot.slane %v1424, 4
        %v1427 = vrot.slane %v904, 5
        %v1428 = vsel %vm746, %v1426, %v1427
        %v1429 = vrot.slane %v1305, 5
        %v1430 = vrot.slane %v1429, 4
        %v1431 = vrot.slane %v884, 5
        %v1432 = vsel %vm746, %v1430, %v1431
        %v1433 = vrot.slane %v1431, 4
        %v1434 = vrot.slane %v905, 5
        %v1435 = vsel %vm746, %v1433, %v1434
        %v1436 = vrot.slane %v1306, 5
        %v1437 = vrot.slane %v1436, 4
        %v1438 = vrot.slane %v886, 5
        %v1439 = vsel %vm746, %v1437, %v1438
        %v1440 = vrot.slane %v1438, 4
        %v1441 = vrot.slane %v906, 5
        %v1442 = vsel %vm746, %v1440, %v1441
        %v1443 = vrot.slane %v1307, 5
        %v1444 = vrot.slane %v1443, 4
        %v1445 = vrot.slane %v888, 5
        %v1446 = vsel %vm746, %v1444, %v1445
        %v1447 = vrot.slane %v1445, 4
        %v1448 = vrot.slane %v907, 5
        %v1449 = vsel %vm746, %v1447, %v1448
        %v1450 = vrot.slane %v1308, 5
        %v1451 = vrot.slane %v1450, 4
        %v1452 = vrot.slane %v890, 5
        %v1453 = vsel %vm746, %v1451, %v1452
        %v1454 = vrot.slane %v1452, 4
        %v1455 = vrot.slane %v908, 5
        %v1456 = vsel %vm746, %v1454, %v1455
        %v1457 = vrot.slane %v1309, 5
        %v1458 = vrot.slane %v1457, 4
        %v1459 = vrot.slane %v892, 5
        %v1460 = vsel %vm746, %v1458, %v1459
        %v1461 = vrot.slane %v1459, 4
        %v1462 = vrot.slane %v909, 5
        %v1463 = vsel %vm746, %v1461, %v1462
        %v1464 = vrot.slane %v1310, 5
        %v1465 = vrot.slane %v1464, 4
        %v1466 = vrot.slane %v894, 5
        %v1467 = vsel %vm746, %v1465, %v1466
        %v1468 = vrot.slane %v1466, 4
        %v1469 = vrot.slane %v910, 5
        %v1470 = vsel %vm746, %v1468, %v1469
        %s1471 = sadd.s32 %s241, 2
        %s1472 = smul.u32 %s1471, 3
        %s1473 = smul.addr %s1472, 4
        %s1474 = scalar_lea.vmem %s229, %s1473
        %v1475 = vld [vmem:[%s1474] sm:$0xf]
        %v1476 = vld [vmem:[%s1474 + $0x4] sm:$0xf]
        %v1477 = vld [vmem:[%s1474 + $0xc] sm:$0xf]
        %v1478 = vld [vmem:[%s1474 + $0x10] sm:$0xf]
        %v1479 = vld [vmem:[%s1474 + $0x18] sm:$0xf]
        %v1480 = vld [vmem:[%s1474 + $0x1c] sm:$0xf]
        %v1481 = vld [vmem:[%s1474 + $0x24] sm:$0xf]
        %v1482 = vld [vmem:[%s1474 + $0x28] sm:$0xf]
        %v1483 = vld [vmem:[%s1474 + $0x30] sm:$0xf]
        %v1484 = vld [vmem:[%s1474 + $0x34] sm:$0xf]
        %v1485 = vld [vmem:[%s1474 + $0x3c] sm:$0xf]
        %v1486 = vld [vmem:[%s1474 + $0x40] sm:$0xf]
        %v1487 = vld [vmem:[%s1474 + $0x48] sm:$0xf]
        %v1488 = vld [vmem:[%s1474 + $0x4c] sm:$0xf]
        %v1489 = vld [vmem:[%s1474 + $0x54] sm:$0xf]
        %v1490 = vld [vmem:[%s1474 + $0x58] sm:$0xf]
        %v1491 = vld [vmem:[%s1474 + $0x60] sm:$0xf]
        %v1492 = vld [vmem:[%s1474 + $0x64] sm:$0xf]
        %v1493 = vld [vmem:[%s1474 + $0x6c] sm:$0xf]
        %v1494 = vld [vmem:[%s1474 + $0x70] sm:$0xf]
        %v1495 = vld [vmem:[%s1474 + $0x78] sm:$0xf]
        %v1496 = vld [vmem:[%s1474 + $0x7c] sm:$0xf]
        %v1497 = vld [vmem:[%s1474 + $0x84] sm:$0xf]
        %v1498 = vld [vmem:[%s1474 + $0x88] sm:$0xf]
        %v1499 = vld [vmem:[%s1474 + $0x90] sm:$0xf]
        %v1500 = vld [vmem:[%s1474 + $0x94] sm:$0xf]
        %v1501 = vld [vmem:[%s1474 + $0x9c] sm:$0xf]
        %v1502 = vld [vmem:[%s1474 + $0xa0] sm:$0xf]
        %v1503 = vld [vmem:[%s1474 + $0xa8] sm:$0xf]
        %v1504 = vld [vmem:[%s1474 + $0xac] sm:$0xf]
        %v1505 = vld [vmem:[%s1474 + $0xb4] sm:$0xf]
        %v1506 = vld [vmem:[%s1474 + $0xb8] sm:$0xf]
        %v1507 = vld [vmem:[%s1474 + $0x8] sm:$0x1]
        %v1508 = vld [vmem:[%s1474 + $0x14] sm:$0x1]
        %v1509 = vld [vmem:[%s1474 + $0x20] sm:$0x1]
        %v1510 = vld [vmem:[%s1474 + $0x2c] sm:$0x1]
        %v1511 = vld [vmem:[%s1474 + $0x38] sm:$0x1]
        %v1512 = vld [vmem:[%s1474 + $0x44] sm:$0x1]
        %v1513 = vld [vmem:[%s1474 + $0x50] sm:$0x1]
        %v1514 = vld [vmem:[%s1474 + $0x5c] sm:$0x1]
        %v1515 = vld [vmem:[%s1474 + $0x68] sm:$0x1]
        %v1516 = vld [vmem:[%s1474 + $0x74] sm:$0x1]
        %v1517 = vld [vmem:[%s1474 + $0x80] sm:$0x1]
        %v1518 = vld [vmem:[%s1474 + $0x8c] sm:$0x1]
        %v1519 = vld [vmem:[%s1474 + $0x98] sm:$0x1]
        %v1520 = vld [vmem:[%s1474 + $0xa4] sm:$0x1]
        %v1521 = vld [vmem:[%s1474 + $0xb0] sm:$0x1]
        %v1522 = vld [vmem:[%s1474 + $0xbc] sm:$0x1]
        %v1524 = vshrl.u32 %v1475, 16
        %v1526 = vrot.slane %v1524, 4
        %v1527 = vshll.u32 %v1475, 16
        %v1529 = vrot.slane %v1527, 5
        %v1530 = vor.u32 %v1526, %v1529
        %v1531 = vrot.slane %v1530, 4
        %v1533 = vshll.u32 %v1476, 16
        %v1535 = vrot.slane %v1533, 5
        %v1536 = vsel %vm295, %v1531, %v1535
        %v1537 = vshrl.u32 %v1476, 16
        %v1539 = vrot.slane %v1537, 4
        %v1540 = vor.u32 %v1539, %v1535
        %v1541 = vrot.slane %v1540, 4
        %v1543 = vshll.u32 %v1507, 16
        %v1545 = vrot.slane %v1543, 5
        %v1546 = vsel %vm295, %v1541, %v1545
        %v1548 = vshrl.u32 %v1477, 16
        %v1550 = vrot.slane %v1548, 4
        %v1551 = vshll.u32 %v1477, 16
        %v1553 = vrot.slane %v1551, 5
        %v1554 = vor.u32 %v1550, %v1553
        %v1555 = vrot.slane %v1554, 4
        %v1557 = vshll.u32 %v1478, 16
        %v1559 = vrot.slane %v1557, 5
        %v1560 = vsel %vm295, %v1555, %v1559
        %v1561 = vshrl.u32 %v1478, 16
        %v1563 = vrot.slane %v1561, 4
        %v1564 = vor.u32 %v1563, %v1559
        %v1565 = vrot.slane %v1564, 4
        %v1567 = vshll.u32 %v1508, 16
        %v1569 = vrot.slane %v1567, 5
        %v1570 = vsel %vm295, %v1565, %v1569
        %v1572 = vshrl.u32 %v1479, 16
        %v1574 = vrot.slane %v1572, 4
        %v1575 = vshll.u32 %v1479, 16
        %v1577 = vrot.slane %v1575, 5
        %v1578 = vor.u32 %v1574, %v1577
        %v1579 = vrot.slane %v1578, 4
        %v1581 = vshll.u32 %v1480, 16
        %v1583 = vrot.slane %v1581, 5
        %v1584 = vsel %vm295, %v1579, %v1583
        %v1585 = vshrl.u32 %v1480, 16
        %v1587 = vrot.slane %v1585, 4
        %v1588 = vor.u32 %v1587, %v1583
        %v1589 = vrot.slane %v1588, 4
        %v1591 = vshll.u32 %v1509, 16
        %v1593 = vrot.slane %v1591, 5
        %v1594 = vsel %vm295, %v1589, %v1593
        %v1596 = vshrl.u32 %v1481, 16
        %v1598 = vrot.slane %v1596, 4
        %v1599 = vshll.u32 %v1481, 16
        %v1601 = vrot.slane %v1599, 5
        %v1602 = vor.u32 %v1598, %v1601
        %v1603 = vrot.slane %v1602, 4
        %v1605 = vshll.u32 %v1482, 16
        %v1607 = vrot.slane %v1605, 5
        %v1608 = vsel %vm295, %v1603, %v1607
        %v1609 = vshrl.u32 %v1482, 16
        %v1611 = vrot.slane %v1609, 4
        %v1612 = vor.u32 %v1611, %v1607
        %v1613 = vrot.slane %v1612, 4
        %v1615 = vshll.u32 %v1510, 16
        %v1617 = vrot.slane %v1615, 5
        %v1618 = vsel %vm295, %v1613, %v1617
        %v1620 = vshrl.u32 %v1483, 16
        %v1622 = vrot.slane %v1620, 4
        %v1623 = vshll.u32 %v1483, 16
        %v1625 = vrot.slane %v1623, 5
        %v1626 = vor.u32 %v1622, %v1625
        %v1627 = vrot.slane %v1626, 4
        %v1629 = vshll.u32 %v1484, 16
        %v1631 = vrot.slane %v1629, 5
        %v1632 = vsel %vm295, %v1627, %v1631
        %v1633 = vshrl.u32 %v1484, 16
        %v1635 = vrot.slane %v1633, 4
        %v1636 = vor.u32 %v1635, %v1631
        %v1637 = vrot.slane %v1636, 4
        %v1639 = vshll.u32 %v1511, 16
        %v1641 = vrot.slane %v1639, 5
        %v1642 = vsel %vm295, %v1637, %v1641
        %v1644 = vshrl.u32 %v1485, 16
        %v1646 = vrot.slane %v1644, 4
        %v1647 = vshll.u32 %v1485, 16
        %v1649 = vrot.slane %v1647, 5
        %v1650 = vor.u32 %v1646, %v1649
        %v1651 = vrot.slane %v1650, 4
        %v1653 = vshll.u32 %v1486, 16
        %v1655 = vrot.slane %v1653, 5
        %v1656 = vsel %vm295, %v1651, %v1655
        %v1657 = vshrl.u32 %v1486, 16
        %v1659 = vrot.slane %v1657, 4
        %v1660 = vor.u32 %v1659, %v1655
        %v1661 = vrot.slane %v1660, 4
        %v1663 = vshll.u32 %v1512, 16
        %v1665 = vrot.slane %v1663, 5
        %v1666 = vsel %vm295, %v1661, %v1665
        %v1668 = vshrl.u32 %v1487, 16
        %v1670 = vrot.slane %v1668, 4
        %v1671 = vshll.u32 %v1487, 16
        %v1673 = vrot.slane %v1671, 5
        %v1674 = vor.u32 %v1670, %v1673
        %v1675 = vrot.slane %v1674, 4
        %v1677 = vshll.u32 %v1488, 16
        %v1679 = vrot.slane %v1677, 5
        %v1680 = vsel %vm295, %v1675, %v1679
        %v1681 = vshrl.u32 %v1488, 16
        %v1683 = vrot.slane %v1681, 4
        %v1684 = vor.u32 %v1683, %v1679
        %v1685 = vrot.slane %v1684, 4
        %v1687 = vshll.u32 %v1513, 16
        %v1689 = vrot.slane %v1687, 5
        %v1690 = vsel %vm295, %v1685, %v1689
        %v1692 = vshrl.u32 %v1489, 16
        %v1694 = vrot.slane %v1692, 4
        %v1695 = vshll.u32 %v1489, 16
        %v1697 = vrot.slane %v1695, 5
        %v1698 = vor.u32 %v1694, %v1697
        %v1699 = vrot.slane %v1698, 4
        %v1701 = vshll.u32 %v1490, 16
        %v1703 = vrot.slane %v1701, 5
        %v1704 = vsel %vm295, %v1699, %v1703
        %v1705 = vshrl.u32 %v1490, 16
        %v1707 = vrot.slane %v1705, 4
        %v1708 = vor.u32 %v1707, %v1703
        %v1709 = vrot.slane %v1708, 4
        %v1711 = vshll.u32 %v1514, 16
        %v1713 = vrot.slane %v1711, 5
        %v1714 = vsel %vm295, %v1709, %v1713
        %v1716 = vshrl.u32 %v1491, 16
        %v1718 = vrot.slane %v1716, 4
        %v1719 = vshll.u32 %v1491, 16
        %v1721 = vrot.slane %v1719, 5
        %v1722 = vor.u32 %v1718, %v1721
        %v1723 = vrot.slane %v1722, 4
        %v1725 = vshll.u32 %v1492, 16
        %v1727 = vrot.slane %v1725, 5
        %v1728 = vsel %vm295, %v1723, %v1727
        %v1729 = vshrl.u32 %v1492, 16
        %v1731 = vrot.slane %v1729, 4
        %v1732 = vor.u32 %v1731, %v1727
        %v1733 = vrot.slane %v1732, 4
        %v1735 = vshll.u32 %v1515, 16
        %v1737 = vrot.slane %v1735, 5
        %v1738 = vsel %vm295, %v1733, %v1737
        %v1740 = vshrl.u32 %v1493, 16
        %v1742 = vrot.slane %v1740, 4
        %v1743 = vshll.u32 %v1493, 16
        %v1745 = vrot.slane %v1743, 5
        %v1746 = vor.u32 %v1742, %v1745
        %v1747 = vrot.slane %v1746, 4
        %v1749 = vshll.u32 %v1494, 16
        %v1751 = vrot.slane %v1749, 5
        %v1752 = vsel %vm295, %v1747, %v1751
        %v1753 = vshrl.u32 %v1494, 16
        %v1755 = vrot.slane %v1753, 4
        %v1756 = vor.u32 %v1755, %v1751
        %v1757 = vrot.slane %v1756, 4
        %v1759 = vshll.u32 %v1516, 16
        %v1761 = vrot.slane %v1759, 5
        %v1762 = vsel %vm295, %v1757, %v1761
        %v1764 = vshrl.u32 %v1495, 16
        %v1766 = vrot.slane %v1764, 4
        %v1767 = vshll.u32 %v1495, 16
        %v1769 = vrot.slane %v1767, 5
        %v1770 = vor.u32 %v1766, %v1769
        %v1771 = vrot.slane %v1770, 4
        %v1773 = vshll.u32 %v1496, 16
        %v1775 = vrot.slane %v1773, 5
        %v1776 = vsel %vm295, %v1771, %v1775
        %v1777 = vshrl.u32 %v1496, 16
        %v1779 = vrot.slane %v1777, 4
        %v1780 = vor.u32 %v1779, %v1775
        %v1781 = vrot.slane %v1780, 4
        %v1783 = vshll.u32 %v1517, 16
        %v1785 = vrot.slane %v1783, 5
        %v1786 = vsel %vm295, %v1781, %v1785
        %v1788 = vshrl.u32 %v1497, 16
        %v1790 = vrot.slane %v1788, 4
        %v1791 = vshll.u32 %v1497, 16
        %v1793 = vrot.slane %v1791, 5
        %v1794 = vor.u32 %v1790, %v1793
        %v1795 = vrot.slane %v1794, 4
        %v1797 = vshll.u32 %v1498, 16
        %v1799 = vrot.slane %v1797, 5
        %v1800 = vsel %vm295, %v1795, %v1799
        %v1801 = vshrl.u32 %v1498, 16
        %v1803 = vrot.slane %v1801, 4
        %v1804 = vor.u32 %v1803, %v1799
        %v1805 = vrot.slane %v1804, 4
        %v1807 = vshll.u32 %v1518, 16
        %v1809 = vrot.slane %v1807, 5
        %v1810 = vsel %vm295, %v1805, %v1809
        %v1812 = vshrl.u32 %v1499, 16
        %v1814 = vrot.slane %v1812, 4
        %v1815 = vshll.u32 %v1499, 16
        %v1817 = vrot.slane %v1815, 5
        %v1818 = vor.u32 %v1814, %v1817
        %v1819 = vrot.slane %v1818, 4
        %v1821 = vshll.u32 %v1500, 16
        %v1823 = vrot.slane %v1821, 5
        %v1824 = vsel %vm295, %v1819, %v1823
        %v1825 = vshrl.u32 %v1500, 16
        %v1827 = vrot.slane %v1825, 4
        %v1828 = vor.u32 %v1827, %v1823
        %v1829 = vrot.slane %v1828, 4
        %v1831 = vshll.u32 %v1519, 16
        %v1833 = vrot.slane %v1831, 5
        %v1834 = vsel %vm295, %v1829, %v1833
        %v1836 = vshrl.u32 %v1501, 16
        %v1838 = vrot.slane %v1836, 4
        %v1839 = vshll.u32 %v1501, 16
        %v1841 = vrot.slane %v1839, 5
        %v1842 = vor.u32 %v1838, %v1841
        %v1843 = vrot.slane %v1842, 4
        %v1845 = vshll.u32 %v1502, 16
        %v1847 = vrot.slane %v1845, 5
        %v1848 = vsel %vm295, %v1843, %v1847
        %v1849 = vshrl.u32 %v1502, 16
        %v1851 = vrot.slane %v1849, 4
        %v1852 = vor.u32 %v1851, %v1847
        %v1853 = vrot.slane %v1852, 4
        %v1855 = vshll.u32 %v1520, 16
        %v1857 = vrot.slane %v1855, 5
        %v1858 = vsel %vm295, %v1853, %v1857
        %v1860 = vshrl.u32 %v1503, 16
        %v1862 = vrot.slane %v1860, 4
        %v1863 = vshll.u32 %v1503, 16
        %v1865 = vrot.slane %v1863, 5
        %v1866 = vor.u32 %v1862, %v1865
        %v1867 = vrot.slane %v1866, 4
        %v1869 = vshll.u32 %v1504, 16
        %v1871 = vrot.slane %v1869, 5
        %v1872 = vsel %vm295, %v1867, %v1871
        %v1873 = vshrl.u32 %v1504, 16
        %v1875 = vrot.slane %v1873, 4
        %v1876 = vor.u32 %v1875, %v1871
        %v1877 = vrot.slane %v1876, 4
        %v1879 = vshll.u32 %v1521, 16
        %v1881 = vrot.slane %v1879, 5
        %v1882 = vsel %vm295, %v1877, %v1881
        %v1884 = vshrl.u32 %v1505, 16
        %v1886 = vrot.slane %v1884, 4
        %v1887 = vshll.u32 %v1505, 16
        %v1889 = vrot.slane %v1887, 5
        %v1890 = vor.u32 %v1886, %v1889
        %v1891 = vrot.slane %v1890, 4
        %v1893 = vshll.u32 %v1506, 16
        %v1895 = vrot.slane %v1893, 5
        %v1896 = vsel %vm295, %v1891, %v1895
        %v1897 = vshrl.u32 %v1506, 16
        %v1899 = vrot.slane %v1897, 4
        %v1900 = vor.u32 %v1899, %v1895
        %v1901 = vrot.slane %v1900, 4
        %v1903 = vshll.u32 %v1522, 16
        %v1905 = vrot.slane %v1903, 5
        %v1906 = vsel %vm295, %v1901, %v1905
        %v1907 = vld [vmem:[%s1474] sm:$0xe]
        %v1908 = vld [vmem:[%s1474 + $0xc] sm:$0xe]
        %v1909 = vld [vmem:[%s1474 + $0x18] sm:$0xe]
        %v1910 = vld [vmem:[%s1474 + $0x24] sm:$0xe]
        %v1911 = vld [vmem:[%s1474 + $0x30] sm:$0xe]
        %v1912 = vld [vmem:[%s1474 + $0x3c] sm:$0xe]
        %v1913 = vld [vmem:[%s1474 + $0x48] sm:$0xe]
        %v1914 = vld [vmem:[%s1474 + $0x54] sm:$0xe]
        %v1915 = vld [vmem:[%s1474 + $0x60] sm:$0xe]
        %v1916 = vld [vmem:[%s1474 + $0x6c] sm:$0xe]
        %v1917 = vld [vmem:[%s1474 + $0x78] sm:$0xe]
        %v1918 = vld [vmem:[%s1474 + $0x84] sm:$0xe]
        %v1919 = vld [vmem:[%s1474 + $0x90] sm:$0xe]
        %v1920 = vld [vmem:[%s1474 + $0x9c] sm:$0xe]
        %v1921 = vld [vmem:[%s1474 + $0xa8] sm:$0xe]
        %v1922 = vld [vmem:[%s1474 + $0xb4] sm:$0xe]
        %v1971 = vrot.slane %v1907, 5
        %v1972 = vrot.slane %v1971, 4
        %v1973 = vrot.slane %v1476, 5
        %v1974 = vsel %vm746, %v1972, %v1973
        %v1975 = vrot.slane %v1973, 4
        %v1976 = vrot.slane %v1507, 5
        %v1977 = vsel %vm746, %v1975, %v1976
        %v1978 = vrot.slane %v1908, 5
        %v1979 = vrot.slane %v1978, 4
        %v1980 = vrot.slane %v1478, 5
        %v1981 = vsel %vm746, %v1979, %v1980
        %v1982 = vrot.slane %v1980, 4
        %v1983 = vrot.slane %v1508, 5
        %v1984 = vsel %vm746, %v1982, %v1983
        %v1985 = vrot.slane %v1909, 5
        %v1986 = vrot.slane %v1985, 4
        %v1987 = vrot.slane %v1480, 5
        %v1988 = vsel %vm746, %v1986, %v1987
        %v1989 = vrot.slane %v1987, 4
        %v1990 = vrot.slane %v1509, 5
        %v1991 = vsel %vm746, %v1989, %v1990
        %v1992 = vrot.slane %v1910, 5
        %v1993 = vrot.slane %v1992, 4
        %v1994 = vrot.slane %v1482, 5
        %v1995 = vsel %vm746, %v1993, %v1994
        %v1996 = vrot.slane %v1994, 4
        %v1997 = vrot.slane %v1510, 5
        %v1998 = vsel %vm746, %v1996, %v1997
        %v1999 = vrot.slane %v1911, 5
        %v2000 = vrot.slane %v1999, 4
        %v2001 = vrot.slane %v1484, 5
        %v2002 = vsel %vm746, %v2000, %v2001
        %v2003 = vrot.slane %v2001, 4
        %v2004 = vrot.slane %v1511, 5
        %v2005 = vsel %vm746, %v2003, %v2004
        %v2006 = vrot.slane %v1912, 5
        %v2007 = vrot.slane %v2006, 4
        %v2008 = vrot.slane %v1486, 5
        %v2009 = vsel %vm746, %v2007, %v2008
        %v2010 = vrot.slane %v2008, 4
        %v2011 = vrot.slane %v1512, 5
        %v2012 = vsel %vm746, %v2010, %v2011
        %v2013 = vrot.slane %v1913, 5
        %v2014 = vrot.slane %v2013, 4
        %v2015 = vrot.slane %v1488, 5
        %v2016 = vsel %vm746, %v2014, %v2015
        %v2017 = vrot.slane %v2015, 4
        %v2018 = vrot.slane %v1513, 5
        %v2019 = vsel %vm746, %v2017, %v2018
        %v2020 = vrot.slane %v1914, 5
        %v2021 = vrot.slane %v2020, 4
        %v2022 = vrot.slane %v1490, 5
        %v2023 = vsel %vm746, %v2021, %v2022
        %v2024 = vrot.slane %v2022, 4
        %v2025 = vrot.slane %v1514, 5
        %v2026 = vsel %vm746, %v2024, %v2025
        %v2027 = vrot.slane %v1915, 5
        %v2028 = vrot.slane %v2027, 4
        %v2029 = vrot.slane %v1492, 5
        %v2030 = vsel %vm746, %v2028, %v2029
        %v2031 = vrot.slane %v2029, 4
        %v2032 = vrot.slane %v1515, 5
        %v2033 = vsel %vm746, %v2031, %v2032
        %v2034 = vrot.slane %v1916, 5
        %v2035 = vrot.slane %v2034, 4
        %v2036 = vrot.slane %v1494, 5
        %v2037 = vsel %vm746, %v2035, %v2036
        %v2038 = vrot.slane %v2036, 4
        %v2039 = vrot.slane %v1516, 5
        %v2040 = vsel %vm746, %v2038, %v2039
        %v2041 = vrot.slane %v1917, 5
        %v2042 = vrot.slane %v2041, 4
        %v2043 = vrot.slane %v1496, 5
        %v2044 = vsel %vm746, %v2042, %v2043
        %v2045 = vrot.slane %v2043, 4
        %v2046 = vrot.slane %v1517, 5
        %v2047 = vsel %vm746, %v2045, %v2046
        %v2048 = vrot.slane %v1918, 5
        %v2049 = vrot.slane %v2048, 4
        %v2050 = vrot.slane %v1498, 5
        %v2051 = vsel %vm746, %v2049, %v2050
        %v2052 = vrot.slane %v2050, 4
        %v2053 = vrot.slane %v1518, 5
        %v2054 = vsel %vm746, %v2052, %v2053
        %v2055 = vrot.slane %v1919, 5
        %v2056 = vrot.slane %v2055, 4
        %v2057 = vrot.slane %v1500, 5
        %v2058 = vsel %vm746, %v2056, %v2057
        %v2059 = vrot.slane %v2057, 4
        %v2060 = vrot.slane %v1519, 5
        %v2061 = vsel %vm746, %v2059, %v2060
        %v2062 = vrot.slane %v1920, 5
        %v2063 = vrot.slane %v2062, 4
        %v2064 = vrot.slane %v1502, 5
        %v2065 = vsel %vm746, %v2063, %v2064
        %v2066 = vrot.slane %v2064, 4
        %v2067 = vrot.slane %v1520, 5
        %v2068 = vsel %vm746, %v2066, %v2067
        %v2069 = vrot.slane %v1921, 5
        %v2070 = vrot.slane %v2069, 4
        %v2071 = vrot.slane %v1504, 5
        %v2072 = vsel %vm746, %v2070, %v2071
        %v2073 = vrot.slane %v2071, 4
        %v2074 = vrot.slane %v1521, 5
        %v2075 = vsel %vm746, %v2073, %v2074
        %v2076 = vrot.slane %v1922, 5
        %v2077 = vrot.slane %v2076, 4
        %v2078 = vrot.slane %v1506, 5
        %v2079 = vsel %vm746, %v2077, %v2078
        %v2080 = vrot.slane %v2078, 4
        %v2081 = vrot.slane %v1522, 5
        %v2082 = vsel %vm746, %v2080, %v2081
        %v2099 = vunpack.c.l.b16 %v245
        %v2100 = vunpack.c.l.b16 %v246
        %v2101 = vunpack.c.l.b16 %v247
        %v2102 = vunpack.c.l.b16 %v248
        %v2103 = vunpack.c.l.b16 %v249
        %v2104 = vunpack.c.l.b16 %v250
        %v2105 = vunpack.c.l.b16 %v251
        %v2106 = vunpack.c.l.b16 %v252
        %v2107 = vunpack.c.l.b16 %v253
        %v2108 = vunpack.c.l.b16 %v254
        %v2109 = vunpack.c.l.b16 %v255
        %v2110 = vunpack.c.l.b16 %v256
        %v2111 = vunpack.c.l.b16 %v257
        %v2112 = vunpack.c.l.b16 %v258
        %v2113 = vunpack.c.l.b16 %v259
        %v2114 = vunpack.c.l.b16 %v260
        %v2115 = vunpack.c.l.b16 %v261
        %v2116 = vunpack.c.l.b16 %v262
        %v2117 = vunpack.c.l.b16 %v263
        %v2118 = vunpack.c.l.b16 %v264
        %v2119 = vunpack.c.l.b16 %v265
        %v2120 = vunpack.c.l.b16 %v266
        %v2121 = vunpack.c.l.b16 %v267
        %v2122 = vunpack.c.l.b16 %v268
        %v2123 = vunpack.c.l.b16 %v269
        %v2124 = vunpack.c.l.b16 %v270
        %v2125 = vunpack.c.l.b16 %v271
        %v2126 = vunpack.c.l.b16 %v272
        %v2127 = vunpack.c.l.b16 %v273
        %v2128 = vunpack.c.l.b16 %v274
        %v2129 = vunpack.c.l.b16 %v275
        %v2130 = vunpack.c.l.b16 %v276
        %v2131 = vpack.c.b16 %v2100, %v2099
        %v2132 = vpack.c.b16 %v2102, %v2101
        %v2133 = vpack.c.b16 %v2104, %v2103
        %v2134 = vpack.c.b16 %v2106, %v2105
        %v2135 = vpack.c.b16 %v2108, %v2107
        %v2136 = vpack.c.b16 %v2110, %v2109
        %v2137 = vpack.c.b16 %v2112, %v2111
        %v2138 = vpack.c.b16 %v2114, %v2113
        %v2139 = vpack.c.b16 %v2116, %v2115
        %v2140 = vpack.c.b16 %v2118, %v2117
        %v2141 = vpack.c.b16 %v2120, %v2119
        %v2142 = vpack.c.b16 %v2122, %v2121
        %v2143 = vpack.c.b16 %v2124, %v2123
        %v2144 = vpack.c.b16 %v2126, %v2125
        %v2145 = vpack.c.b16 %v2128, %v2127
        %v2146 = vpack.c.b16 %v2130, %v2129
        %v2147 = vunpack.c.l.b16 %v309
        %v2148 = vunpack.c.l.b16 %v319
        %v2149 = vunpack.c.l.b16 %v333
        %v2150 = vunpack.c.l.b16 %v343
        %v2151 = vunpack.c.l.b16 %v357
        %v2152 = vunpack.c.l.b16 %v367
        %v2153 = vunpack.c.l.b16 %v381
        %v2154 = vunpack.c.l.b16 %v391
        %v2155 = vunpack.c.l.b16 %v405
        %v2156 = vunpack.c.l.b16 %v415
        %v2157 = vunpack.c.l.b16 %v429
        %v2158 = vunpack.c.l.b16 %v439
        %v2159 = vunpack.c.l.b16 %v453
        %v2160 = vunpack.c.l.b16 %v463
        %v2161 = vunpack.c.l.b16 %v477
        %v2162 = vunpack.c.l.b16 %v487
        %v2163 = vunpack.c.l.b16 %v501
        %v2164 = vunpack.c.l.b16 %v511
        %v2165 = vunpack.c.l.b16 %v525
        %v2166 = vunpack.c.l.b16 %v535
        %v2167 = vunpack.c.l.b16 %v549
        %v2168 = vunpack.c.l.b16 %v559
        %v2169 = vunpack.c.l.b16 %v573
        %v2170 = vunpack.c.l.b16 %v583
        %v2171 = vunpack.c.l.b16 %v597
        %v2172 = vunpack.c.l.b16 %v607
        %v2173 = vunpack.c.l.b16 %v621
        %v2174 = vunpack.c.l.b16 %v631
        %v2175 = vunpack.c.l.b16 %v645
        %v2176 = vunpack.c.l.b16 %v655
        %v2177 = vunpack.c.l.b16 %v669
        %v2178 = vunpack.c.l.b16 %v679
        %v2179 = vpack.c.b16 %v2148, %v2147
        %v2180 = vpack.c.b16 %v2150, %v2149
        %v2181 = vpack.c.b16 %v2152, %v2151
        %v2182 = vpack.c.b16 %v2154, %v2153
        %v2183 = vpack.c.b16 %v2156, %v2155
        %v2184 = vpack.c.b16 %v2158, %v2157
        %v2185 = vpack.c.b16 %v2160, %v2159
        %v2186 = vpack.c.b16 %v2162, %v2161
        %v2187 = vpack.c.b16 %v2164, %v2163
        %v2188 = vpack.c.b16 %v2166, %v2165
        %v2189 = vpack.c.b16 %v2168, %v2167
        %v2190 = vpack.c.b16 %v2170, %v2169
        %v2191 = vpack.c.b16 %v2172, %v2171
        %v2192 = vpack.c.b16 %v2174, %v2173
        %v2193 = vpack.c.b16 %v2176, %v2175
        %v2194 = vpack.c.b16 %v2178, %v2177
        %2195 = vrot.lane.b32.xlu0 %v2179, 4
        %v2196 = vpop.permute.xlu0 %2195
        %2197 = vrot.lane.b32.xlu0 %v2180, 4
        %v2198 = vpop.permute.xlu0 %2197
        %2199 = vrot.lane.b32.xlu0 %v2181, 4
        %v2200 = vpop.permute.xlu0 %2199
        %2201 = vrot.lane.b32.xlu0 %v2182, 4
        %v2202 = vpop.permute.xlu0 %2201
        %2203 = vrot.lane.b32.xlu0 %v2183, 4
        %v2204 = vpop.permute.xlu0 %2203
        %2205 = vrot.lane.b32.xlu0 %v2184, 4
        %v2206 = vpop.permute.xlu0 %2205
        %2207 = vrot.lane.b32.xlu0 %v2185, 4
        %v2208 = vpop.permute.xlu0 %2207
        %2209 = vrot.lane.b32.xlu0 %v2186, 4
        %v2210 = vpop.permute.xlu0 %2209
        %2211 = vrot.lane.b32.xlu0 %v2187, 4
        %v2212 = vpop.permute.xlu0 %2211
        %2213 = vrot.lane.b32.xlu0 %v2188, 4
        %v2214 = vpop.permute.xlu0 %2213
        %2215 = vrot.lane.b32.xlu0 %v2189, 4
        %v2216 = vpop.permute.xlu0 %2215
        %2217 = vrot.lane.b32.xlu0 %v2190, 4
        %v2218 = vpop.permute.xlu0 %2217
        %2219 = vrot.lane.b32.xlu0 %v2191, 4
        %v2220 = vpop.permute.xlu0 %2219
        %2221 = vrot.lane.b32.xlu0 %v2192, 4
        %v2222 = vpop.permute.xlu0 %2221
        %2223 = vrot.lane.b32.xlu0 %v2193, 4
        %v2224 = vpop.permute.xlu0 %2223
        %2225 = vrot.lane.b32.xlu0 %v2194, 4
        %v2226 = vpop.permute.xlu0 %2225
        %v2227 = vunpack.c.l.b16 %v750
        %v2228 = vunpack.c.l.b16 %v753
        %v2229 = vunpack.c.l.b16 %v757
        %v2230 = vunpack.c.l.b16 %v760
        %v2231 = vunpack.c.l.b16 %v764
        %v2232 = vunpack.c.l.b16 %v767
        %v2233 = vunpack.c.l.b16 %v771
        %v2234 = vunpack.c.l.b16 %v774
        %v2235 = vunpack.c.l.b16 %v778
        %v2236 = vunpack.c.l.b16 %v781
        %v2237 = vunpack.c.l.b16 %v785
        %v2238 = vunpack.c.l.b16 %v788
        %v2239 = vunpack.c.l.b16 %v792
        %v2240 = vunpack.c.l.b16 %v795
        %v2241 = vunpack.c.l.b16 %v799
        %v2242 = vunpack.c.l.b16 %v802
        %v2243 = vunpack.c.l.b16 %v806
        %v2244 = vunpack.c.l.b16 %v809
        %v2245 = vunpack.c.l.b16 %v813
        %v2246 = vunpack.c.l.b16 %v816
        %v2247 = vunpack.c.l.b16 %v820
        %v2248 = vunpack.c.l.b16 %v823
        %v2249 = vunpack.c.l.b16 %v827
        %v2250 = vunpack.c.l.b16 %v830
        %v2251 = vunpack.c.l.b16 %v834
        %v2252 = vunpack.c.l.b16 %v837
        %v2253 = vunpack.c.l.b16 %v841
        %v2254 = vunpack.c.l.b16 %v844
        %v2255 = vunpack.c.l.b16 %v848
        %v2256 = vunpack.c.l.b16 %v851
        %v2257 = vunpack.c.l.b16 %v855
        %v2258 = vunpack.c.l.b16 %v858
        %v2259 = vpack.c.b16 %v2228, %v2227
        %v2260 = vpack.c.b16 %v2230, %v2229
        %v2261 = vpack.c.b16 %v2232, %v2231
        %v2262 = vpack.c.b16 %v2234, %v2233
        %v2263 = vpack.c.b16 %v2236, %v2235
        %v2264 = vpack.c.b16 %v2238, %v2237
        %v2265 = vpack.c.b16 %v2240, %v2239
        %v2266 = vpack.c.b16 %v2242, %v2241
        %v2267 = vpack.c.b16 %v2244, %v2243
        %v2268 = vpack.c.b16 %v2246, %v2245
        %v2269 = vpack.c.b16 %v2248, %v2247
        %v2270 = vpack.c.b16 %v2250, %v2249
        %v2271 = vpack.c.b16 %v2252, %v2251
        %v2272 = vpack.c.b16 %v2254, %v2253
        %v2273 = vpack.c.b16 %v2256, %v2255
        %v2274 = vpack.c.b16 %v2258, %v2257
        %2275 = vrot.lane.b32.xlu0 %v2259, 8
        %v2276 = vpop.permute.xlu0 %2275
        %2277 = vrot.lane.b32.xlu0 %v2260, 8
        %v2278 = vpop.permute.xlu0 %2277
        %2279 = vrot.lane.b32.xlu0 %v2261, 8
        %v2280 = vpop.permute.xlu0 %2279
        %2281 = vrot.lane.b32.xlu0 %v2262, 8
        %v2282 = vpop.permute.xlu0 %2281
        %2283 = vrot.lane.b32.xlu0 %v2263, 8
        %v2284 = vpop.permute.xlu0 %2283
        %2285 = vrot.lane.b32.xlu0 %v2264, 8
        %v2286 = vpop.permute.xlu0 %2285
        %2287 = vrot.lane.b32.xlu0 %v2265, 8
        %v2288 = vpop.permute.xlu0 %2287
        %2289 = vrot.lane.b32.xlu0 %v2266, 8
        %v2290 = vpop.permute.xlu0 %2289
        %2291 = vrot.lane.b32.xlu0 %v2267, 8
        %v2292 = vpop.permute.xlu0 %2291
        %2293 = vrot.lane.b32.xlu0 %v2268, 8
        %v2294 = vpop.permute.xlu0 %2293
        %2295 = vrot.lane.b32.xlu0 %v2269, 8
        %v2296 = vpop.permute.xlu0 %2295
        %2297 = vrot.lane.b32.xlu0 %v2270, 8
        %v2298 = vpop.permute.xlu0 %2297
        %2299 = vrot.lane.b32.xlu0 %v2271, 8
        %v2300 = vpop.permute.xlu0 %2299
        %2301 = vrot.lane.b32.xlu0 %v2272, 8
        %v2302 = vpop.permute.xlu0 %2301
        %2303 = vrot.lane.b32.xlu0 %v2273, 8
        %v2304 = vpop.permute.xlu0 %2303
        %2305 = vrot.lane.b32.xlu0 %v2274, 8
        %v2306 = vpop.permute.xlu0 %2305
        %v2323 = vunpack.c.l.b16 %v863
        %v2324 = vunpack.c.l.b16 %v864
        %v2325 = vunpack.c.l.b16 %v865
        %v2326 = vunpack.c.l.b16 %v866
        %v2327 = vunpack.c.l.b16 %v867
        %v2328 = vunpack.c.l.b16 %v868
        %v2329 = vunpack.c.l.b16 %v869
        %v2330 = vunpack.c.l.b16 %v870
        %v2331 = vunpack.c.l.b16 %v871
        %v2332 = vunpack.c.l.b16 %v872
        %v2333 = vunpack.c.l.b16 %v873
        %v2334 = vunpack.c.l.b16 %v874
        %v2335 = vunpack.c.l.b16 %v875
        %v2336 = vunpack.c.l.b16 %v876
        %v2337 = vunpack.c.l.b16 %v877
        %v2338 = vunpack.c.l.b16 %v878
        %v2339 = vunpack.c.l.b16 %v879
        %v2340 = vunpack.c.l.b16 %v880
        %v2341 = vunpack.c.l.b16 %v881
        %v2342 = vunpack.c.l.b16 %v882
        %v2343 = vunpack.c.l.b16 %v883
        %v2344 = vunpack.c.l.b16 %v884
        %v2345 = vunpack.c.l.b16 %v885
        %v2346 = vunpack.c.l.b16 %v886
        %v2347 = vunpack.c.l.b16 %v887
        %v2348 = vunpack.c.l.b16 %v888
        %v2349 = vunpack.c.l.b16 %v889
        %v2350 = vunpack.c.l.b16 %v890
        %v2351 = vunpack.c.l.b16 %v891
        %v2352 = vunpack.c.l.b16 %v892
        %v2353 = vunpack.c.l.b16 %v893
        %v2354 = vunpack.c.l.b16 %v894
        %v2355 = vpack.c.b16 %v2324, %v2323
        %v2356 = vpack.c.b16 %v2326, %v2325
        %v2357 = vpack.c.b16 %v2328, %v2327
        %v2358 = vpack.c.b16 %v2330, %v2329
        %v2359 = vpack.c.b16 %v2332, %v2331
        %v2360 = vpack.c.b16 %v2334, %v2333
        %v2361 = vpack.c.b16 %v2336, %v2335
        %v2362 = vpack.c.b16 %v2338, %v2337
        %v2363 = vpack.c.b16 %v2340, %v2339
        %v2364 = vpack.c.b16 %v2342, %v2341
        %v2365 = vpack.c.b16 %v2344, %v2343
        %v2366 = vpack.c.b16 %v2346, %v2345
        %v2367 = vpack.c.b16 %v2348, %v2347
        %v2368 = vpack.c.b16 %v2350, %v2349
        %v2369 = vpack.c.b16 %v2352, %v2351
        %v2370 = vpack.c.b16 %v2354, %v2353
        %2371 = vrot.lane.b32.xlu0 %v2355, 12
        %v2372 = vpop.permute.xlu0 %2371
        %2373 = vrot.lane.b32.xlu0 %v2356, 12
        %v2374 = vpop.permute.xlu0 %2373
        %2375 = vrot.lane.b32.xlu0 %v2357, 12
        %v2376 = vpop.permute.xlu0 %2375
        %2377 = vrot.lane.b32.xlu0 %v2358, 12
        %v2378 = vpop.permute.xlu0 %2377
        %2379 = vrot.lane.b32.xlu0 %v2359, 12
        %v2380 = vpop.permute.xlu0 %2379
        %2381 = vrot.lane.b32.xlu0 %v2360, 12
        %v2382 = vpop.permute.xlu0 %2381
        %2383 = vrot.lane.b32.xlu0 %v2361, 12
        %v2384 = vpop.permute.xlu0 %2383
        %2385 = vrot.lane.b32.xlu0 %v2362, 12
        %v2386 = vpop.permute.xlu0 %2385
        %2387 = vrot.lane.b32.xlu0 %v2363, 12
        %v2388 = vpop.permute.xlu0 %2387
        %2389 = vrot.lane.b32.xlu0 %v2364, 12
        %v2390 = vpop.permute.xlu0 %2389
        %2391 = vrot.lane.b32.xlu0 %v2365, 12
        %v2392 = vpop.permute.xlu0 %2391
        %2393 = vrot.lane.b32.xlu0 %v2366, 12
        %v2394 = vpop.permute.xlu0 %2393
        %2395 = vrot.lane.b32.xlu0 %v2367, 12
        %v2396 = vpop.permute.xlu0 %2395
        %2397 = vrot.lane.b32.xlu0 %v2368, 12
        %v2398 = vpop.permute.xlu0 %2397
        %2399 = vrot.lane.b32.xlu0 %v2369, 12
        %v2400 = vpop.permute.xlu0 %2399
        %2401 = vrot.lane.b32.xlu0 %v2370, 12
        %v2402 = vpop.permute.xlu0 %2401
        %v2403 = vunpack.c.l.b16 %v924
        %v2404 = vunpack.c.l.b16 %v934
        %v2405 = vunpack.c.l.b16 %v948
        %v2406 = vunpack.c.l.b16 %v958
        %v2407 = vunpack.c.l.b16 %v972
        %v2408 = vunpack.c.l.b16 %v982
        %v2409 = vunpack.c.l.b16 %v996
        %v2410 = vunpack.c.l.b16 %v1006
        %v2411 = vunpack.c.l.b16 %v1020
        %v2412 = vunpack.c.l.b16 %v1030
        %v2413 = vunpack.c.l.b16 %v1044
        %v2414 = vunpack.c.l.b16 %v1054
        %v2415 = vunpack.c.l.b16 %v1068
        %v2416 = vunpack.c.l.b16 %v1078
        %v2417 = vunpack.c.l.b16 %v1092
        %v2418 = vunpack.c.l.b16 %v1102
        %v2419 = vunpack.c.l.b16 %v1116
        %v2420 = vunpack.c.l.b16 %v1126
        %v2421 = vunpack.c.l.b16 %v1140
        %v2422 = vunpack.c.l.b16 %v1150
        %v2423 = vunpack.c.l.b16 %v1164
        %v2424 = vunpack.c.l.b16 %v1174
        %v2425 = vunpack.c.l.b16 %v1188
        %v2426 = vunpack.c.l.b16 %v1198
        %v2427 = vunpack.c.l.b16 %v1212
        %v2428 = vunpack.c.l.b16 %v1222
        %v2429 = vunpack.c.l.b16 %v1236
        %v2430 = vunpack.c.l.b16 %v1246
        %v2431 = vunpack.c.l.b16 %v1260
        %v2432 = vunpack.c.l.b16 %v1270
        %v2433 = vunpack.c.l.b16 %v1284
        %v2434 = vunpack.c.l.b16 %v1294
        %v2435 = vpack.c.b16 %v2404, %v2403
        %v2436 = vpack.c.b16 %v2406, %v2405
        %v2437 = vpack.c.b16 %v2408, %v2407
        %v2438 = vpack.c.b16 %v2410, %v2409
        %v2439 = vpack.c.b16 %v2412, %v2411
        %v2440 = vpack.c.b16 %v2414, %v2413
        %v2441 = vpack.c.b16 %v2416, %v2415
        %v2442 = vpack.c.b16 %v2418, %v2417
        %v2443 = vpack.c.b16 %v2420, %v2419
        %v2444 = vpack.c.b16 %v2422, %v2421
        %v2445 = vpack.c.b16 %v2424, %v2423
        %v2446 = vpack.c.b16 %v2426, %v2425
        %v2447 = vpack.c.b16 %v2428, %v2427
        %v2448 = vpack.c.b16 %v2430, %v2429
        %v2449 = vpack.c.b16 %v2432, %v2431
        %v2450 = vpack.c.b16 %v2434, %v2433
        %2451 = vrot.lane.b32.xlu0 %v2435, 16
        %v2452 = vpop.permute.xlu0 %2451
        %2453 = vrot.lane.b32.xlu0 %v2436, 16
        %v2454 = vpop.permute.xlu0 %2453
        %2455 = vrot.lane.b32.xlu0 %v2437, 16
        %v2456 = vpop.permute.xlu0 %2455
        %2457 = vrot.lane.b32.xlu0 %v2438, 16
        %v2458 = vpop.permute.xlu0 %2457
        %2459 = vrot.lane.b32.xlu0 %v2439, 16
        %v2460 = vpop.permute.xlu0 %2459
        %2461 = vrot.lane.b32.xlu0 %v2440, 16
        %v2462 = vpop.permute.xlu0 %2461
        %2463 = vrot.lane.b32.xlu0 %v2441, 16
        %v2464 = vpop.permute.xlu0 %2463
        %2465 = vrot.lane.b32.xlu0 %v2442, 16
        %v2466 = vpop.permute.xlu0 %2465
        %2467 = vrot.lane.b32.xlu0 %v2443, 16
        %v2468 = vpop.permute.xlu0 %2467
        %2469 = vrot.lane.b32.xlu0 %v2444, 16
        %v2470 = vpop.permute.xlu0 %2469
        %2471 = vrot.lane.b32.xlu0 %v2445, 16
        %v2472 = vpop.permute.xlu0 %2471
        %2473 = vrot.lane.b32.xlu0 %v2446, 16
        %v2474 = vpop.permute.xlu0 %2473
        %2475 = vrot.lane.b32.xlu0 %v2447, 16
        %v2476 = vpop.permute.xlu0 %2475
        %2477 = vrot.lane.b32.xlu0 %v2448, 16
        %v2478 = vpop.permute.xlu0 %2477
        %2479 = vrot.lane.b32.xlu0 %v2449, 16
        %v2480 = vpop.permute.xlu0 %2479
        %2481 = vrot.lane.b32.xlu0 %v2450, 16
        %v2482 = vpop.permute.xlu0 %2481
        %v2483 = vunpack.c.l.b16 %v1362
        %v2484 = vunpack.c.l.b16 %v1365
        %v2485 = vunpack.c.l.b16 %v1369
        %v2486 = vunpack.c.l.b16 %v1372
        %v2487 = vunpack.c.l.b16 %v1376
        %v2488 = vunpack.c.l.b16 %v1379
        %v2489 = vunpack.c.l.b16 %v1383
        %v2490 = vunpack.c.l.b16 %v1386
        %v2491 = vunpack.c.l.b16 %v1390
        %v2492 = vunpack.c.l.b16 %v1393
        %v2493 = vunpack.c.l.b16 %v1397
        %v2494 = vunpack.c.l.b16 %v1400
        %v2495 = vunpack.c.l.b16 %v1404
        %v2496 = vunpack.c.l.b16 %v1407
        %v2497 = vunpack.c.l.b16 %v1411
        %v2498 = vunpack.c.l.b16 %v1414
        %v2499 = vunpack.c.l.b16 %v1418
        %v2500 = vunpack.c.l.b16 %v1421
        %v2501 = vunpack.c.l.b16 %v1425
        %v2502 = vunpack.c.l.b16 %v1428
        %v2503 = vunpack.c.l.b16 %v1432
        %v2504 = vunpack.c.l.b16 %v1435
        %v2505 = vunpack.c.l.b16 %v1439
        %v2506 = vunpack.c.l.b16 %v1442
        %v2507 = vunpack.c.l.b16 %v1446
        %v2508 = vunpack.c.l.b16 %v1449
        %v2509 = vunpack.c.l.b16 %v1453
        %v2510 = vunpack.c.l.b16 %v1456
        %v2511 = vunpack.c.l.b16 %v1460
        %v2512 = vunpack.c.l.b16 %v1463
        %v2513 = vunpack.c.l.b16 %v1467
        %v2514 = vunpack.c.l.b16 %v1470
        %v2515 = vpack.c.b16 %v2484, %v2483
        %v2516 = vpack.c.b16 %v2486, %v2485
        %v2517 = vpack.c.b16 %v2488, %v2487
        %v2518 = vpack.c.b16 %v2490, %v2489
        %v2519 = vpack.c.b16 %v2492, %v2491
        %v2520 = vpack.c.b16 %v2494, %v2493
        %v2521 = vpack.c.b16 %v2496, %v2495
        %v2522 = vpack.c.b16 %v2498, %v2497
        %v2523 = vpack.c.b16 %v2500, %v2499
        %v2524 = vpack.c.b16 %v2502, %v2501
        %v2525 = vpack.c.b16 %v2504, %v2503
        %v2526 = vpack.c.b16 %v2506, %v2505
        %v2527 = vpack.c.b16 %v2508, %v2507
        %v2528 = vpack.c.b16 %v2510, %v2509
        %v2529 = vpack.c.b16 %v2512, %v2511
        %v2530 = vpack.c.b16 %v2514, %v2513
        %2531 = vrot.lane.b32.xlu0 %v2515, 20
        %v2532 = vpop.permute.xlu0 %2531
        %2533 = vrot.lane.b32.xlu0 %v2516, 20
        %v2534 = vpop.permute.xlu0 %2533
        %2535 = vrot.lane.b32.xlu0 %v2517, 20
        %v2536 = vpop.permute.xlu0 %2535
        %2537 = vrot.lane.b32.xlu0 %v2518, 20
        %v2538 = vpop.permute.xlu0 %2537
        %2539 = vrot.lane.b32.xlu0 %v2519, 20
        %v2540 = vpop.permute.xlu0 %2539
        %2541 = vrot.lane.b32.xlu0 %v2520, 20
        %v2542 = vpop.permute.xlu0 %2541
        %2543 = vrot.lane.b32.xlu0 %v2521, 20
        %v2544 = vpop.permute.xlu0 %2543
        %2545 = vrot.lane.b32.xlu0 %v2522, 20
        %v2546 = vpop.permute.xlu0 %2545
        %2547 = vrot.lane.b32.xlu0 %v2523, 20
        %v2548 = vpop.permute.xlu0 %2547
        %2549 = vrot.lane.b32.xlu0 %v2524, 20
        %v2550 = vpop.permute.xlu0 %2549
        %2551 = vrot.lane.b32.xlu0 %v2525, 20
        %v2552 = vpop.permute.xlu0 %2551
        %2553 = vrot.lane.b32.xlu0 %v2526, 20
        %v2554 = vpop.permute.xlu0 %2553
        %2555 = vrot.lane.b32.xlu0 %v2527, 20
        %v2556 = vpop.permute.xlu0 %2555
        %2557 = vrot.lane.b32.xlu0 %v2528, 20
        %v2558 = vpop.permute.xlu0 %2557
        %2559 = vrot.lane.b32.xlu0 %v2529, 20
        %v2560 = vpop.permute.xlu0 %2559
        %2561 = vrot.lane.b32.xlu0 %v2530, 20
        %v2562 = vpop.permute.xlu0 %2561
        %v2579 = vunpack.c.l.b16 %v1475
        %v2580 = vunpack.c.l.b16 %v1476
        %v2581 = vunpack.c.l.b16 %v1477
        %v2582 = vunpack.c.l.b16 %v1478
        %v2583 = vunpack.c.l.b16 %v1479
        %v2584 = vunpack.c.l.b16 %v1480
        %v2585 = vunpack.c.l.b16 %v1481
        %v2586 = vunpack.c.l.b16 %v1482
        %v2587 = vunpack.c.l.b16 %v1483
        %v2588 = vunpack.c.l.b16 %v1484
        %v2589 = vunpack.c.l.b16 %v1485
        %v2590 = vunpack.c.l.b16 %v1486
        %v2591 = vunpack.c.l.b16 %v1487
        %v2592 = vunpack.c.l.b16 %v1488
        %v2593 = vunpack.c.l.b16 %v1489
        %v2594 = vunpack.c.l.b16 %v1490
        %v2595 = vunpack.c.l.b16 %v1491
        %v2596 = vunpack.c.l.b16 %v1492
        %v2597 = vunpack.c.l.b16 %v1493
        %v2598 = vunpack.c.l.b16 %v1494
        %v2599 = vunpack.c.l.b16 %v1495
        %v2600 = vunpack.c.l.b16 %v1496
        %v2601 = vunpack.c.l.b16 %v1497
        %v2602 = vunpack.c.l.b16 %v1498
        %v2603 = vunpack.c.l.b16 %v1499
        %v2604 = vunpack.c.l.b16 %v1500
        %v2605 = vunpack.c.l.b16 %v1501
        %v2606 = vunpack.c.l.b16 %v1502
        %v2607 = vunpack.c.l.b16 %v1503
        %v2608 = vunpack.c.l.b16 %v1504
        %v2609 = vunpack.c.l.b16 %v1505
        %v2610 = vunpack.c.l.b16 %v1506
        %v2611 = vpack.c.b16 %v2580, %v2579
        %v2612 = vpack.c.b16 %v2582, %v2581
        %v2613 = vpack.c.b16 %v2584, %v2583
        %v2614 = vpack.c.b16 %v2586, %v2585
        %v2615 = vpack.c.b16 %v2588, %v2587
        %v2616 = vpack.c.b16 %v2590, %v2589
        %v2617 = vpack.c.b16 %v2592, %v2591
        %v2618 = vpack.c.b16 %v2594, %v2593
        %v2619 = vpack.c.b16 %v2596, %v2595
        %v2620 = vpack.c.b16 %v2598, %v2597
        %v2621 = vpack.c.b16 %v2600, %v2599
        %v2622 = vpack.c.b16 %v2602, %v2601
        %v2623 = vpack.c.b16 %v2604, %v2603
        %v2624 = vpack.c.b16 %v2606, %v2605
        %v2625 = vpack.c.b16 %v2608, %v2607
        %v2626 = vpack.c.b16 %v2610, %v2609
        %2627 = vrot.lane.b32.xlu0 %v2611, 24
        %v2628 = vpop.permute.xlu0 %2627
        %2629 = vrot.lane.b32.xlu0 %v2612, 24
        %v2630 = vpop.permute.xlu0 %2629
        %2631 = vrot.lane.b32.xlu0 %v2613, 24
        %v2632 = vpop.permute.xlu0 %2631
        %2633 = vrot.lane.b32.xlu0 %v2614, 24
        %v2634 = vpop.permute.xlu0 %2633
        %2635 = vrot.lane.b32.xlu0 %v2615, 24
        %v2636 = vpop.permute.xlu0 %2635
        %2637 = vrot.lane.b32.xlu0 %v2616, 24
        %v2638 = vpop.permute.xlu0 %2637
        %2639 = vrot.lane.b32.xlu0 %v2617, 24
        %v2640 = vpop.permute.xlu0 %2639
        %2641 = vrot.lane.b32.xlu0 %v2618, 24
        %v2642 = vpop.permute.xlu0 %2641
        %2643 = vrot.lane.b32.xlu0 %v2619, 24
        %v2644 = vpop.permute.xlu0 %2643
        %2645 = vrot.lane.b32.xlu0 %v2620, 24
        %v2646 = vpop.permute.xlu0 %2645
        %2647 = vrot.lane.b32.xlu0 %v2621, 24
        %v2648 = vpop.permute.xlu0 %2647
        %2649 = vrot.lane.b32.xlu0 %v2622, 24
        %v2650 = vpop.permute.xlu0 %2649
        %2651 = vrot.lane.b32.xlu0 %v2623, 24
        %v2652 = vpop.permute.xlu0 %2651
        %2653 = vrot.lane.b32.xlu0 %v2624, 24
        %v2654 = vpop.permute.xlu0 %2653
        %2655 = vrot.lane.b32.xlu0 %v2625, 24
        %v2656 = vpop.permute.xlu0 %2655
        %2657 = vrot.lane.b32.xlu0 %v2626, 24
        %v2658 = vpop.permute.xlu0 %2657
        %v2659 = vunpack.c.l.b16 %v1536
        %v2660 = vunpack.c.l.b16 %v1546
        %v2661 = vunpack.c.l.b16 %v1560
        %v2662 = vunpack.c.l.b16 %v1570
        %v2663 = vunpack.c.l.b16 %v1584
        %v2664 = vunpack.c.l.b16 %v1594
        %v2665 = vunpack.c.l.b16 %v1608
        %v2666 = vunpack.c.l.b16 %v1618
        %v2667 = vunpack.c.l.b16 %v1632
        %v2668 = vunpack.c.l.b16 %v1642
        %v2669 = vunpack.c.l.b16 %v1656
        %v2670 = vunpack.c.l.b16 %v1666
        %v2671 = vunpack.c.l.b16 %v1680
        %v2672 = vunpack.c.l.b16 %v1690
        %v2673 = vunpack.c.l.b16 %v1704
        %v2674 = vunpack.c.l.b16 %v1714
        %v2675 = vunpack.c.l.b16 %v1728
        %v2676 = vunpack.c.l.b16 %v1738
        %v2677 = vunpack.c.l.b16 %v1752
        %v2678 = vunpack.c.l.b16 %v1762
        %v2679 = vunpack.c.l.b16 %v1776
        %v2680 = vunpack.c.l.b16 %v1786
        %v2681 = vunpack.c.l.b16 %v1800
        %v2682 = vunpack.c.l.b16 %v1810
        %v2683 = vunpack.c.l.b16 %v1824
        %v2684 = vunpack.c.l.b16 %v1834
        %v2685 = vunpack.c.l.b16 %v1848
        %v2686 = vunpack.c.l.b16 %v1858
        %v2687 = vunpack.c.l.b16 %v1872
        %v2688 = vunpack.c.l.b16 %v1882
        %v2689 = vunpack.c.l.b16 %v1896
        %v2690 = vunpack.c.l.b16 %v1906
        %v2691 = vpack.c.b16 %v2660, %v2659
        %v2692 = vpack.c.b16 %v2662, %v2661
        %v2693 = vpack.c.b16 %v2664, %v2663
        %v2694 = vpack.c.b16 %v2666, %v2665
        %v2695 = vpack.c.b16 %v2668, %v2667
        %v2696 = vpack.c.b16 %v2670, %v2669
        %v2697 = vpack.c.b16 %v2672, %v2671
        %v2698 = vpack.c.b16 %v2674, %v2673
        %v2699 = vpack.c.b16 %v2676, %v2675
        %v2700 = vpack.c.b16 %v2678, %v2677
        %v2701 = vpack.c.b16 %v2680, %v2679
        %v2702 = vpack.c.b16 %v2682, %v2681
        %v2703 = vpack.c.b16 %v2684, %v2683
        %v2704 = vpack.c.b16 %v2686, %v2685
        %v2705 = vpack.c.b16 %v2688, %v2687
        %v2706 = vpack.c.b16 %v2690, %v2689
        %2707 = vrot.lane.b32.xlu0 %v2691, 28
        %v2708 = vpop.permute.xlu0 %2707
        %2709 = vrot.lane.b32.xlu0 %v2692, 28
        %v2710 = vpop.permute.xlu0 %2709
        %2711 = vrot.lane.b32.xlu0 %v2693, 28
        %v2712 = vpop.permute.xlu0 %2711
        %2713 = vrot.lane.b32.xlu0 %v2694, 28
        %v2714 = vpop.permute.xlu0 %2713
        %2715 = vrot.lane.b32.xlu0 %v2695, 28
        %v2716 = vpop.permute.xlu0 %2715
        %2717 = vrot.lane.b32.xlu0 %v2696, 28
        %v2718 = vpop.permute.xlu0 %2717
        %2719 = vrot.lane.b32.xlu0 %v2697, 28
        %v2720 = vpop.permute.xlu0 %2719
        %2721 = vrot.lane.b32.xlu0 %v2698, 28
        %v2722 = vpop.permute.xlu0 %2721
        %2723 = vrot.lane.b32.xlu0 %v2699, 28
        %v2724 = vpop.permute.xlu0 %2723
        %2725 = vrot.lane.b32.xlu0 %v2700, 28
        %v2726 = vpop.permute.xlu0 %2725
        %2727 = vrot.lane.b32.xlu0 %v2701, 28
        %v2728 = vpop.permute.xlu0 %2727
        %2729 = vrot.lane.b32.xlu0 %v2702, 28
        %v2730 = vpop.permute.xlu0 %2729
        %2731 = vrot.lane.b32.xlu0 %v2703, 28
        %v2732 = vpop.permute.xlu0 %2731
        %2733 = vrot.lane.b32.xlu0 %v2704, 28
        %v2734 = vpop.permute.xlu0 %2733
        %2735 = vrot.lane.b32.xlu0 %v2705, 28
        %v2736 = vpop.permute.xlu0 %2735
        %2737 = vrot.lane.b32.xlu0 %v2706, 28
        %v2738 = vpop.permute.xlu0 %2737
        %v2739 = vunpack.c.l.b16 %v1974
        %v2740 = vunpack.c.l.b16 %v1977
        %v2741 = vunpack.c.l.b16 %v1981
        %v2742 = vunpack.c.l.b16 %v1984
        %v2743 = vunpack.c.l.b16 %v1988
        %v2744 = vunpack.c.l.b16 %v1991
        %v2745 = vunpack.c.l.b16 %v1995
        %v2746 = vunpack.c.l.b16 %v1998
        %v2747 = vunpack.c.l.b16 %v2002
        %v2748 = vunpack.c.l.b16 %v2005
        %v2749 = vunpack.c.l.b16 %v2009
        %v2750 = vunpack.c.l.b16 %v2012
        %v2751 = vunpack.c.l.b16 %v2016
        %v2752 = vunpack.c.l.b16 %v2019
        %v2753 = vunpack.c.l.b16 %v2023
        %v2754 = vunpack.c.l.b16 %v2026
        %v2755 = vunpack.c.l.b16 %v2030
        %v2756 = vunpack.c.l.b16 %v2033
        %v2757 = vunpack.c.l.b16 %v2037
        %v2758 = vunpack.c.l.b16 %v2040
        %v2759 = vunpack.c.l.b16 %v2044
        %v2760 = vunpack.c.l.b16 %v2047
        %v2761 = vunpack.c.l.b16 %v2051
        %v2762 = vunpack.c.l.b16 %v2054
        %v2763 = vunpack.c.l.b16 %v2058
        %v2764 = vunpack.c.l.b16 %v2061
        %v2765 = vunpack.c.l.b16 %v2065
        %v2766 = vunpack.c.l.b16 %v2068
        %v2767 = vunpack.c.l.b16 %v2072
        %v2768 = vunpack.c.l.b16 %v2075
        %v2769 = vunpack.c.l.b16 %v2079
        %v2770 = vunpack.c.l.b16 %v2082
        %v2771 = vpack.c.b16 %v2740, %v2739
        %v2772 = vpack.c.b16 %v2742, %v2741
        %v2773 = vpack.c.b16 %v2744, %v2743
        %v2774 = vpack.c.b16 %v2746, %v2745
        %v2775 = vpack.c.b16 %v2748, %v2747
        %v2776 = vpack.c.b16 %v2750, %v2749
        %v2777 = vpack.c.b16 %v2752, %v2751
        %v2778 = vpack.c.b16 %v2754, %v2753
        %v2779 = vpack.c.b16 %v2756, %v2755
        %v2780 = vpack.c.b16 %v2758, %v2757
        %v2781 = vpack.c.b16 %v2760, %v2759
        %v2782 = vpack.c.b16 %v2762, %v2761
        %v2783 = vpack.c.b16 %v2764, %v2763
        %v2784 = vpack.c.b16 %v2766, %v2765
        %v2785 = vpack.c.b16 %v2768, %v2767
        %v2786 = vpack.c.b16 %v2770, %v2769
        %2787 = vrot.lane.b32.xlu0 %v2771, 32
        %v2788 = vpop.permute.xlu0 %2787
        %2789 = vrot.lane.b32.xlu0 %v2772, 32
        %v2790 = vpop.permute.xlu0 %2789
        %2791 = vrot.lane.b32.xlu0 %v2773, 32
        %v2792 = vpop.permute.xlu0 %2791
        %2793 = vrot.lane.b32.xlu0 %v2774, 32
        %v2794 = vpop.permute.xlu0 %2793
        %2795 = vrot.lane.b32.xlu0 %v2775, 32
        %v2796 = vpop.permute.xlu0 %2795
        %2797 = vrot.lane.b32.xlu0 %v2776, 32
        %v2798 = vpop.permute.xlu0 %2797
        %2799 = vrot.lane.b32.xlu0 %v2777, 32
        %v2800 = vpop.permute.xlu0 %2799
        %2801 = vrot.lane.b32.xlu0 %v2778, 32
        %v2802 = vpop.permute.xlu0 %2801
        %2803 = vrot.lane.b32.xlu0 %v2779, 32
        %v2804 = vpop.permute.xlu0 %2803
        %2805 = vrot.lane.b32.xlu0 %v2780, 32
        %v2806 = vpop.permute.xlu0 %2805
        %2807 = vrot.lane.b32.xlu0 %v2781, 32
        %v2808 = vpop.permute.xlu0 %2807
        %2809 = vrot.lane.b32.xlu0 %v2782, 32
        %v2810 = vpop.permute.xlu0 %2809
        %2811 = vrot.lane.b32.xlu0 %v2783, 32
        %v2812 = vpop.permute.xlu0 %2811
        %2813 = vrot.lane.b32.xlu0 %v2784, 32
        %v2814 = vpop.permute.xlu0 %2813
        %2815 = vrot.lane.b32.xlu0 %v2785, 32
        %v2816 = vpop.permute.xlu0 %2815
        %2817 = vrot.lane.b32.xlu0 %v2786, 32
        %v2818 = vpop.permute.xlu0 %2817
        %vm2819 = vcmask 31744
        %v2822 = vsel %vm2819, %v2131, %v2196
        %v2825 = vsel %vm2819, %v2132, %v2198
        %v2828 = vsel %vm2819, %v2133, %v2200
        %v2831 = vsel %vm2819, %v2134, %v2202
        %v2834 = vsel %vm2819, %v2135, %v2204
        %v2837 = vsel %vm2819, %v2136, %v2206
        %v2840 = vsel %vm2819, %v2137, %v2208
        %v2843 = vsel %vm2819, %v2138, %v2210
        %v2846 = vsel %vm2819, %v2139, %v2212
        %v2849 = vsel %vm2819, %v2140, %v2214
        %v2852 = vsel %vm2819, %v2141, %v2216
        %v2855 = vsel %vm2819, %v2142, %v2218
        %v2858 = vsel %vm2819, %v2143, %v2220
        %v2861 = vsel %vm2819, %v2144, %v2222
        %v2864 = vsel %vm2819, %v2145, %v2224
        %v2867 = vsel %vm2819, %v2146, %v2226
        %vm2868 = vcmask 64512
        %v2870 = vsel %vm2868, %v2822, %v2276
        %v2872 = vsel %vm2868, %v2825, %v2278
        %v2874 = vsel %vm2868, %v2828, %v2280
        %v2876 = vsel %vm2868, %v2831, %v2282
        %v2878 = vsel %vm2868, %v2834, %v2284
        %v2880 = vsel %vm2868, %v2837, %v2286
        %v2882 = vsel %vm2868, %v2840, %v2288
        %v2884 = vsel %vm2868, %v2843, %v2290
        %v2886 = vsel %vm2868, %v2846, %v2292
        %v2888 = vsel %vm2868, %v2849, %v2294
        %v2890 = vsel %vm2868, %v2852, %v2296
        %v2892 = vsel %vm2868, %v2855, %v2298
        %v2894 = vsel %vm2868, %v2858, %v2300
        %v2896 = vsel %vm2868, %v2861, %v2302
        %v2898 = vsel %vm2868, %v2864, %v2304
        %v2900 = vsel %vm2868, %v2867, %v2306
        %vm2901 = vcmask 97280
        %v2903 = vsel %vm2901, %v2870, %v2372
        %v2905 = vsel %vm2901, %v2872, %v2374
        %v2907 = vsel %vm2901, %v2874, %v2376
        %v2909 = vsel %vm2901, %v2876, %v2378
        %v2911 = vsel %vm2901, %v2878, %v2380
        %v2913 = vsel %vm2901, %v2880, %v2382
        %v2915 = vsel %vm2901, %v2882, %v2384
        %v2917 = vsel %vm2901, %v2884, %v2386
        %v2919 = vsel %vm2901, %v2886, %v2388
        %v2921 = vsel %vm2901, %v2888, %v2390
        %v2923 = vsel %vm2901, %v2890, %v2392
        %v2925 = vsel %vm2901, %v2892, %v2394
        %v2927 = vsel %vm2901, %v2894, %v2396
        %v2929 = vsel %vm2901, %v2896, %v2398
        %v2931 = vsel %vm2901, %v2898, %v2400
        %v2933 = vsel %vm2901, %v2900, %v2402
        %vm2934 = vcmask 130048
        %v2936 = vsel %vm2934, %v2903, %v2452
        %v2938 = vsel %vm2934, %v2905, %v2454
        %v2940 = vsel %vm2934, %v2907, %v2456
        %v2942 = vsel %vm2934, %v2909, %v2458
        %v2944 = vsel %vm2934, %v2911, %v2460
        %v2946 = vsel %vm2934, %v2913, %v2462
        %v2948 = vsel %vm2934, %v2915, %v2464
        %v2950 = vsel %vm2934, %v2917, %v2466
        %v2952 = vsel %vm2934, %v2919, %v2468
        %v2954 = vsel %vm2934, %v2921, %v2470
        %v2956 = vsel %vm2934, %v2923, %v2472
        %v2958 = vsel %vm2934, %v2925, %v2474
        %v2960 = vsel %vm2934, %v2927, %v2476
        %v2962 = vsel %vm2934, %v2929, %v2478
        %v2964 = vsel %vm2934, %v2931, %v2480
        %v2966 = vsel %vm2934, %v2933, %v2482
        %vm2967 = vcmask 162816
        %v2969 = vsel %vm2967, %v2936, %v2532
        %v2971 = vsel %vm2967, %v2938, %v2534
        %v2973 = vsel %vm2967, %v2940, %v2536
        %v2975 = vsel %vm2967, %v2942, %v2538
        %v2977 = vsel %vm2967, %v2944, %v2540
        %v2979 = vsel %vm2967, %v2946, %v2542
        %v2981 = vsel %vm2967, %v2948, %v2544
        %v2983 = vsel %vm2967, %v2950, %v2546
        %v2985 = vsel %vm2967, %v2952, %v2548
        %v2987 = vsel %vm2967, %v2954, %v2550
        %v2989 = vsel %vm2967, %v2956, %v2552
        %v2991 = vsel %vm2967, %v2958, %v2554
        %v2993 = vsel %vm2967, %v2960, %v2556
        %v2995 = vsel %vm2967, %v2962, %v2558
        %v2997 = vsel %vm2967, %v2964, %v2560
        %v2999 = vsel %vm2967, %v2966, %v2562
        %vm3000 = vcmask 195584
        %v3002 = vsel %vm3000, %v2969, %v2628
        %v3004 = vsel %vm3000, %v2971, %v2630
        %v3006 = vsel %vm3000, %v2973, %v2632
        %v3008 = vsel %vm3000, %v2975, %v2634
        %v3010 = vsel %vm3000, %v2977, %v2636
        %v3012 = vsel %vm3000, %v2979, %v2638
        %v3014 = vsel %vm3000, %v2981, %v2640
        %v3016 = vsel %vm3000, %v2983, %v2642
        %v3018 = vsel %vm3000, %v2985, %v2644
        %v3020 = vsel %vm3000, %v2987, %v2646
        %v3022 = vsel %vm3000, %v2989, %v2648
        %v3024 = vsel %vm3000, %v2991, %v2650
        %v3026 = vsel %vm3000, %v2993, %v2652
        %v3028 = vsel %vm3000, %v2995, %v2654
        %v3030 = vsel %vm3000, %v2997, %v2656
        %v3032 = vsel %vm3000, %v2999, %v2658
        %vm3033 = vcmask 228352
        %v3035 = vsel %vm3033, %v3002, %v2708
        %v3037 = vsel %vm3033, %v3004, %v2710
        %v3039 = vsel %vm3033, %v3006, %v2712
        %v3041 = vsel %vm3033, %v3008, %v2714
        %v3043 = vsel %vm3033, %v3010, %v2716
        %v3045 = vsel %vm3033, %v3012, %v2718
        %v3047 = vsel %vm3033, %v3014, %v2720
        %v3049 = vsel %vm3033, %v3016, %v2722
        %v3051 = vsel %vm3033, %v3018, %v2724
        %v3053 = vsel %vm3033, %v3020, %v2726
        %v3055 = vsel %vm3033, %v3022, %v2728
        %v3057 = vsel %vm3033, %v3024, %v2730
        %v3059 = vsel %vm3033, %v3026, %v2732
        %v3061 = vsel %vm3033, %v3028, %v2734
        %v3063 = vsel %vm3033, %v3030, %v2736
        %v3065 = vsel %vm3033, %v3032, %v2738
        %vm3066 = vcmask 261120
        %v3068 = vsel %vm3066, %v3035, %v2788
        %v3070 = vsel %vm3066, %v3037, %v2790
        %v3072 = vsel %vm3066, %v3039, %v2792
        %v3074 = vsel %vm3066, %v3041, %v2794
        %v3076 = vsel %vm3066, %v3043, %v2796
        %v3078 = vsel %vm3066, %v3045, %v2798
        %v3080 = vsel %vm3066, %v3047, %v2800
        %v3082 = vsel %vm3066, %v3049, %v2802
        %v3084 = vsel %vm3066, %v3051, %v2804
        %v3086 = vsel %vm3066, %v3053, %v2806
        %v3088 = vsel %vm3066, %v3055, %v2808
        %v3090 = vsel %vm3066, %v3057, %v2810
        %v3092 = vsel %vm3066, %v3059, %v2812
        %v3094 = vsel %vm3066, %v3061, %v2814
        %v3096 = vsel %vm3066, %v3063, %v2816
        %v3098 = vsel %vm3066, %v3065, %v2818
        %v3099 = vld [vmem:[%s1] sm:$0xf]
        %v3100 = vld [vmem:[%s1 + $0x4] sm:$0xf]
        %v3101 = vld [vmem:[%s1 + $0x8] sm:$0xf]
        %v3102 = vld [vmem:[%s1 + $0xc] sm:$0xf]
        %v3103 = vld [vmem:[%s1 + $0x10] sm:$0x3]
        %v3109 = vunpack.c.l.b16 %v3099
        %v3110 = vunpack.c.l.b16 %v3100
        %v3111 = vunpack.c.l.b16 %v3101
        %v3112 = vunpack.c.l.b16 %v3102
        %v3113 = vunpack.c.l.b16 %v3103
        %v3114 = vpack.c.b16 %v3110, %v3109
        %v3115 = vpack.c.b16 %v3112, %v3111
        %v3116 = vpack.c.b16 %v3113, %v3113
        %vm3119 = vcmask 293888
        %v3120 = vsel %vm3119, %v3068, 0
        %v3122 = vsel %vm3119, %v3070, 0
        %v3124 = vsel %vm3119, %v3072, 0
        %v3126 = vsel %vm3119, %v3074, 0
        %v3128 = vsel %vm3119, %v3076, 0
        %v3130 = vsel %vm3119, %v3078, 0
        %v3132 = vsel %vm3119, %v3080, 0
        %v3134 = vsel %vm3119, %v3082, 0
        %v3136 = vsel %vm3119, %v3084, 0
        %v3138 = vsel %vm3119, %v3086, 0
        %v3140 = vsel %vm3119, %v3088, 0
        %v3142 = vsel %vm3119, %v3090, 0
        %v3144 = vsel %vm3119, %v3092, 0
        %v3146 = vsel %vm3119, %v3094, 0
        %v3148 = vsel %vm3119, %v3096, 0
        %v3150 = vsel %vm3119, %v3098, 0
        %vm3152 = vcmask 1041408
        %v3154 = vsel %vm3152, %v3116, 0
        %3156 = vmatprep.subr.bf16.mxu0 0
        %3157 = vmatpush1.bf16.msra.mxu0 %v3114
        %3158 = vmatprep.subr.bf16.mxu0 0
        %3159 = vmatpush1.bf16.msra.mxu0 %v3115
        %3160 = vmatprep.subr.bf16.mxu0 0
        %3161 = vmatpush1.bf16.msra.mxu0 %v3154
        %3162 = vmatprep.subr.bf16.mxu0 0
        %3163 = vmatpush1.bf16.msra.mxu0 0
        %3164 = vmatprep.subr.bf16.mxu0 0
        %3165 = vmatpush1.bf16.msra.mxu0 0
        %3166 = vmatprep.subr.bf16.mxu0 0
        %3167 = vmatpush1.bf16.msra.mxu0 0
        %3168 = vmatprep.subr.bf16.mxu0 0
        %3169 = vmatpush1.bf16.msra.mxu0 0
        %3170 = vmatprep.subr.bf16.mxu0 0
        %3171 = vmatpush1.bf16.msra.mxu0 0
        %3172 = vmatprep.subr.bf16.mxu0 0
        %3173 = vmatpush1.bf16.msra.mxu0 0
        %3174 = vmatprep.subr.bf16.mxu0 0
        %3175 = vmatpush1.bf16.msra.mxu0 0
        %3176 = vmatprep.subr.bf16.mxu0 0
        %3177 = vmatpush1.bf16.msra.mxu0 0
        %3178 = vmatprep.subr.bf16.mxu0 0
        %3179 = vmatpush1.bf16.msra.mxu0 0
        %3180 = vmatprep.subr.bf16.mxu0 0
        %3181 = vmatpush1.bf16.msra.mxu0 0
        %3182 = vmatprep.subr.bf16.mxu0 0
        %3183 = vmatpush1.bf16.msra.mxu0 0
        %3184 = vmatprep.subr.bf16.mxu0 0
        %3185 = vmatpush1.bf16.msra.mxu0 0
        %3186 = vmatprep.subr.bf16.mxu0 0
        %3187 = vmatpush1.bf16.msra.mxu0 0
        %3188 = vmatprep.mubr.bf16.mxu0 0
        %3189 = vmatmul.mubr.bf16.gmra.mrb[0].mxu0 %v3120
        %v3190 = vpop.f32.mrb[0].mxu0
        %v3191 = vadd.f32 0.0, %v3190
        %v3192 = vpop.f32.mrb[0].mxu0
        %v3193 = vpop.f32.mrb[0].mxu0
        %v3194 = vadd.f32 0.0, %v3193
        %v3195 = vpop.f32.mrb[0].mxu0
        %3196 = vmatprep.mubr.bf16.mxu0 0
        %3197 = vmatmul.mubr.bf16.gmra.mrb[0].mxu0 %v3122
        %v3198 = vpop.f32.mrb[0].mxu0
        %v3199 = vadd.f32 0.0, %v3198
        %v3200 = vpop.f32.mrb[0].mxu0
        %v3201 = vpop.f32.mrb[0].mxu0
        %v3202 = vadd.f32 0.0, %v3201
        %v3203 = vpop.f32.mrb[0].mxu0
        %3204 = vmatprep.mubr.bf16.mxu0 0
        %3205 = vmatmul.mubr.bf16.gmra.mrb[0].mxu0 %v3124
        %v3206 = vpop.f32.mrb[0].mxu0
        %v3207 = vadd.f32 0.0, %v3206
        %v3208 = vpop.f32.mrb[0].mxu0
        %v3209 = vpop.f32.mrb[0].mxu0
        %v3210 = vadd.f32 0.0, %v3209
        %v3211 = vpop.f32.mrb[0].mxu0
        %3212 = vmatprep.mubr.bf16.mxu0 0
        %3213 = vmatmul.mubr.bf16.gmra.mrb[0].mxu0 %v3126
        %v3214 = vpop.f32.mrb[0].mxu0
        %v3215 = vadd.f32 0.0, %v3214
        %v3216 = vpop.f32.mrb[0].mxu0
        %v3217 = vpop.f32.mrb[0].mxu0
        %v3218 = vadd.f32 0.0, %v3217
        %v3219 = vpop.f32.mrb[0].mxu0
        %3220 = vmatprep.mubr.bf16.mxu0 0
        %3221 = vmatmul.mubr.bf16.gmra.mrb[0].mxu0 %v3128
        %v3222 = vpop.f32.mrb[0].mxu0
        %v3223 = vadd.f32 0.0, %v3222
        %v3224 = vpop.f32.mrb[0].mxu0
        %v3225 = vpop.f32.mrb[0].mxu0
        %v3226 = vadd.f32 0.0, %v3225
        %v3227 = vpop.f32.mrb[0].mxu0
        %3228 = vmatprep.mubr.bf16.mxu0 0
        %3229 = vmatmul.mubr.bf16.gmra.mrb[0].mxu0 %v3130
        %v3230 = vpop.f32.mrb[0].mxu0
        %v3231 = vadd.f32 0.0, %v3230
        %v3232 = vpop.f32.mrb[0].mxu0
        %v3233 = vpop.f32.mrb[0].mxu0
        %v3234 = vadd.f32 0.0, %v3233
        %v3235 = vpop.f32.mrb[0].mxu0
        %3236 = vmatprep.mubr.bf16.mxu0 0
        %3237 = vmatmul.mubr.bf16.gmra.mrb[0].mxu0 %v3132
        %v3238 = vpop.f32.mrb[0].mxu0
        %v3239 = vadd.f32 0.0, %v3238
        %v3240 = vpop.f32.mrb[0].mxu0
        %v3241 = vpop.f32.mrb[0].mxu0
        %v3242 = vadd.f32 0.0, %v3241
        %v3243 = vpop.f32.mrb[0].mxu0
        %3244 = vmatprep.mubr.bf16.mxu0 0
        %3245 = vmatmul.mubr.bf16.gmra.mrb[0].mxu0 %v3134
        %v3246 = vpop.f32.mrb[0].mxu0
        %v3247 = vadd.f32 0.0, %v3246
        %v3248 = vpop.f32.mrb[0].mxu0
        %v3249 = vpop.f32.mrb[0].mxu0
        %v3250 = vadd.f32 0.0, %v3249
        %v3251 = vpop.f32.mrb[0].mxu0
        %3252 = vmatprep.mubr.bf16.mxu0 0
        %3253 = vmatmul.mubr.bf16.gmra.mrb[0].mxu0 %v3136
        %v3254 = vpop.f32.mrb[0].mxu0
        %v3255 = vadd.f32 0.0, %v3254
        %v3256 = vpop.f32.mrb[0].mxu0
        %v3257 = vpop.f32.mrb[0].mxu0
        %v3258 = vadd.f32 0.0, %v3257
        %v3259 = vpop.f32.mrb[0].mxu0
        %3260 = vmatprep.mubr.bf16.mxu0 0
        %3261 = vmatmul.mubr.bf16.gmra.mrb[0].mxu0 %v3138
        %v3262 = vpop.f32.mrb[0].mxu0
        %v3263 = vadd.f32 0.0, %v3262
        %v3264 = vpop.f32.mrb[0].mxu0
        %v3265 = vpop.f32.mrb[0].mxu0
        %v3266 = vadd.f32 0.0, %v3265
        %v3267 = vpop.f32.mrb[0].mxu0
        %3268 = vmatprep.mubr.bf16.mxu0 0
        %3269 = vmatmul.mubr.bf16.gmra.mrb[0].mxu0 %v3140
        %v3270 = vpop.f32.mrb[0].mxu0
        %v3271 = vadd.f32 0.0, %v3270
        %v3272 = vpop.f32.mrb[0].mxu0
        %v3273 = vpop.f32.mrb[0].mxu0
        %v3274 = vadd.f32 0.0, %v3273
        %v3275 = vpop.f32.mrb[0].mxu0
        %3276 = vmatprep.mubr.bf16.mxu0 0
        %3277 = vmatmul.mubr.bf16.gmra.mrb[0].mxu0 %v3142
        %v3278 = vpop.f32.mrb[0].mxu0
        %v3279 = vadd.f32 0.0, %v3278
        %v3280 = vpop.f32.mrb[0].mxu0
        %v3281 = vpop.f32.mrb[0].mxu0
        %v3282 = vadd.f32 0.0, %v3281
        %v3283 = vpop.f32.mrb[0].mxu0
        %3284 = vmatprep.mubr.bf16.mxu0 0
        %3285 = vmatmul.mubr.bf16.gmra.mrb[0].mxu0 %v3144
        %v3286 = vpop.f32.mrb[0].mxu0
        %v3287 = vadd.f32 0.0, %v3286
        %v3288 = vpop.f32.mrb[0].mxu0
        %v3289 = vpop.f32.mrb[0].mxu0
        %v3290 = vadd.f32 0.0, %v3289
        %v3291 = vpop.f32.mrb[0].mxu0
        %3292 = vmatprep.mubr.bf16.mxu0 0
        %3293 = vmatmul.mubr.bf16.gmra.mrb[0].mxu0 %v3146
        %v3294 = vpop.f32.mrb[0].mxu0
        %v3295 = vadd.f32 0.0, %v3294
        %v3296 = vpop.f32.mrb[0].mxu0
        %v3297 = vpop.f32.mrb[0].mxu0
        %v3298 = vadd.f32 0.0, %v3297
        %v3299 = vpop.f32.mrb[0].mxu0
        %3300 = vmatprep.mubr.bf16.mxu0 0
        %3301 = vmatmul.mubr.bf16.gmra.mrb[0].mxu0 %v3148
        %v3302 = vpop.f32.mrb[0].mxu0
        %v3303 = vadd.f32 0.0, %v3302
        %v3304 = vpop.f32.mrb[0].mxu0
        %v3305 = vpop.f32.mrb[0].mxu0
        %v3306 = vadd.f32 0.0, %v3305
        %v3307 = vpop.f32.mrb[0].mxu0
        %3308 = vmatprep.mubr.bf16.mxu0 0
        %3309 = vmatmul.mubr.bf16.gmra.mrb[0].mxu0 %v3150
        %v3310 = vpop.f32.mrb[0].mxu0
        %v3311 = vadd.f32 0.0, %v3310
        %v3312 = vpop.f32.mrb[0].mxu0
        %v3313 = vpop.f32.mrb[0].mxu0
        %v3314 = vadd.f32 0.0, %v3313
        %v3315 = vpop.f32.mrb[0].mxu0
        %3316 = vdwg.mxu0
        %v3317 = vpack.c.bf16 %v3194, %v3191
        %v3318 = vpack.c.bf16 %v3202, %v3199
        %v3319 = vpack.c.bf16 %v3210, %v3207
        %v3320 = vpack.c.bf16 %v3218, %v3215
        %v3321 = vpack.c.bf16 %v3226, %v3223
        %v3322 = vpack.c.bf16 %v3234, %v3231
        %v3323 = vpack.c.bf16 %v3242, %v3239
        %v3324 = vpack.c.bf16 %v3250, %v3247
        %v3325 = vpack.c.bf16 %v3258, %v3255
        %v3326 = vpack.c.bf16 %v3266, %v3263
        %v3327 = vpack.c.bf16 %v3274, %v3271
        %v3328 = vpack.c.bf16 %v3282, %v3279
        %v3329 = vpack.c.bf16 %v3290, %v3287
        %v3330 = vpack.c.bf16 %v3298, %v3295
        %v3331 = vpack.c.bf16 %v3306, %v3303
        %v3332 = vpack.c.bf16 %v3314, %v3311
        %v3349 = vunpack.c.l.b16 %v3317
        %v3350 = vunpack.c.h.b16 %v3317
        %v3351 = vunpack.c.l.b16 %v3318
        %v3352 = vunpack.c.h.b16 %v3318
        %v3353 = vunpack.c.l.b16 %v3319
        %v3354 = vunpack.c.h.b16 %v3319
        %v3355 = vunpack.c.l.b16 %v3320
        %v3356 = vunpack.c.h.b16 %v3320
        %v3357 = vunpack.c.l.b16 %v3321
        %v3358 = vunpack.c.h.b16 %v3321
        %v3359 = vunpack.c.l.b16 %v3322
        %v3360 = vunpack.c.h.b16 %v3322
        %v3361 = vunpack.c.l.b16 %v3323
        %v3362 = vunpack.c.h.b16 %v3323
        %v3363 = vunpack.c.l.b16 %v3324
        %v3364 = vunpack.c.h.b16 %v3324
        %v3365 = vunpack.c.l.b16 %v3325
        %v3366 = vunpack.c.h.b16 %v3325
        %v3367 = vunpack.c.l.b16 %v3326
        %v3368 = vunpack.c.h.b16 %v3326
        %v3369 = vunpack.c.l.b16 %v3327
        %v3370 = vunpack.c.h.b16 %v3327
        %v3371 = vunpack.c.l.b16 %v3328
        %v3372 = vunpack.c.h.b16 %v3328
        %v3373 = vunpack.c.l.b16 %v3329
        %v3374 = vunpack.c.h.b16 %v3329
        %v3375 = vunpack.c.l.b16 %v3330
        %v3376 = vunpack.c.h.b16 %v3330
        %v3377 = vunpack.c.l.b16 %v3331
        %v3378 = vunpack.c.h.b16 %v3331
        %v3379 = vunpack.c.l.b16 %v3332
        %v3380 = vunpack.c.h.b16 %v3332
        %v3381 = vpack.c.b16 %v3349, %v3349
        %v3382 = vpack.c.b16 %v3350, %v3350
        %v3383 = vpack.c.b16 %v3351, %v3351
        %v3384 = vpack.c.b16 %v3352, %v3352
        %v3385 = vpack.c.b16 %v3353, %v3353
        %v3386 = vpack.c.b16 %v3354, %v3354
        %v3387 = vpack.c.b16 %v3355, %v3355
        %v3388 = vpack.c.b16 %v3356, %v3356
        %v3389 = vpack.c.b16 %v3357, %v3357
        %v3390 = vpack.c.b16 %v3358, %v3358
        %v3391 = vpack.c.b16 %v3359, %v3359
        %v3392 = vpack.c.b16 %v3360, %v3360
        %v3393 = vpack.c.b16 %v3361, %v3361
        %v3394 = vpack.c.b16 %v3362, %v3362
        %v3395 = vpack.c.b16 %v3363, %v3363
        %v3396 = vpack.c.b16 %v3364, %v3364
        %v3397 = vpack.c.b16 %v3365, %v3365
        %v3398 = vpack.c.b16 %v3366, %v3366
        %v3399 = vpack.c.b16 %v3367, %v3367
        %v3400 = vpack.c.b16 %v3368, %v3368
        %v3401 = vpack.c.b16 %v3369, %v3369
        %v3402 = vpack.c.b16 %v3370, %v3370
        %v3403 = vpack.c.b16 %v3371, %v3371
        %v3404 = vpack.c.b16 %v3372, %v3372
        %v3405 = vpack.c.b16 %v3373, %v3373
        %v3406 = vpack.c.b16 %v3374, %v3374
        %v3407 = vpack.c.b16 %v3375, %v3375
        %v3408 = vpack.c.b16 %v3376, %v3376
        %v3409 = vpack.c.b16 %v3377, %v3377
        %v3410 = vpack.c.b16 %v3378, %v3378
        %v3411 = vpack.c.b16 %v3379, %v3379
        %v3412 = vpack.c.b16 %v3380, %v3380
        %vm3445 = vcmask 60416
        %3446 = vst.msk [vmem:[%s238] sm:$0xf] %vm3445, %v3381
        %3447 = vst.msk [vmem:[%s238 + $0x4] sm:$0xf] %vm3445, %v3382
        %3448 = vst.msk [vmem:[%s238 + $0x8] sm:$0xf] %vm3445, %v3383
        %3449 = vst.msk [vmem:[%s238 + $0xc] sm:$0xf] %vm3445, %v3384
        %3450 = vst.msk [vmem:[%s238 + $0x10] sm:$0xf] %vm3445, %v3385
        %3451 = vst.msk [vmem:[%s238 + $0x14] sm:$0xf] %vm3445, %v3386
        %3452 = vst.msk [vmem:[%s238 + $0x18] sm:$0xf] %vm3445, %v3387
        %3453 = vst.msk [vmem:[%s238 + $0x1c] sm:$0xf] %vm3445, %v3388
        %3454 = vst.msk [vmem:[%s238 + $0x20] sm:$0xf] %vm3445, %v3389
        %3455 = vst.msk [vmem:[%s238 + $0x24] sm:$0xf] %vm3445, %v3390
        %3456 = vst.msk [vmem:[%s238 + $0x28] sm:$0xf] %vm3445, %v3391
        %3457 = vst.msk [vmem:[%s238 + $0x2c] sm:$0xf] %vm3445, %v3392
        %3458 = vst.msk [vmem:[%s238 + $0x30] sm:$0xf] %vm3445, %v3393
        %3459 = vst.msk [vmem:[%s238 + $0x34] sm:$0xf] %vm3445, %v3394
        %3460 = vst.msk [vmem:[%s238 + $0x38] sm:$0xf] %vm3445, %v3395
        %3461 = vst.msk [vmem:[%s238 + $0x3c] sm:$0xf] %vm3445, %v3396
        %3462 = vst.msk [vmem:[%s238 + $0x40] sm:$0xf] %vm3445, %v3397
        %3463 = vst.msk [vmem:[%s238 + $0x44] sm:$0xf] %vm3445, %v3398
        %3464 = vst.msk [vmem:[%s238 + $0x48] sm:$0xf] %vm3445, %v3399
        %3465 = vst.msk [vmem:[%s238 + $0x4c] sm:$0xf] %vm3445, %v3400
        %3466 = vst.msk [vmem:[%s238 + $0x50] sm:$0xf] %vm3445, %v3401
        %3467 = vst.msk [vmem:[%s238 + $0x54] sm:$0xf] %vm3445, %v3402
        %3468 = vst.msk [vmem:[%s238 + $0x58] sm:$0xf] %vm3445, %v3403
        %3469 = vst.msk [vmem:[%s238 + $0x5c] sm:$0xf] %vm3445, %v3404
        %3470 = vst.msk [vmem:[%s238 + $0x60] sm:$0xf] %vm3445, %v3405
        %3471 = vst.msk [vmem:[%s238 + $0x64] sm:$0xf] %vm3445, %v3406
        %3472 = vst.msk [vmem:[%s238 + $0x68] sm:$0xf] %vm3445, %v3407
        %3473 = vst.msk [vmem:[%s238 + $0x6c] sm:$0xf] %vm3445, %v3408
        %3474 = vst.msk [vmem:[%s238 + $0x70] sm:$0xf] %vm3445, %v3409
        %3475 = vst.msk [vmem:[%s238 + $0x74] sm:$0xf] %vm3445, %v3410
        %3476 = vst.msk [vmem:[%s238 + $0x78] sm:$0xf] %vm3445, %v3411
        %3477 = vst.msk [vmem:[%s238 + $0x7c] sm:$0xf] %vm3445, %v3412
        %p3478 = scmp.eq.s32.totalorder %s27, 0
        // Predicated region
        $region29: #{tpu_custom_call.1} parent=27 // pred_check
          %p3479 = pneg %p3478
        $region30: #{tpu_custom_call.1} parent=27 // pred_check_branch
          %3481 = sbr.rel (%p3479) target = $region32
        $region31: #{tpu_custom_call.1} parent=27 // pred_region
          %vm3482 = vcmask 57344
          %3483 = vst.msk [vmem:[%s218] sm:$0x1] %vm3482, 0.0
          %3484 = vst.msk [vmem:[%s224] sm:$0x1] %vm3482, 0.0
        $region32: #{tpu_custom_call.1} parent=27 // pred_fallthru
          _
        %v3485 = vld [vmem:[%s218] sm:$0x1]
        %v3486 = vsel %vm2868, %v3191, 0.0
        %v3487 = vsel %vm2868, %v3194, 0.0
        %v3488 = vadd.f32 %v3486, %v3487
        %v3489 = vsel %vm2868, %v3199, 0.0
        %v3490 = vadd.f32 %v3488, %v3489
        %v3491 = vsel %vm2868, %v3202, 0.0
        %v3492 = vadd.f32 %v3490, %v3491
        %v3493 = vsel %vm2868, %v3207, 0.0
        %v3494 = vadd.f32 %v3492, %v3493
        %v3495 = vsel %vm2868, %v3210, 0.0
        %v3496 = vadd.f32 %v3494, %v3495
        %v3497 = vsel %vm2868, %v3215, 0.0
        %v3498 = vadd.f32 %v3496, %v3497
        %v3499 = vsel %vm2868, %v3218, 0.0
        %v3500 = vadd.f32 %v3498, %v3499
        %v3501 = vsel %vm2868, %v3223, 0.0
        %v3502 = vadd.f32 %v3500, %v3501
        %v3503 = vsel %vm2868, %v3226, 0.0
        %v3504 = vadd.f32 %v3502, %v3503
        %v3505 = vsel %vm2868, %v3231, 0.0
        %v3506 = vadd.f32 %v3504, %v3505
        %v3507 = vsel %vm2868, %v3234, 0.0
        %v3508 = vadd.f32 %v3506, %v3507
        %v3509 = vsel %vm2868, %v3239, 0.0
        %v3510 = vadd.f32 %v3508, %v3509
        %v3511 = vsel %vm2868, %v3242, 0.0
        %v3512 = vadd.f32 %v3510, %v3511
        %v3513 = vsel %vm2868, %v3247, 0.0
        %v3514 = vadd.f32 %v3512, %v3513
        %v3515 = vsel %vm2868, %v3250, 0.0
        %v3516 = vadd.f32 %v3514, %v3515
        %v3517 = vsel %vm2868, %v3255, 0.0
        %v3518 = vadd.f32 %v3516, %v3517
        %v3519 = vsel %vm2868, %v3258, 0.0
        %v3520 = vadd.f32 %v3518, %v3519
        %v3521 = vsel %vm2868, %v3263, 0.0
        %v3522 = vadd.f32 %v3520, %v3521
        %v3523 = vsel %vm2868, %v3266, 0.0
        %v3524 = vadd.f32 %v3522, %v3523
        %v3525 = vsel %vm2868, %v3271, 0.0
        %v3526 = vadd.f32 %v3524, %v3525
        %v3527 = vsel %vm2868, %v3274, 0.0
        %v3528 = vadd.f32 %v3526, %v3527
        %v3529 = vsel %vm2868, %v3279, 0.0
        %v3530 = vadd.f32 %v3528, %v3529
        %v3531 = vsel %vm2868, %v3282, 0.0
        %v3532 = vadd.f32 %v3530, %v3531
        %v3533 = vsel %vm2868, %v3287, 0.0
        %v3534 = vadd.f32 %v3532, %v3533
        %v3535 = vsel %vm2868, %v3290, 0.0
        %v3536 = vadd.f32 %v3534, %v3535
        %v3537 = vsel %vm2868, %v3295, 0.0
        %v3538 = vadd.f32 %v3536, %v3537
        %v3539 = vsel %vm2868, %v3298, 0.0
        %v3540 = vadd.f32 %v3538, %v3539
        %v3541 = vsel %vm2868, %v3303, 0.0
        %v3542 = vadd.f32 %v3540, %v3541
        %v3543 = vsel %vm2868, %v3306, 0.0
        %v3544 = vadd.f32 %v3542, %v3543
        %v3545 = vsel %vm2868, %v3311, 0.0
        %v3546 = vadd.f32 %v3544, %v3545
        %v3547 = vsel %vm2868, %v3314, 0.0
        %v3548 = vadd.f32 %v3546, %v3547
        %v3549 = vrot.slane %v3548, 4
        %v3550 = vadd.f32 %v3548, %v3549
        %v3551 = vrot.slane %v3550, 2
        %v3552 = vadd.f32 %v3550, %v3551
        %v3553 = vrot.slane %v3552, 1
        %v3554 = vadd.f32 %v3552, %v3553
        %v3555 = vadd.f32 %v3485, %v3554
        %vm3556 = vcmask 57344
        %3557 = vst.msk [vmem:[%s218] sm:$0x1] %vm3556, %v3555
        %v3558 = vld [vmem:[%s224] sm:$0x1]
        %v3559 = vmul.f32 %v3191, %v3191
        %v3560 = vmul.f32 %v3194, %v3194
        %v3561 = vmul.f32 %v3199, %v3199
        %v3562 = vmul.f32 %v3202, %v3202
        %v3563 = vmul.f32 %v3207, %v3207
        %v3564 = vmul.f32 %v3210, %v3210
        %v3565 = vmul.f32 %v3215, %v3215
        %v3566 = vmul.f32 %v3218, %v3218
        %v3567 = vmul.f32 %v3223, %v3223
        %v3568 = vmul.f32 %v3226, %v3226
        %v3569 = vmul.f32 %v3231, %v3231
        %v3570 = vmul.f32 %v3234, %v3234
        %v3571 = vmul.f32 %v3239, %v3239
        %v3572 = vmul.f32 %v3242, %v3242
        %v3573 = vmul.f32 %v3247, %v3247
        %v3574 = vmul.f32 %v3250, %v3250
        %v3575 = vmul.f32 %v3255, %v3255
        %v3576 = vmul.f32 %v3258, %v3258
        %v3577 = vmul.f32 %v3263, %v3263
        %v3578 = vmul.f32 %v3266, %v3266
        %v3579 = vmul.f32 %v3271, %v3271
        %v3580 = vmul.f32 %v3274, %v3274
        %v3581 = vmul.f32 %v3279, %v3279
        %v3582 = vmul.f32 %v3282, %v3282
        %v3583 = vmul.f32 %v3287, %v3287
        %v3584 = vmul.f32 %v3290, %v3290
        %v3585 = vmul.f32 %v3295, %v3295
        %v3586 = vmul.f32 %v3298, %v3298
        %v3587 = vmul.f32 %v3303, %v3303
        %v3588 = vmul.f32 %v3306, %v3306
        %v3589 = vmul.f32 %v3311, %v3311
        %v3590 = vmul.f32 %v3314, %v3314
        %v3591 = vsel %vm2868, %v3559, 0.0
        %v3592 = vsel %vm2868, %v3560, 0.0
        %v3593 = vadd.f32 %v3591, %v3592
        %v3594 = vsel %vm2868, %v3561, 0.0
        %v3595 = vadd.f32 %v3593, %v3594
        %v3596 = vsel %vm2868, %v3562, 0.0
        %v3597 = vadd.f32 %v3595, %v3596
        %v3598 = vsel %vm2868, %v3563, 0.0
        %v3599 = vadd.f32 %v3597, %v3598
        %v3600 = vsel %vm2868, %v3564, 0.0
        %v3601 = vadd.f32 %v3599, %v3600
        %v3602 = vsel %vm2868, %v3565, 0.0
        %v3603 = vadd.f32 %v3601, %v3602
        %v3604 = vsel %vm2868, %v3566, 0.0
        %v3605 = vadd.f32 %v3603, %v3604
        %v3606 = vsel %vm2868, %v3567, 0.0
        %v3607 = vadd.f32 %v3605, %v3606
        %v3608 = vsel %vm2868, %v3568, 0.0
        %v3609 = vadd.f32 %v3607, %v3608
        %v3610 = vsel %vm2868, %v3569, 0.0
        %v3611 = vadd.f32 %v3609, %v3610
        %v3612 = vsel %vm2868, %v3570, 0.0
        %v3613 = vadd.f32 %v3611, %v3612
        %v3614 = vsel %vm2868, %v3571, 0.0
        %v3615 = vadd.f32 %v3613, %v3614
        %v3616 = vsel %vm2868, %v3572, 0.0
        %v3617 = vadd.f32 %v3615, %v3616
        %v3618 = vsel %vm2868, %v3573, 0.0
        %v3619 = vadd.f32 %v3617, %v3618
        %v3620 = vsel %vm2868, %v3574, 0.0
        %v3621 = vadd.f32 %v3619, %v3620
        %v3622 = vsel %vm2868, %v3575, 0.0
        %v3623 = vadd.f32 %v3621, %v3622
        %v3624 = vsel %vm2868, %v3576, 0.0
        %v3625 = vadd.f32 %v3623, %v3624
        %v3626 = vsel %vm2868, %v3577, 0.0
        %v3627 = vadd.f32 %v3625, %v3626
        %v3628 = vsel %vm2868, %v3578, 0.0
        %v3629 = vadd.f32 %v3627, %v3628
        %v3630 = vsel %vm2868, %v3579, 0.0
        %v3631 = vadd.f32 %v3629, %v3630
        %v3632 = vsel %vm2868, %v3580, 0.0
        %v3633 = vadd.f32 %v3631, %v3632
        %v3634 = vsel %vm2868, %v3581, 0.0
        %v3635 = vadd.f32 %v3633, %v3634
        %v3636 = vsel %vm2868, %v3582, 0.0
        %v3637 = vadd.f32 %v3635, %v3636
        %v3638 = vsel %vm2868, %v3583, 0.0
        %v3639 = vadd.f32 %v3637, %v3638
        %v3640 = vsel %vm2868, %v3584, 0.0
        %v3641 = vadd.f32 %v3639, %v3640
        %v3642 = vsel %vm2868, %v3585, 0.0
        %v3643 = vadd.f32 %v3641, %v3642
        %v3644 = vsel %vm2868, %v3586, 0.0
        %v3645 = vadd.f32 %v3643, %v3644
        %v3646 = vsel %vm2868, %v3587, 0.0
        %v3647 = vadd.f32 %v3645, %v3646
        %v3648 = vsel %vm2868, %v3588, 0.0
        %v3649 = vadd.f32 %v3647, %v3648
        %v3650 = vsel %vm2868, %v3589, 0.0
        %v3651 = vadd.f32 %v3649, %v3650
        %v3652 = vsel %vm2868, %v3590, 0.0
        %v3653 = vadd.f32 %v3651, %v3652
        %v3654 = vrot.slane %v3653, 4
        %v3655 = vadd.f32 %v3653, %v3654
        %v3656 = vrot.slane %v3655, 2
        %v3657 = vadd.f32 %v3655, %v3656
        %v3658 = vrot.slane %v3657, 1
        %v3659 = vadd.f32 %v3657, %v3658
        %v3660 = vadd.f32 %v3558, %v3659
        %3661 = vst.msk [vmem:[%s224] sm:$0x1] %vm3556, %v3660
        %s3662 = smul.u32 32, %s27
        %p3663 = scmp.lt.s32.totalorder %s26, 1
        %s3664 = scalar_select %p3663, %s26, 1
        %p3665 = scmp.lt.s32.totalorder %s3662, 31
        %s3666 = scalar_select %p3665, %s3662, 31
        %s3667 = smul.addr %s3664, 32
        %s3668 = sadd.s32 %s3666, %s3667
        %s3669 = smul.addr %s3668, 4
        %s3670 = scalar_lea.vmem %s2, %s3669
        %s3671 = sand.u32 %s117, 1
        %s3672 = scalar_lea.sflag [#allocation3], %s3671
        %s3673 = sand.u32 %s117, 1
        %s3674 = scalar_lea.vmem [#allocation2], %s3673
        %s3675 = sand.u32 %s143, 1
        %s3676 = scalar_lea.sflag [#allocation5], %s3675
        %s3677 = sand.u32 %s143, 1
        %s3678 = scalar_lea.vmem [#allocation4], %s3677
        // Predicated region
        $region33: #{tpu_custom_call.1} parent=27 // pred_check
          %p3679 = pneg %p101
        $region34: #{tpu_custom_call.1} parent=27 // pred_check_branch
          %3681 = sbr.rel (%p3679) target = $region36
        $region35: #{tpu_custom_call.1} parent=27 // pred_region
          %s3682 = smul.u32 32, %s27
        $region36: #{tpu_custom_call.1} parent=27 // pred_fallthru
          _
        // Predicated region
        $region37: #{tpu_custom_call.1} parent=27 // pred_check
          %p3683 = pneg %p127
        $region38: #{tpu_custom_call.1} parent=27 // pred_check_branch
          %3685 = sbr.rel (%p3683) target = $region40
        $region39: #{tpu_custom_call.1} parent=27 // pred_region
          %s3687 = ssub.s32 16, 16
          %3688 = vsyncadd %s3672, %s3687
          %s3689 = smul.addr %s26, 16
          %s3690 = scalar_lea.hbm %s3, %s3689
          %s3692 = sshll.u32 %s3674, 4
          %s3693 = int_to_ptr.vmem [resolvable:$true] %s3692
          %3695 = dma.vmem_to_hbm [thread:$0]  %s3693, 16, %s3690, %s3672
        $region40: #{tpu_custom_call.1} parent=27 // pred_fallthru
          _
        // Predicated region
        $region41: #{tpu_custom_call.1} parent=27 // pred_check
          %p3696 = pneg %p153
        $region42: #{tpu_custom_call.1} parent=27 // pred_check_branch
          %3698 = sbr.rel (%p3696) target = $region44
        $region43: #{tpu_custom_call.1} parent=27 // pred_region
          %s3700 = ssub.s32 16, 16
          %3701 = vsyncadd %s3676, %s3700
          %s3702 = smul.addr %s26, 16
          %s3703 = scalar_lea.hbm %s4, %s3702
          %s3705 = sshll.u32 %s3678, 4
          %s3706 = int_to_ptr.vmem [resolvable:$true] %s3705
          %3708 = dma.vmem_to_hbm [thread:$0]  %s3706, 16, %s3703, %s3676
        $region44: #{tpu_custom_call.1} parent=27 // pred_fallthru
          _
      $region28: #{tpu_custom_call.1} parent=5 // pred_fallthru
        _
      %p3709 = scmp.le.s32.totalorder 2, %s17
      // Predicated region
      $region45: #{tpu_custom_call.1} parent=5 // pred_check
        %p3710 = pneg %p3709
      $region46: #{tpu_custom_call.1} parent=5 // pred_check_branch
        %3712 = sbr.rel (%p3710) target = $region48
      $region47: #{tpu_custom_call.1} parent=5 // pred_region
        %s3713 = ssub.s32 %s17, 2
        // Predicated region
        $region49: #{tpu_custom_call.1} parent=47 // pred_check
          %p3714 = pneg %p107
        $region50: #{tpu_custom_call.1} parent=47 // pred_check_branch
          %3716 = sbr.rel (%p3714) target = $region52
        $region51: #{tpu_custom_call.1} parent=47 // pred_region
          %s3717 = smul.u32 32, %s29
          %p3718 = scmp.lt.s32.totalorder %s28, 1
          %s3719 = scalar_select %p3718, %s28, 1
          %p3720 = scmp.lt.s32.totalorder %s3717, 31
          %s3721 = scalar_select %p3720, %s3717, 31
          %s3722 = smul.addr %s3719, 32
          %s3723 = sadd.s32 %s3721, %s3722
          %s3724 = smul.addr %s3723, 4
          %s3725 = scalar_lea.vmem %s2, %s3724
        $region52: #{tpu_custom_call.1} parent=47 // pred_fallthru
          _
        // Predicated region
        $region53: #{tpu_custom_call.1} parent=47 // pred_check
          %p3726 = pneg %p133
        $region54: #{tpu_custom_call.1} parent=47 // pred_check_branch
          %3728 = sbr.rel (%p3726) target = $region56
        $region55: #{tpu_custom_call.1} parent=47 // pred_region
          %s3729 = sand.u32 %s118, 1
          %s3730 = scalar_lea.sflag [#allocation3], %s3729
          %s3731 = sand.u32 %s118, 1
          %s3732 = scalar_lea.vmem [#allocation2], %s3731
          %3733 = dma.done %s3730, 16
        $region56: #{tpu_custom_call.1} parent=47 // pred_fallthru
          _
        // Predicated region
        $region57: #{tpu_custom_call.1} parent=47 // pred_check
          %p3734 = pneg %p159
        $region58: #{tpu_custom_call.1} parent=47 // pred_check_branch
          %3736 = sbr.rel (%p3734) target = $region60
        $region59: #{tpu_custom_call.1} parent=47 // pred_region
          %s3737 = sand.u32 %s144, 1
          %s3738 = scalar_lea.sflag [#allocation5], %s3737
          %s3739 = sand.u32 %s144, 1
          %s3740 = scalar_lea.vmem [#allocation4], %s3739
          %3741 = dma.done %s3738, 16
        $region60: #{tpu_custom_call.1} parent=47 // pred_fallthru
          _
      $region48: #{tpu_custom_call.1} parent=5 // pred_fallthru
        _
    $region6: #{tpu_custom_call.1} parent=1 // loop_footer
      %s21 = sadd.s32 1, %s17
    $region7: #{tpu_custom_call.1} parent=1 // loop_footer_branch
      %16 = sbr.rel target = $region3
    $region8: #{tpu_custom_call.1} parent=1 // loop_exit
      _
    %3742 = vsyncpa [#allocation3], 1
    %s3743 = scalar_lea.sflag [#allocation3], 1
    %3744 = vsyncpa %s3743, 1
    %3745 = vsyncpa [#allocation5], 1
    %s3746 = scalar_lea.sflag [#allocation5], 1
    %3747 = vsyncpa %s3746, 1

</llo_original>
